<compile_context>
chip_gen: v6e
topology: v6e:2x2x1
jax: 0.10.0
libtpu: 0.0.40
codegen_flags: <defaults>
</compile_context>

<pallas_src>
import jax
import jax.numpy as jnp
from jax.experimental import pallas as pl
from jax.experimental.pallas import tpu as pltpu

MOVE_VECTOR_SIZE = 24   # synthetic module constant; LSTM input size
X_FEATURE_SIZE = 64     # synthetic module constant; extra feature vector size
HIDDEN = 128            # nn.LSTM(MOVE_VECTOR_SIZE, 128)
DENSE = 512


# --------------------------------------------------------------------------
# Fused kernel: LSTM recurrence + dense1..dense6 head, single invocation.
#   z_ref : (T*Bp, MOVE) f32, time-major flattened (row t*Bp + b == z[b, t, :])
#   x_ref : (Bp, X)      f32
#   w1h/w1x/wmid arrive as raw HBM refs (pl.ANY) and are DMA'd under the LSTM.
# --------------------------------------------------------------------------
def _fused_kernel(z_ref, x_ref,
                  wih_ref, whh_ref, blstm_ref,
                  w1h_hbm, w1x_hbm, wmid_hbm,
                  b1_ref, bmid_ref, w6_ref, b6_ref,
                  out_ref,
                  xproj_scr, w1h_vmem, w1x_vmem, wmid_vmem, dma_sem):
    tb, _ = z_ref.shape
    bp = x_ref.shape[0]
    t_steps = tb // bp

    # ---- Kick off head-weight DMAs so they stream under the serial LSTM ---
    cp_w1h = pltpu.make_async_copy(w1h_hbm, w1h_vmem, dma_sem.at[0])
    cp_w1x = pltpu.make_async_copy(w1x_hbm, w1x_vmem, dma_sem.at[1])
    cp_mid = pltpu.make_async_copy(wmid_hbm, wmid_vmem, dma_sem.at[2])
    cp_w1h.start()
    cp_w1x.start()
    cp_mid.start()

    # ---- LSTM ------------------------------------------------------------
    # Hoisted input projection (+ bias): no recurrent dependency, so one matmul
    # for all time steps instead of a small matmul per step.
    xproj_scr[...] = (
        jnp.dot(z_ref[...], wih_ref[...], preferred_element_type=jnp.float32)
        + blstm_ref[...]
    )

    h0 = jnp.zeros((bp, HIDDEN), jnp.float32)
    c0 = jnp.zeros((bp, HIDDEN), jnp.float32)

    def step(t, carry):
        h, c = carry
        off = pl.multiple_of(t * bp, 8)
        gates = (xproj_scr[pl.ds(off, bp), :]
                 + jnp.dot(h, whh_ref[...], preferred_element_type=jnp.float32))
        i_g = jax.nn.sigmoid(gates[:, 0 * HIDDEN:1 * HIDDEN])
        f_g = jax.nn.sigmoid(gates[:, 1 * HIDDEN:2 * HIDDEN])
        g_g = jnp.tanh(gates[:, 2 * HIDDEN:3 * HIDDEN])
        o_g = jax.nn.sigmoid(gates[:, 3 * HIDDEN:4 * HIDDEN])
        c_new = f_g * c + i_g * g_g
        h_new = o_g * jnp.tanh(c_new)
        return h_new, c_new

    h, c = jax.lax.fori_loop(0, t_steps, step, (h0, c0), unroll=True)

    # ---- MLP head: bf16 x bf16 matmuls, f32 accumulation -------------------
    # dense1 split into W1_h / W1_x eliminates concat([h, x]).
    cp_w1h.wait()
    cp_w1x.wait()
    a = (jnp.dot(h.astype(jnp.bfloat16), w1h_vmem[...],
                 preferred_element_type=jnp.float32)
         + jnp.dot(x_ref[...].astype(jnp.bfloat16), w1x_vmem[...],
                   preferred_element_type=jnp.float32)
         + b1_ref[...])
    a = jnp.maximum(a, 0.0)

    cp_mid.wait()
    for layer in range(4):  # dense2..dense5 (static unroll: tiny live state)
        a = jnp.maximum(
            jnp.dot(a.astype(jnp.bfloat16), wmid_vmem[layer],
                    preferred_element_type=jnp.float32) + bmid_ref[layer],
            0.0)

    # dense6 (512 -> 1) as a lane reduction: avoids an N=1 MXU matmul.
    out_ref[...] = (jnp.sum(a * w6_ref[...], axis=-1, keepdims=True)
                    + b6_ref[...])


def _round_up(n, m):
    return (n + m - 1) // m * m


@jax.jit
def lstm_model_forward(z, x, params):
    """z: (B, T, MOVE) f32, x: (B, X) f32  ->  (B, 1) f32."""
    (w_ih_t, w_hh_t, lstm_bias,
     w1h, w1x, b1, wmid, bmid, w6row, b6) = params

    B, T, D = z.shape
    Bp = _round_up(max(B, 8), 8)                 # pad batch to f32 sublane tile
    # TODO(synk): on v6e, batch more sequences per call (cost is ~flat in batch
    # up to M~128-256) — the head is weight-bandwidth bound.
    z_p = jnp.pad(z, ((0, Bp - B), (0, 0), (0, 0)))
    x_p = jnp.pad(x, ((0, Bp - B), (0, 0)))
    # Time-major, flattened: row t*Bp + b holds z[b, t, :] (cheap XLA fusion).
    z_tm = jnp.transpose(z_p, (1, 0, 2)).reshape(T * Bp, D)

    vmem = pl.BlockSpec(memory_space=pltpu.MemorySpace.VMEM)
    hbm = pl.BlockSpec(memory_space=pl.ANY)   # raw refs; DMA'd inside the kernel
    args = (z_tm, x_p, w_ih_t, w_hh_t, lstm_bias,
            w1h, w1x, wmid, b1, bmid, w6row, b6)
    in_specs = [vmem, vmem, vmem, vmem, vmem,
                hbm, hbm, hbm, vmem, vmem, vmem, vmem]

    out_p = pl.pallas_call(
        _fused_kernel,
        out_shape=jax.ShapeDtypeStruct((Bp, 1), jnp.float32),
        in_specs=in_specs,
        out_specs=vmem,
        scratch_shapes=[
            pltpu.VMEM((T * Bp, 4 * HIDDEN), jnp.float32),      # xproj
            pltpu.VMEM((HIDDEN, DENSE), jnp.bfloat16),           # w1h landing buf
            pltpu.VMEM((X_FEATURE_SIZE, DENSE), jnp.bfloat16),   # w1x landing buf
            pltpu.VMEM((4, DENSE, DENSE), jnp.bfloat16),         # w2..w5 landing buf
            pltpu.SemaphoreType.DMA((3,)),
        ],
        compiler_params=pltpu.CompilerParams(
            vmem_limit_bytes=32 * 1024 * 1024),
    )(*args)
    return out_p[:B]


# --------------------------------------------------------------------------
# Parameter init (deterministic, PyTorch-style uniform ranges).
# Dense weights stored bf16 (HBM-bandwidth bound path); LSTM weights / biases f32.
# --------------------------------------------------------------------------
def init_params(key, dense_dtype=jnp.bfloat16):
    def uni(k, shape, fan_in, dtype=jnp.float32):
        bound = 1.0 / jnp.sqrt(jnp.float32(fan_in))
        return jax.random.uniform(k, shape, jnp.float32, -bound, bound).astype(dtype)

    keys = iter(jax.random.split(key, 16))

    # LSTM params (stored transposed: (in, 4H); gate order [i, f, g, o]).
    w_ih_t = uni(next(keys), (MOVE_VECTOR_SIZE, 4 * HIDDEN), HIDDEN)
    w_hh_t = uni(next(keys), (HIDDEN, 4 * HIDDEN), HIDDEN)
    b_ih = uni(next(keys), (4 * HIDDEN,), HIDDEN)
    b_hh = uni(next(keys), (4 * HIDDEN,), HIDDEN)
    lstm_bias = (b_ih + b_hh).reshape(1, 4 * HIDDEN)

    # dense1 split into h-part (128,512) and x-part (64,512) -> no in-kernel concat.
    fin1 = HIDDEN + X_FEATURE_SIZE
    w1 = uni(next(keys), (fin1, DENSE), fin1, dense_dtype)
    b1 = uni(next(keys), (1, DENSE), fin1)
    w1h, w1x = w1[:HIDDEN], w1[HIDDEN:]

    # dense2..dense5 stacked into one (4, 512, 512) bf16 block -> single DMA.
    ws, bs = [], []
    for _ in range(4):
        ws.append(uni(next(keys), (DENSE, DENSE), DENSE, dense_dtype))
        bs.append(uni(next(keys), (1, DENSE), DENSE))
    wmid = jnp.stack(ws, axis=0)          # (4, 512, 512) bf16
    bmid = jnp.stack(bs, axis=0)          # (4, 1, 512)   f32

    # dense6 (512 -> 1) kept as a row vector for the in-kernel lane reduction.
    w6row = uni(next(keys), (1, DENSE), DENSE)
    b6 = uni(next(keys), (1, 1), DENSE)

    return (w_ih_t, w_hh_t, lstm_bias,
            w1h, w1x, b1, wmid, bmid, w6row, b6)


# --------------------------------------------------------------------------
# Pure-JAX reference (same stored weights, promoted to f32) for a sanity check.
# --------------------------------------------------------------------------
def reference_forward(z, x, params):
    (w_ih_t, w_hh_t, lstm_bias,
     w1h, w1x, b1, wmid, bmid, w6row, b6) = [
        jnp.asarray(p, jnp.float32) for p in params]

    B, T, _ = z.shape
    h = jnp.zeros((B, HIDDEN), jnp.float32)
    c = jnp.zeros((B, HIDDEN), jnp.float32)
    for t in range(T):
        g = z[:, t, :] @ w_ih_t + h @ w_hh_t + lstm_bias
        i = jax.nn.sigmoid(g[:, :HIDDEN])
        f = jax.nn.sigmoid(g[:, HIDDEN:2 * HIDDEN])
        gg = jnp.tanh(g[:, 2 * HIDDEN:3 * HIDDEN])
        o = jax.nn.sigmoid(g[:, 3 * HIDDEN:])
        c = f * c + i * gg
        h = o * jnp.tanh(c)

    a = jnp.concatenate([h, x], axis=-1)
    a = jax.nn.relu(a @ jnp.concatenate([w1h, w1x], axis=0) + b1)
    for layer in range(4):
        a = jax.nn.relu(a @ wmid[layer] + bmid[layer])
    return a @ w6row.T + b6


if __name__ == "__main__":
    key = jax.random.PRNGKey(0)
    kz, kx, kp = jax.random.split(key, 3)

    B, T = 2, 8
    z = jax.random.normal(kz, (B, T, MOVE_VECTOR_SIZE), jnp.float32)
    x = jax.random.normal(kx, (B, X_FEATURE_SIZE), jnp.float32)

    params = init_params(kp)

    out = jax.block_until_ready(lstm_model_forward(z, x, params))
    assert out.shape == (B, 1), out.shape

    ref = reference_forward(z, x, params)
    max_err = float(jnp.max(jnp.abs(out - ref)))
    assert bool(jnp.all(jnp.isfinite(out))) and max_err < 5e-2, max_err

    print("KERNEL_OK")
</pallas_src>

<mosaic_0001>
module attributes {stable_mosaic.version = 11 : i64} {
  func.func @_fused_kernel(%arg0: memref<64x24xf32, #tpu.memory_space<vmem>>, %arg1: memref<8x64xf32, #tpu.memory_space<vmem>>, %arg2: memref<24x512xf32, #tpu.memory_space<vmem>>, %arg3: memref<128x512xf32, #tpu.memory_space<vmem>>, %arg4: memref<1x512xf32, #tpu.memory_space<vmem>>, %arg5: memref<128x512xbf16, #tpu.memory_space<any>>, %arg6: memref<64x512xbf16, #tpu.memory_space<any>>, %arg7: memref<4x512x512xbf16, #tpu.memory_space<any>>, %arg8: memref<1x512xf32, #tpu.memory_space<vmem>>, %arg9: memref<4x1x512xf32, #tpu.memory_space<vmem>>, %arg10: memref<1x512xf32, #tpu.memory_space<vmem>>, %arg11: memref<1x1xf32, #tpu.memory_space<vmem>>, %arg12: memref<8x1xf32, #tpu.memory_space<vmem>>, %arg13: memref<64x512xf32, #tpu.memory_space<vmem>>, %arg14: memref<128x512xbf16, #tpu.memory_space<vmem>>, %arg15: memref<64x512xbf16, #tpu.memory_space<vmem>>, %arg16: memref<4x512x512xbf16, #tpu.memory_space<vmem>>, %arg17: memref<3x!tpu.dma_semaphore, #tpu.memory_space<semaphore_mem>>) attributes {dimension_semantics = [], scalar_prefetch = 0 : i64, scratch_operands = 5 : i64, tpu.core_type = #tpu.core_type<tc>} {
    %c0_i32 = arith.constant 0 : i32
    %0 = tpu.memref_slice %arg17[%c0_i32] : memref<3x!tpu.dma_semaphore, #tpu.memory_space<semaphore_mem>> -> memref<1x!tpu.dma_semaphore, #tpu.memory_space<semaphore_mem>>
    %1 = tpu.memref_squeeze %0 : memref<1x!tpu.dma_semaphore, #tpu.memory_space<semaphore_mem>> -> memref<!tpu.dma_semaphore, #tpu.memory_space<semaphore_mem>>
    tpu.enqueue_dma source(%arg5 : memref<128x512xbf16, #tpu.memory_space<any>>) target(%arg14 : memref<128x512xbf16, #tpu.memory_space<vmem>>) target_semaphore(%1 : memref<!tpu.dma_semaphore, #tpu.memory_space<semaphore_mem>>)
    %c1_i32 = arith.constant 1 : i32
    %2 = tpu.memref_slice %arg17[%c1_i32] : memref<3x!tpu.dma_semaphore, #tpu.memory_space<semaphore_mem>> -> memref<1x!tpu.dma_semaphore, #tpu.memory_space<semaphore_mem>>
    %3 = tpu.memref_squeeze %2 : memref<1x!tpu.dma_semaphore, #tpu.memory_space<semaphore_mem>> -> memref<!tpu.dma_semaphore, #tpu.memory_space<semaphore_mem>>
    tpu.enqueue_dma source(%arg6 : memref<64x512xbf16, #tpu.memory_space<any>>) target(%arg15 : memref<64x512xbf16, #tpu.memory_space<vmem>>) target_semaphore(%3 : memref<!tpu.dma_semaphore, #tpu.memory_space<semaphore_mem>>)
    %c2_i32 = arith.constant 2 : i32
    %4 = tpu.memref_slice %arg17[%c2_i32] : memref<3x!tpu.dma_semaphore, #tpu.memory_space<semaphore_mem>> -> memref<1x!tpu.dma_semaphore, #tpu.memory_space<semaphore_mem>>
    %5 = tpu.memref_squeeze %4 : memref<1x!tpu.dma_semaphore, #tpu.memory_space<semaphore_mem>> -> memref<!tpu.dma_semaphore, #tpu.memory_space<semaphore_mem>>
    tpu.enqueue_dma source(%arg7 : memref<4x512x512xbf16, #tpu.memory_space<any>>) target(%arg16 : memref<4x512x512xbf16, #tpu.memory_space<vmem>>) target_semaphore(%5 : memref<!tpu.dma_semaphore, #tpu.memory_space<semaphore_mem>>)
    %c0 = arith.constant 0 : index
    %c0_0 = arith.constant 0 : index
    %6 = vector.load %arg0[%c0, %c0_0] : memref<64x24xf32, #tpu.memory_space<vmem>>, vector<64x24xf32>
    %c0_1 = arith.constant 0 : index
    %c0_2 = arith.constant 0 : index
    %7 = vector.load %arg2[%c0_1, %c0_2] : memref<24x512xf32, #tpu.memory_space<vmem>>, vector<24x512xf32>
    %cst = arith.constant dense<0.000000e+00> : vector<64x512xf32>
    %8 = tpu.matmul %6, %7, %cst {dimension_numbers = #tpu.dot_dimension_numbers<[1], [0], [0], [1], [0, 0, 1, 1], [], []>} : vector<64x24xf32>, vector<24x512xf32>, vector<64x512xf32> -> vector<64x512xf32>
    %c0_3 = arith.constant 0 : index
    %c0_4 = arith.constant 0 : index
    %9 = vector.load %arg4[%c0_3, %c0_4] : memref<1x512xf32, #tpu.memory_space<vmem>>, vector<1x512xf32>
    %10 = vector.broadcast %9 : vector<1x512xf32> to vector<64x512xf32>
    %11 = arith.addf %8, %10 : vector<64x512xf32>
    %c0_5 = arith.constant 0 : index
    %c0_6 = arith.constant 0 : index
    %12 = vector.load %arg13[%c0_5, %c0_6] : memref<64x512xf32, #tpu.memory_space<vmem>>, vector<64x512xf32>
    tpu.vector_store %arg13[%c0_5, %c0_6], %11 {strides = array<i32>} : memref<64x512xf32, #tpu.memory_space<vmem>>, vector<64x512xf32>,
    %cst_7 = arith.constant 0.000000e+00 : f32
    %13 = vector.broadcast %cst_7 : f32 to vector<8x128xf32>
    %cst_8 = arith.constant 0.000000e+00 : f32
    %14 = vector.broadcast %cst_8 : f32 to vector<8x128xf32>
    %c0_i32_9 = arith.constant 0 : i32
    %c8_i32 = arith.constant 8 : i32
    %15 = arith.muli %c0_i32_9, %c8_i32 : i32
    %16 = tpu.assume_multiple %15, 8 : i32
    %17 = arith.index_cast %16 : i32 to index
    %c0_10 = arith.constant 0 : index
    %18 = vector.load %arg13[%17, %c0_10] : memref<64x512xf32, #tpu.memory_space<vmem>>, vector<8x512xf32>
    %c0_11 = arith.constant 0 : index
    %c0_12 = arith.constant 0 : index
    %19 = vector.load %arg3[%c0_11, %c0_12] : memref<128x512xf32, #tpu.memory_space<vmem>>, vector<128x512xf32>
    %cst_13 = arith.constant dense<0.000000e+00> : vector<8x512xf32>
    %20 = tpu.matmul %13, %19, %cst_13 {dimension_numbers = #tpu.dot_dimension_numbers<[1], [0], [0], [1], [0, 0, 1, 1], [], []>} : vector<8x128xf32>, vector<128x512xf32>, vector<8x512xf32> -> vector<8x512xf32>
    %21 = arith.addf %18, %20 : vector<8x512xf32>
    %22 = vector.extract_strided_slice %21 {offsets = [0, 0], sizes = [8, 128], strides = [1, 1]} : vector<8x512xf32> to vector<8x128xf32>
    %23 = arith.negf %22 : vector<8x128xf32>
    %24 = math.exp %23 : vector<8x128xf32>
    %cst_14 = arith.constant 1.000000e+00 : f32
    %25 = vector.broadcast %cst_14 : f32 to vector<8x128xf32>
    %26 = arith.addf %25, %24 : vector<8x128xf32>
    %27 = arith.divf %25, %26 : vector<8x128xf32>
    %28 = vector.extract_strided_slice %21 {offsets = [0, 128], sizes = [8, 128], strides = [1, 1]} : vector<8x512xf32> to vector<8x128xf32>
    %29 = arith.negf %28 : vector<8x128xf32>
    %30 = math.exp %29 : vector<8x128xf32>
    %cst_15 = arith.constant 1.000000e+00 : f32
    %31 = vector.broadcast %cst_15 : f32 to vector<8x128xf32>
    %32 = arith.addf %31, %30 : vector<8x128xf32>
    %33 = arith.divf %31, %32 : vector<8x128xf32>
    %34 = vector.extract_strided_slice %21 {offsets = [0, 256], sizes = [8, 128], strides = [1, 1]} : vector<8x512xf32> to vector<8x128xf32>
    %35 = math.tanh %34 : vector<8x128xf32>
    %36 = vector.extract_strided_slice %21 {offsets = [0, 384], sizes = [8, 128], strides = [1, 1]} : vector<8x512xf32> to vector<8x128xf32>
    %37 = arith.negf %36 : vector<8x128xf32>
    %38 = math.exp %37 : vector<8x128xf32>
    %cst_16 = arith.constant 1.000000e+00 : f32
    %39 = vector.broadcast %cst_16 : f32 to vector<8x128xf32>
    %40 = arith.addf %39, %38 : vector<8x128xf32>
    %41 = arith.divf %39, %40 : vector<8x128xf32>
    %42 = arith.mulf %33, %14 : vector<8x128xf32>
    %43 = arith.mulf %27, %35 : vector<8x128xf32>
    %44 = arith.addf %42, %43 : vector<8x128xf32>
    %45 = math.tanh %44 : vector<8x128xf32>
    %46 = arith.mulf %41, %45 : vector<8x128xf32>
    %c1_i32_17 = arith.constant 1 : i32
    %c8_i32_18 = arith.constant 8 : i32
    %47 = arith.muli %c1_i32_17, %c8_i32_18 : i32
    %48 = tpu.assume_multiple %47, 8 : i32
    %49 = arith.index_cast %48 : i32 to index
    %c0_19 = arith.constant 0 : index
    %50 = vector.load %arg13[%49, %c0_19] : memref<64x512xf32, #tpu.memory_space<vmem>>, vector<8x512xf32>
    %c0_20 = arith.constant 0 : index
    %c0_21 = arith.constant 0 : index
    %51 = vector.load %arg3[%c0_20, %c0_21] : memref<128x512xf32, #tpu.memory_space<vmem>>, vector<128x512xf32>
    %cst_22 = arith.constant dense<0.000000e+00> : vector<8x512xf32>
    %52 = tpu.matmul %46, %51, %cst_22 {dimension_numbers = #tpu.dot_dimension_numbers<[1], [0], [0], [1], [0, 0, 1, 1], [], []>} : vector<8x128xf32>, vector<128x512xf32>, vector<8x512xf32> -> vector<8x512xf32>
    %53 = arith.addf %50, %52 : vector<8x512xf32>
    %54 = vector.extract_strided_slice %53 {offsets = [0, 0], sizes = [8, 128], strides = [1, 1]} : vector<8x512xf32> to vector<8x128xf32>
    %55 = arith.negf %54 : vector<8x128xf32>
    %56 = math.exp %55 : vector<8x128xf32>
    %cst_23 = arith.constant 1.000000e+00 : f32
    %57 = vector.broadcast %cst_23 : f32 to vector<8x128xf32>
    %58 = arith.addf %57, %56 : vector<8x128xf32>
    %59 = arith.divf %57, %58 : vector<8x128xf32>
    %60 = vector.extract_strided_slice %53 {offsets = [0, 128], sizes = [8, 128], strides = [1, 1]} : vector<8x512xf32> to vector<8x128xf32>
    %61 = arith.negf %60 : vector<8x128xf32>
    %62 = math.exp %61 : vector<8x128xf32>
    %cst_24 = arith.constant 1.000000e+00 : f32
    %63 = vector.broadcast %cst_24 : f32 to vector<8x128xf32>
    %64 = arith.addf %63, %62 : vector<8x128xf32>
    %65 = arith.divf %63, %64 : vector<8x128xf32>
    %66 = vector.extract_strided_slice %53 {offsets = [0, 256], sizes = [8, 128], strides = [1, 1]} : vector<8x512xf32> to vector<8x128xf32>
    %67 = math.tanh %66 : vector<8x128xf32>
    %68 = vector.extract_strided_slice %53 {offsets = [0, 384], sizes = [8, 128], strides = [1, 1]} : vector<8x512xf32> to vector<8x128xf32>
    %69 = arith.negf %68 : vector<8x128xf32>
    %70 = math.exp %69 : vector<8x128xf32>
    %cst_25 = arith.constant 1.000000e+00 : f32
    %71 = vector.broadcast %cst_25 : f32 to vector<8x128xf32>
    %72 = arith.addf %71, %70 : vector<8x128xf32>
    %73 = arith.divf %71, %72 : vector<8x128xf32>
    %74 = arith.mulf %65, %44 : vector<8x128xf32>
    %75 = arith.mulf %59, %67 : vector<8x128xf32>
    %76 = arith.addf %74, %75 : vector<8x128xf32>
    %77 = math.tanh %76 : vector<8x128xf32>
    %78 = arith.mulf %73, %77 : vector<8x128xf32>
    %c2_i32_26 = arith.constant 2 : i32
    %c8_i32_27 = arith.constant 8 : i32
    %79 = arith.muli %c2_i32_26, %c8_i32_27 : i32
    %80 = tpu.assume_multiple %79, 8 : i32
    %81 = arith.index_cast %80 : i32 to index
    %c0_28 = arith.constant 0 : index
    %82 = vector.load %arg13[%81, %c0_28] : memref<64x512xf32, #tpu.memory_space<vmem>>, vector<8x512xf32>
    %c0_29 = arith.constant 0 : index
    %c0_30 = arith.constant 0 : index
    %83 = vector.load %arg3[%c0_29, %c0_30] : memref<128x512xf32, #tpu.memory_space<vmem>>, vector<128x512xf32>
    %cst_31 = arith.constant dense<0.000000e+00> : vector<8x512xf32>
    %84 = tpu.matmul %78, %83, %cst_31 {dimension_numbers = #tpu.dot_dimension_numbers<[1], [0], [0], [1], [0, 0, 1, 1], [], []>} : vector<8x128xf32>, vector<128x512xf32>, vector<8x512xf32> -> vector<8x512xf32>
    %85 = arith.addf %82, %84 : vector<8x512xf32>
    %86 = vector.extract_strided_slice %85 {offsets = [0, 0], sizes = [8, 128], strides = [1, 1]} : vector<8x512xf32> to vector<8x128xf32>
    %87 = arith.negf %86 : vector<8x128xf32>
    %88 = math.exp %87 : vector<8x128xf32>
    %cst_32 = arith.constant 1.000000e+00 : f32
    %89 = vector.broadcast %cst_32 : f32 to vector<8x128xf32>
    %90 = arith.addf %89, %88 : vector<8x128xf32>
    %91 = arith.divf %89, %90 : vector<8x128xf32>
    %92 = vector.extract_strided_slice %85 {offsets = [0, 128], sizes = [8, 128], strides = [1, 1]} : vector<8x512xf32> to vector<8x128xf32>
    %93 = arith.negf %92 : vector<8x128xf32>
    %94 = math.exp %93 : vector<8x128xf32>
    %cst_33 = arith.constant 1.000000e+00 : f32
    %95 = vector.broadcast %cst_33 : f32 to vector<8x128xf32>
    %96 = arith.addf %95, %94 : vector<8x128xf32>
    %97 = arith.divf %95, %96 : vector<8x128xf32>
    %98 = vector.extract_strided_slice %85 {offsets = [0, 256], sizes = [8, 128], strides = [1, 1]} : vector<8x512xf32> to vector<8x128xf32>
    %99 = math.tanh %98 : vector<8x128xf32>
    %100 = vector.extract_strided_slice %85 {offsets = [0, 384], sizes = [8, 128], strides = [1, 1]} : vector<8x512xf32> to vector<8x128xf32>
    %101 = arith.negf %100 : vector<8x128xf32>
    %102 = math.exp %101 : vector<8x128xf32>
    %cst_34 = arith.constant 1.000000e+00 : f32
    %103 = vector.broadcast %cst_34 : f32 to vector<8x128xf32>
    %104 = arith.addf %103, %102 : vector<8x128xf32>
    %105 = arith.divf %103, %104 : vector<8x128xf32>
    %106 = arith.mulf %97, %76 : vector<8x128xf32>
    %107 = arith.mulf %91, %99 : vector<8x128xf32>
    %108 = arith.addf %106, %107 : vector<8x128xf32>
    %109 = math.tanh %108 : vector<8x128xf32>
    %110 = arith.mulf %105, %109 : vector<8x128xf32>
    %c3_i32 = arith.constant 3 : i32
    %c8_i32_35 = arith.constant 8 : i32
    %111 = arith.muli %c3_i32, %c8_i32_35 : i32
    %112 = tpu.assume_multiple %111, 8 : i32
    %113 = arith.index_cast %112 : i32 to index
    %c0_36 = arith.constant 0 : index
    %114 = vector.load %arg13[%113, %c0_36] : memref<64x512xf32, #tpu.memory_space<vmem>>, vector<8x512xf32>
    %c0_37 = arith.constant 0 : index
    %c0_38 = arith.constant 0 : index
    %115 = vector.load %arg3[%c0_37, %c0_38] : memref<128x512xf32, #tpu.memory_space<vmem>>, vector<128x512xf32>
    %cst_39 = arith.constant dense<0.000000e+00> : vector<8x512xf32>
    %116 = tpu.matmul %110, %115, %cst_39 {dimension_numbers = #tpu.dot_dimension_numbers<[1], [0], [0], [1], [0, 0, 1, 1], [], []>} : vector<8x128xf32>, vector<128x512xf32>, vector<8x512xf32> -> vector<8x512xf32>
    %117 = arith.addf %114, %116 : vector<8x512xf32>
    %118 = vector.extract_strided_slice %117 {offsets = [0, 0], sizes = [8, 128], strides = [1, 1]} : vector<8x512xf32> to vector<8x128xf32>
    %119 = arith.negf %118 : vector<8x128xf32>
    %120 = math.exp %119 : vector<8x128xf32>
    %cst_40 = arith.constant 1.000000e+00 : f32
    %121 = vector.broadcast %cst_40 : f32 to vector<8x128xf32>
    %122 = arith.addf %121, %120 : vector<8x128xf32>
    %123 = arith.divf %121, %122 : vector<8x128xf32>
    %124 = vector.extract_strided_slice %117 {offsets = [0, 128], sizes = [8, 128], strides = [1, 1]} : vector<8x512xf32> to vector<8x128xf32>
    %125 = arith.negf %124 : vector<8x128xf32>
    %126 = math.exp %125 : vector<8x128xf32>
    %cst_41 = arith.constant 1.000000e+00 : f32
    %127 = vector.broadcast %cst_41 : f32 to vector<8x128xf32>
    %128 = arith.addf %127, %126 : vector<8x128xf32>
    %129 = arith.divf %127, %128 : vector<8x128xf32>
    %130 = vector.extract_strided_slice %117 {offsets = [0, 256], sizes = [8, 128], strides = [1, 1]} : vector<8x512xf32> to vector<8x128xf32>
    %131 = math.tanh %130 : vector<8x128xf32>
    %132 = vector.extract_strided_slice %117 {offsets = [0, 384], sizes = [8, 128], strides = [1, 1]} : vector<8x512xf32> to vector<8x128xf32>
    %133 = arith.negf %132 : vector<8x128xf32>
    %134 = math.exp %133 : vector<8x128xf32>
    %cst_42 = arith.constant 1.000000e+00 : f32
    %135 = vector.broadcast %cst_42 : f32 to vector<8x128xf32>
    %136 = arith.addf %135, %134 : vector<8x128xf32>
    %137 = arith.divf %135, %136 : vector<8x128xf32>
    %138 = arith.mulf %129, %108 : vector<8x128xf32>
    %139 = arith.mulf %123, %131 : vector<8x128xf32>
    %140 = arith.addf %138, %139 : vector<8x128xf32>
    %141 = math.tanh %140 : vector<8x128xf32>
    %142 = arith.mulf %137, %141 : vector<8x128xf32>
    %c4_i32 = arith.constant 4 : i32
    %c8_i32_43 = arith.constant 8 : i32
    %143 = arith.muli %c4_i32, %c8_i32_43 : i32
    %144 = tpu.assume_multiple %143, 8 : i32
    %145 = arith.index_cast %144 : i32 to index
    %c0_44 = arith.constant 0 : index
    %146 = vector.load %arg13[%145, %c0_44] : memref<64x512xf32, #tpu.memory_space<vmem>>, vector<8x512xf32>
    %c0_45 = arith.constant 0 : index
    %c0_46 = arith.constant 0 : index
    %147 = vector.load %arg3[%c0_45, %c0_46] : memref<128x512xf32, #tpu.memory_space<vmem>>, vector<128x512xf32>
    %cst_47 = arith.constant dense<0.000000e+00> : vector<8x512xf32>
    %148 = tpu.matmul %142, %147, %cst_47 {dimension_numbers = #tpu.dot_dimension_numbers<[1], [0], [0], [1], [0, 0, 1, 1], [], []>} : vector<8x128xf32>, vector<128x512xf32>, vector<8x512xf32> -> vector<8x512xf32>
    %149 = arith.addf %146, %148 : vector<8x512xf32>
    %150 = vector.extract_strided_slice %149 {offsets = [0, 0], sizes = [8, 128], strides = [1, 1]} : vector<8x512xf32> to vector<8x128xf32>
    %151 = arith.negf %150 : vector<8x128xf32>
    %152 = math.exp %151 : vector<8x128xf32>
    %cst_48 = arith.constant 1.000000e+00 : f32
    %153 = vector.broadcast %cst_48 : f32 to vector<8x128xf32>
    %154 = arith.addf %153, %152 : vector<8x128xf32>
    %155 = arith.divf %153, %154 : vector<8x128xf32>
    %156 = vector.extract_strided_slice %149 {offsets = [0, 128], sizes = [8, 128], strides = [1, 1]} : vector<8x512xf32> to vector<8x128xf32>
    %157 = arith.negf %156 : vector<8x128xf32>
    %158 = math.exp %157 : vector<8x128xf32>
    %cst_49 = arith.constant 1.000000e+00 : f32
    %159 = vector.broadcast %cst_49 : f32 to vector<8x128xf32>
    %160 = arith.addf %159, %158 : vector<8x128xf32>
    %161 = arith.divf %159, %160 : vector<8x128xf32>
    %162 = vector.extract_strided_slice %149 {offsets = [0, 256], sizes = [8, 128], strides = [1, 1]} : vector<8x512xf32> to vector<8x128xf32>
    %163 = math.tanh %162 : vector<8x128xf32>
    %164 = vector.extract_strided_slice %149 {offsets = [0, 384], sizes = [8, 128], strides = [1, 1]} : vector<8x512xf32> to vector<8x128xf32>
    %165 = arith.negf %164 : vector<8x128xf32>
    %166 = math.exp %165 : vector<8x128xf32>
    %cst_50 = arith.constant 1.000000e+00 : f32
    %167 = vector.broadcast %cst_50 : f32 to vector<8x128xf32>
    %168 = arith.addf %167, %166 : vector<8x128xf32>
    %169 = arith.divf %167, %168 : vector<8x128xf32>
    %170 = arith.mulf %161, %140 : vector<8x128xf32>
    %171 = arith.mulf %155, %163 : vector<8x128xf32>
    %172 = arith.addf %170, %171 : vector<8x128xf32>
    %173 = math.tanh %172 : vector<8x128xf32>
    %174 = arith.mulf %169, %173 : vector<8x128xf32>
    %c5_i32 = arith.constant 5 : i32
    %c8_i32_51 = arith.constant 8 : i32
    %175 = arith.muli %c5_i32, %c8_i32_51 : i32
    %176 = tpu.assume_multiple %175, 8 : i32
    %177 = arith.index_cast %176 : i32 to index
    %c0_52 = arith.constant 0 : index
    %178 = vector.load %arg13[%177, %c0_52] : memref<64x512xf32, #tpu.memory_space<vmem>>, vector<8x512xf32>
    %c0_53 = arith.constant 0 : index
    %c0_54 = arith.constant 0 : index
    %179 = vector.load %arg3[%c0_53, %c0_54] : memref<128x512xf32, #tpu.memory_space<vmem>>, vector<128x512xf32>
    %cst_55 = arith.constant dense<0.000000e+00> : vector<8x512xf32>
    %180 = tpu.matmul %174, %179, %cst_55 {dimension_numbers = #tpu.dot_dimension_numbers<[1], [0], [0], [1], [0, 0, 1, 1], [], []>} : vector<8x128xf32>, vector<128x512xf32>, vector<8x512xf32> -> vector<8x512xf32>
    %181 = arith.addf %178, %180 : vector<8x512xf32>
    %182 = vector.extract_strided_slice %181 {offsets = [0, 0], sizes = [8, 128], strides = [1, 1]} : vector<8x512xf32> to vector<8x128xf32>
    %183 = arith.negf %182 : vector<8x128xf32>
    %184 = math.exp %183 : vector<8x128xf32>
    %cst_56 = arith.constant 1.000000e+00 : f32
    %185 = vector.broadcast %cst_56 : f32 to vector<8x128xf32>
    %186 = arith.addf %185, %184 : vector<8x128xf32>
    %187 = arith.divf %185, %186 : vector<8x128xf32>
    %188 = vector.extract_strided_slice %181 {offsets = [0, 128], sizes = [8, 128], strides = [1, 1]} : vector<8x512xf32> to vector<8x128xf32>
    %189 = arith.negf %188 : vector<8x128xf32>
    %190 = math.exp %189 : vector<8x128xf32>
    %cst_57 = arith.constant 1.000000e+00 : f32
    %191 = vector.broadcast %cst_57 : f32 to vector<8x128xf32>
    %192 = arith.addf %191, %190 : vector<8x128xf32>
    %193 = arith.divf %191, %192 : vector<8x128xf32>
    %194 = vector.extract_strided_slice %181 {offsets = [0, 256], sizes = [8, 128], strides = [1, 1]} : vector<8x512xf32> to vector<8x128xf32>
    %195 = math.tanh %194 : vector<8x128xf32>
    %196 = vector.extract_strided_slice %181 {offsets = [0, 384], sizes = [8, 128], strides = [1, 1]} : vector<8x512xf32> to vector<8x128xf32>
    %197 = arith.negf %196 : vector<8x128xf32>
    %198 = math.exp %197 : vector<8x128xf32>
    %cst_58 = arith.constant 1.000000e+00 : f32
    %199 = vector.broadcast %cst_58 : f32 to vector<8x128xf32>
    %200 = arith.addf %199, %198 : vector<8x128xf32>
    %201 = arith.divf %199, %200 : vector<8x128xf32>
    %202 = arith.mulf %193, %172 : vector<8x128xf32>
    %203 = arith.mulf %187, %195 : vector<8x128xf32>
    %204 = arith.addf %202, %203 : vector<8x128xf32>
    %205 = math.tanh %204 : vector<8x128xf32>
    %206 = arith.mulf %201, %205 : vector<8x128xf32>
    %c6_i32 = arith.constant 6 : i32
    %c8_i32_59 = arith.constant 8 : i32
    %207 = arith.muli %c6_i32, %c8_i32_59 : i32
    %208 = tpu.assume_multiple %207, 8 : i32
    %209 = arith.index_cast %208 : i32 to index
    %c0_60 = arith.constant 0 : index
    %210 = vector.load %arg13[%209, %c0_60] : memref<64x512xf32, #tpu.memory_space<vmem>>, vector<8x512xf32>
    %c0_61 = arith.constant 0 : index
    %c0_62 = arith.constant 0 : index
    %211 = vector.load %arg3[%c0_61, %c0_62] : memref<128x512xf32, #tpu.memory_space<vmem>>, vector<128x512xf32>
    %cst_63 = arith.constant dense<0.000000e+00> : vector<8x512xf32>
    %212 = tpu.matmul %206, %211, %cst_63 {dimension_numbers = #tpu.dot_dimension_numbers<[1], [0], [0], [1], [0, 0, 1, 1], [], []>} : vector<8x128xf32>, vector<128x512xf32>, vector<8x512xf32> -> vector<8x512xf32>
    %213 = arith.addf %210, %212 : vector<8x512xf32>
    %214 = vector.extract_strided_slice %213 {offsets = [0, 0], sizes = [8, 128], strides = [1, 1]} : vector<8x512xf32> to vector<8x128xf32>
    %215 = arith.negf %214 : vector<8x128xf32>
    %216 = math.exp %215 : vector<8x128xf32>
    %cst_64 = arith.constant 1.000000e+00 : f32
    %217 = vector.broadcast %cst_64 : f32 to vector<8x128xf32>
    %218 = arith.addf %217, %216 : vector<8x128xf32>
    %219 = arith.divf %217, %218 : vector<8x128xf32>
    %220 = vector.extract_strided_slice %213 {offsets = [0, 128], sizes = [8, 128], strides = [1, 1]} : vector<8x512xf32> to vector<8x128xf32>
    %221 = arith.negf %220 : vector<8x128xf32>
    %222 = math.exp %221 : vector<8x128xf32>
    %cst_65 = arith.constant 1.000000e+00 : f32
    %223 = vector.broadcast %cst_65 : f32 to vector<8x128xf32>
    %224 = arith.addf %223, %222 : vector<8x128xf32>
    %225 = arith.divf %223, %224 : vector<8x128xf32>
    %226 = vector.extract_strided_slice %213 {offsets = [0, 256], sizes = [8, 128], strides = [1, 1]} : vector<8x512xf32> to vector<8x128xf32>
    %227 = math.tanh %226 : vector<8x128xf32>
    %228 = vector.extract_strided_slice %213 {offsets = [0, 384], sizes = [8, 128], strides = [1, 1]} : vector<8x512xf32> to vector<8x128xf32>
    %229 = arith.negf %228 : vector<8x128xf32>
    %230 = math.exp %229 : vector<8x128xf32>
    %cst_66 = arith.constant 1.000000e+00 : f32
    %231 = vector.broadcast %cst_66 : f32 to vector<8x128xf32>
    %232 = arith.addf %231, %230 : vector<8x128xf32>
    %233 = arith.divf %231, %232 : vector<8x128xf32>
    %234 = arith.mulf %225, %204 : vector<8x128xf32>
    %235 = arith.mulf %219, %227 : vector<8x128xf32>
    %236 = arith.addf %234, %235 : vector<8x128xf32>
    %237 = math.tanh %236 : vector<8x128xf32>
    %238 = arith.mulf %233, %237 : vector<8x128xf32>
    %c7_i32 = arith.constant 7 : i32
    %c8_i32_67 = arith.constant 8 : i32
    %239 = arith.muli %c7_i32, %c8_i32_67 : i32
    %240 = tpu.assume_multiple %239, 8 : i32
    %241 = arith.index_cast %240 : i32 to index
    %c0_68 = arith.constant 0 : index
    %242 = vector.load %arg13[%241, %c0_68] : memref<64x512xf32, #tpu.memory_space<vmem>>, vector<8x512xf32>
    %c0_69 = arith.constant 0 : index
    %c0_70 = arith.constant 0 : index
    %243 = vector.load %arg3[%c0_69, %c0_70] : memref<128x512xf32, #tpu.memory_space<vmem>>, vector<128x512xf32>
    %cst_71 = arith.constant dense<0.000000e+00> : vector<8x512xf32>
    %244 = tpu.matmul %238, %243, %cst_71 {dimension_numbers = #tpu.dot_dimension_numbers<[1], [0], [0], [1], [0, 0, 1, 1], [], []>} : vector<8x128xf32>, vector<128x512xf32>, vector<8x512xf32> -> vector<8x512xf32>
    %245 = arith.addf %242, %244 : vector<8x512xf32>
    %246 = vector.extract_strided_slice %245 {offsets = [0, 0], sizes = [8, 128], strides = [1, 1]} : vector<8x512xf32> to vector<8x128xf32>
    %247 = arith.negf %246 : vector<8x128xf32>
    %248 = math.exp %247 : vector<8x128xf32>
    %cst_72 = arith.constant 1.000000e+00 : f32
    %249 = vector.broadcast %cst_72 : f32 to vector<8x128xf32>
    %250 = arith.addf %249, %248 : vector<8x128xf32>
    %251 = arith.divf %249, %250 : vector<8x128xf32>
    %252 = vector.extract_strided_slice %245 {offsets = [0, 128], sizes = [8, 128], strides = [1, 1]} : vector<8x512xf32> to vector<8x128xf32>
    %253 = arith.negf %252 : vector<8x128xf32>
    %254 = math.exp %253 : vector<8x128xf32>
    %cst_73 = arith.constant 1.000000e+00 : f32
    %255 = vector.broadcast %cst_73 : f32 to vector<8x128xf32>
    %256 = arith.addf %255, %254 : vector<8x128xf32>
    %257 = arith.divf %255, %256 : vector<8x128xf32>
    %258 = vector.extract_strided_slice %245 {offsets = [0, 256], sizes = [8, 128], strides = [1, 1]} : vector<8x512xf32> to vector<8x128xf32>
    %259 = math.tanh %258 : vector<8x128xf32>
    %260 = vector.extract_strided_slice %245 {offsets = [0, 384], sizes = [8, 128], strides = [1, 1]} : vector<8x512xf32> to vector<8x128xf32>
    %261 = arith.negf %260 : vector<8x128xf32>
    %262 = math.exp %261 : vector<8x128xf32>
    %cst_74 = arith.constant 1.000000e+00 : f32
    %263 = vector.broadcast %cst_74 : f32 to vector<8x128xf32>
    %264 = arith.addf %263, %262 : vector<8x128xf32>
    %265 = arith.divf %263, %264 : vector<8x128xf32>
    %266 = arith.mulf %257, %236 : vector<8x128xf32>
    %267 = arith.mulf %251, %259 : vector<8x128xf32>
    %268 = arith.addf %266, %267 : vector<8x128xf32>
    %269 = math.tanh %268 : vector<8x128xf32>
    %270 = arith.mulf %265, %269 : vector<8x128xf32>
    %c8_i32_75 = arith.constant 8 : i32
    %c0_i32_76 = arith.constant 0 : i32
    %271 = tpu.memref_slice %arg17[%c0_i32_76] : memref<3x!tpu.dma_semaphore, #tpu.memory_space<semaphore_mem>> -> memref<1x!tpu.dma_semaphore, #tpu.memory_space<semaphore_mem>>
    %272 = tpu.memref_squeeze %271 : memref<1x!tpu.dma_semaphore, #tpu.memory_space<semaphore_mem>> -> memref<!tpu.dma_semaphore, #tpu.memory_space<semaphore_mem>>
    tpu.wait_dma2 semaphore(%272 : memref<!tpu.dma_semaphore, #tpu.memory_space<semaphore_mem>>) src(%arg5 : memref<128x512xbf16, #tpu.memory_space<any>>) dst(%arg14 : memref<128x512xbf16, #tpu.memory_space<vmem>>)
    %c1_i32_77 = arith.constant 1 : i32
    %273 = tpu.memref_slice %arg17[%c1_i32_77] : memref<3x!tpu.dma_semaphore, #tpu.memory_space<semaphore_mem>> -> memref<1x!tpu.dma_semaphore, #tpu.memory_space<semaphore_mem>>
    %274 = tpu.memref_squeeze %273 : memref<1x!tpu.dma_semaphore, #tpu.memory_space<semaphore_mem>> -> memref<!tpu.dma_semaphore, #tpu.memory_space<semaphore_mem>>
    tpu.wait_dma2 semaphore(%274 : memref<!tpu.dma_semaphore, #tpu.memory_space<semaphore_mem>>) src(%arg6 : memref<64x512xbf16, #tpu.memory_space<any>>) dst(%arg15 : memref<64x512xbf16, #tpu.memory_space<vmem>>)
    %275 = arith.truncf %270 : vector<8x128xf32> to vector<8x128xbf16>
    %c0_78 = arith.constant 0 : index
    %c0_79 = arith.constant 0 : index
    %276 = vector.load %arg14[%c0_78, %c0_79] : memref<128x512xbf16, #tpu.memory_space<vmem>>, vector<128x512xbf16>
    %cst_80 = arith.constant dense<0.000000e+00> : vector<8x512xf32>
    %277 = tpu.matmul %275, %276, %cst_80 {dimension_numbers = #tpu.dot_dimension_numbers<[1], [0], [0], [1], [0, 0, 1, 1], [], []>} : vector<8x128xbf16>, vector<128x512xbf16>, vector<8x512xf32> -> vector<8x512xf32>
    %c0_81 = arith.constant 0 : index
    %c0_82 = arith.constant 0 : index
    %278 = vector.load %arg1[%c0_81, %c0_82] : memref<8x64xf32, #tpu.memory_space<vmem>>, vector<8x64xf32>
    %279 = arith.truncf %278 : vector<8x64xf32> to vector<8x64xbf16>
    %c0_83 = arith.constant 0 : index
    %c0_84 = arith.constant 0 : index
    %280 = vector.load %arg15[%c0_83, %c0_84] : memref<64x512xbf16, #tpu.memory_space<vmem>>, vector<64x512xbf16>
    %cst_85 = arith.constant dense<0.000000e+00> : vector<8x512xf32>
    %281 = tpu.matmul %279, %280, %cst_85 {dimension_numbers = #tpu.dot_dimension_numbers<[1], [0], [0], [1], [0, 0, 1, 1], [], []>} : vector<8x64xbf16>, vector<64x512xbf16>, vector<8x512xf32> -> vector<8x512xf32>
    %282 = arith.addf %277, %281 : vector<8x512xf32>
    %c0_86 = arith.constant 0 : index
    %c0_87 = arith.constant 0 : index
    %283 = vector.load %arg8[%c0_86, %c0_87] : memref<1x512xf32, #tpu.memory_space<vmem>>, vector<1x512xf32>
    %284 = vector.broadcast %283 : vector<1x512xf32> to vector<8x512xf32>
    %285 = arith.addf %282, %284 : vector<8x512xf32>
    %cst_88 = arith.constant 0.000000e+00 : f32
    %286 = vector.broadcast %cst_88 : f32 to vector<8x512xf32>
    %287 = arith.maximumf %285, %286 : vector<8x512xf32>
    %c2_i32_89 = arith.constant 2 : i32
    %288 = tpu.memref_slice %arg17[%c2_i32_89] : memref<3x!tpu.dma_semaphore, #tpu.memory_space<semaphore_mem>> -> memref<1x!tpu.dma_semaphore, #tpu.memory_space<semaphore_mem>>
    %289 = tpu.memref_squeeze %288 : memref<1x!tpu.dma_semaphore, #tpu.memory_space<semaphore_mem>> -> memref<!tpu.dma_semaphore, #tpu.memory_space<semaphore_mem>>
    tpu.wait_dma2 semaphore(%289 : memref<!tpu.dma_semaphore, #tpu.memory_space<semaphore_mem>>) src(%arg7 : memref<4x512x512xbf16, #tpu.memory_space<any>>) dst(%arg16 : memref<4x512x512xbf16, #tpu.memory_space<vmem>>)
    %290 = arith.truncf %287 : vector<8x512xf32> to vector<8x512xbf16>
    %c0_90 = arith.constant 0 : index
    %c0_91 = arith.constant 0 : index
    %c0_92 = arith.constant 0 : index
    %291 = vector.load %arg16[%c0_90, %c0_91, %c0_92] : memref<4x512x512xbf16, #tpu.memory_space<vmem>>, vector<1x512x512xbf16>
    %292 = vector.shape_cast %291 : vector<1x512x512xbf16> to vector<512x512xbf16>
    %cst_93 = arith.constant dense<0.000000e+00> : vector<8x512xf32>
    %293 = tpu.matmul %290, %292, %cst_93 {dimension_numbers = #tpu.dot_dimension_numbers<[1], [0], [0], [1], [0, 0, 1, 1], [], []>} : vector<8x512xbf16>, vector<512x512xbf16>, vector<8x512xf32> -> vector<8x512xf32>
    %c0_94 = arith.constant 0 : index
    %c0_95 = arith.constant 0 : index
    %c0_96 = arith.constant 0 : index
    %294 = vector.load %arg9[%c0_94, %c0_95, %c0_96] : memref<4x1x512xf32, #tpu.memory_space<vmem>>, vector<1x1x512xf32>
    %295 = vector.shape_cast %294 : vector<1x1x512xf32> to vector<1x512xf32>
    %296 = vector.broadcast %295 : vector<1x512xf32> to vector<8x512xf32>
    %297 = arith.addf %293, %296 : vector<8x512xf32>
    %cst_97 = arith.constant 0.000000e+00 : f32
    %298 = vector.broadcast %cst_97 : f32 to vector<8x512xf32>
    %299 = arith.maximumf %297, %298 : vector<8x512xf32>
    %300 = arith.truncf %299 : vector<8x512xf32> to vector<8x512xbf16>
    %c1 = arith.constant 1 : index
    %c0_98 = arith.constant 0 : index
    %c0_99 = arith.constant 0 : index
    %301 = vector.load %arg16[%c1, %c0_98, %c0_99] : memref<4x512x512xbf16, #tpu.memory_space<vmem>>, vector<1x512x512xbf16>
    %302 = vector.shape_cast %301 : vector<1x512x512xbf16> to vector<512x512xbf16>
    %cst_100 = arith.constant dense<0.000000e+00> : vector<8x512xf32>
    %303 = tpu.matmul %300, %302, %cst_100 {dimension_numbers = #tpu.dot_dimension_numbers<[1], [0], [0], [1], [0, 0, 1, 1], [], []>} : vector<8x512xbf16>, vector<512x512xbf16>, vector<8x512xf32> -> vector<8x512xf32>
    %c1_101 = arith.constant 1 : index
    %c0_102 = arith.constant 0 : index
    %c0_103 = arith.constant 0 : index
    %304 = vector.load %arg9[%c1_101, %c0_102, %c0_103] : memref<4x1x512xf32, #tpu.memory_space<vmem>>, vector<1x1x512xf32>
    %305 = vector.shape_cast %304 : vector<1x1x512xf32> to vector<1x512xf32>
    %306 = vector.broadcast %305 : vector<1x512xf32> to vector<8x512xf32>
    %307 = arith.addf %303, %306 : vector<8x512xf32>
    %cst_104 = arith.constant 0.000000e+00 : f32
    %308 = vector.broadcast %cst_104 : f32 to vector<8x512xf32>
    %309 = arith.maximumf %307, %308 : vector<8x512xf32>
    %310 = arith.truncf %309 : vector<8x512xf32> to vector<8x512xbf16>
    %c2 = arith.constant 2 : index
    %c0_105 = arith.constant 0 : index
    %c0_106 = arith.constant 0 : index
    %311 = vector.load %arg16[%c2, %c0_105, %c0_106] : memref<4x512x512xbf16, #tpu.memory_space<vmem>>, vector<1x512x512xbf16>
    %312 = vector.shape_cast %311 : vector<1x512x512xbf16> to vector<512x512xbf16>
    %cst_107 = arith.constant dense<0.000000e+00> : vector<8x512xf32>
    %313 = tpu.matmul %310, %312, %cst_107 {dimension_numbers = #tpu.dot_dimension_numbers<[1], [0], [0], [1], [0, 0, 1, 1], [], []>} : vector<8x512xbf16>, vector<512x512xbf16>, vector<8x512xf32> -> vector<8x512xf32>
    %c2_108 = arith.constant 2 : index
    %c0_109 = arith.constant 0 : index
    %c0_110 = arith.constant 0 : index
    %314 = vector.load %arg9[%c2_108, %c0_109, %c0_110] : memref<4x1x512xf32, #tpu.memory_space<vmem>>, vector<1x1x512xf32>
    %315 = vector.shape_cast %314 : vector<1x1x512xf32> to vector<1x512xf32>
    %316 = vector.broadcast %315 : vector<1x512xf32> to vector<8x512xf32>
    %317 = arith.addf %313, %316 : vector<8x512xf32>
    %cst_111 = arith.constant 0.000000e+00 : f32
    %318 = vector.broadcast %cst_111 : f32 to vector<8x512xf32>
    %319 = arith.maximumf %317, %318 : vector<8x512xf32>
    %320 = arith.truncf %319 : vector<8x512xf32> to vector<8x512xbf16>
    %c3 = arith.constant 3 : index
    %c0_112 = arith.constant 0 : index
    %c0_113 = arith.constant 0 : index
    %321 = vector.load %arg16[%c3, %c0_112, %c0_113] : memref<4x512x512xbf16, #tpu.memory_space<vmem>>, vector<1x512x512xbf16>
    %322 = vector.shape_cast %321 : vector<1x512x512xbf16> to vector<512x512xbf16>
    %cst_114 = arith.constant dense<0.000000e+00> : vector<8x512xf32>
    %323 = tpu.matmul %320, %322, %cst_114 {dimension_numbers = #tpu.dot_dimension_numbers<[1], [0], [0], [1], [0, 0, 1, 1], [], []>} : vector<8x512xbf16>, vector<512x512xbf16>, vector<8x512xf32> -> vector<8x512xf32>
    %c3_115 = arith.constant 3 : index
    %c0_116 = arith.constant 0 : index
    %c0_117 = arith.constant 0 : index
    %324 = vector.load %arg9[%c3_115, %c0_116, %c0_117] : memref<4x1x512xf32, #tpu.memory_space<vmem>>, vector<1x1x512xf32>
    %325 = vector.shape_cast %324 : vector<1x1x512xf32> to vector<1x512xf32>
    %326 = vector.broadcast %325 : vector<1x512xf32> to vector<8x512xf32>
    %327 = arith.addf %323, %326 : vector<8x512xf32>
    %cst_118 = arith.constant 0.000000e+00 : f32
    %328 = vector.broadcast %cst_118 : f32 to vector<8x512xf32>
    %329 = arith.maximumf %327, %328 : vector<8x512xf32>
    %c0_119 = arith.constant 0 : index
    %c0_120 = arith.constant 0 : index
    %330 = vector.load %arg10[%c0_119, %c0_120] : memref<1x512xf32, #tpu.memory_space<vmem>>, vector<1x512xf32>
    %331 = vector.broadcast %330 : vector<1x512xf32> to vector<8x512xf32>
    %332 = arith.mulf %329, %331 : vector<8x512xf32>
    %cst_121 = arith.constant dense<0.000000e+00> : vector<8xf32>
    %333 = vector.multi_reduction <add>, %332, %cst_121 [1] : vector<8x512xf32> to vector<8xf32>
    %334 = vector.shape_cast %333 : vector<8xf32> to vector<8x1xf32>
    %c0_122 = arith.constant 0 : index
    %c0_123 = arith.constant 0 : index
    %335 = vector.load %arg11[%c0_122, %c0_123] : memref<1x1xf32, #tpu.memory_space<vmem>>, vector<1x1xf32>
    %336 = vector.broadcast %335 : vector<1x1xf32> to vector<8x1xf32>
    %337 = arith.addf %334, %336 : vector<8x1xf32>
    %c0_124 = arith.constant 0 : index
    %c0_125 = arith.constant 0 : index
    %338 = vector.load %arg12[%c0_124, %c0_125] : memref<8x1xf32, #tpu.memory_space<vmem>>, vector<8x1xf32>
    tpu.vector_store %arg12[%c0_124, %c0_125], %337 {strides = array<i32>} : memref<8x1xf32, #tpu.memory_space<vmem>>, vector<8x1xf32>,
    return
  }
}

</mosaic_0001>

<llo_original>
// kernel: lstm_model_forward.1
$region0: #{lstm_model_forward.1}
  #allocation0 [shape = 'u32[]', space=smem, size = 0x4, offset = 0x4, fixed_abs, tag = 'smem constant byte address 0x4 - core index']
  #allocation1 [shape = 'u32[144,128]{1,0:T(1,128)}', space=vmem, size = 0x12000, scoped, tag = 'internal scratch']
  #allocation2 [shape = 'f32[64,512]{1,0:T(8,128)}', space=vmem, size = 0x20000, scoped, tag = 'scratch operand']
  #allocation3 [shape = 'bf16[128,512]{1,0:T(8,128)(2,1)}', space=vmem, size = 0x20000, scoped, tag = 'scratch operand']
  #allocation4 [shape = 'bf16[64,512]{1,0:T(8,128)(2,1)}', space=vmem, size = 0x10000, scoped, tag = 'scratch operand']
  #allocation5 [shape = 'bf16[4,512,512]{2,1,0:T(8,128)(2,1)}', space=vmem, size = 0x200000, scoped, tag = 'scratch operand']
  #allocation6 [shape = 's32[3]{0}', space=sflag, size = 0xc, scoped, tag = 'scratch operand']
  #allocation7 [shape = 'f32[1,1]{1,0:T(1,128)S(1)}', space=vmem, size = 0x200, scoped, tag = 'scoped memory for lstm_model_forward.1']
  #allocation18 [shape = 's32[]', space=sflag, size = 0x4, offset = 0, fixed_abs, tag = 'sflag constant byte address 0x0 - dummy sync flag']
  #allocation19 [shape = 's32[]', space=sflag, size = 0x4, offset = 0, fixed_abs, tag = 'sflag constant byte address 0x0 - dummy sync flag']
  #allocation20 [shape = 'u32[]', space=smem, size = 0x4, offset = 0x44, fixed_abs, tag = 'smem constant byte address 0x44 - assertion arg 0']
  #allocation21 [shape = 'u32[]', space=smem, size = 0x4, offset = 0x48, fixed_abs, tag = 'smem constant byte address 0x48 - assertion arg 1']
  #allocation22 [shape = 's32[]', space=sflag, size = 0x4, offset = 0, fixed_abs, tag = 'sflag constant byte address 0x0 - dummy sync flag']
  #allocation23 [shape = 's32[]', space=sflag, size = 0x4, offset = 0, fixed_abs, tag = 'sflag constant byte address 0x0 - dummy sync flag']
  #allocation24 [shape = 's32[]', space=sflag, size = 0x4, offset = 0, fixed_abs, tag = 'sflag constant byte address 0x0 - dummy sync flag']
  #allocation25 [shape = 's32[]', space=sflag, size = 0x4, offset = 0, fixed_abs, tag = 'sflag constant byte address 0x0 - dummy sync flag']
  %s0 = inlined_call_operand.vmem [shape: f32[64,24], index: 0, kind: input, shape index: {}]
  %s1 = inlined_call_operand.vmem [shape: f32[8,64], index: 1, kind: input, shape index: {}]
  %s2 = inlined_call_operand.hbm [shape: f32[24,512], index: 2, kind: input, shape index: {}]
  %s3 = inlined_call_operand.hbm [shape: f32[128,512], index: 3, kind: input, shape index: {}]
  %s4 = inlined_call_operand.hbm [shape: f32[1,512], index: 4, kind: input, shape index: {}]
  %s5 = inlined_call_operand.hbm [shape: bf16[128,512], index: 5, kind: input, shape index: {}]
  %s6 = inlined_call_operand.hbm [shape: bf16[64,512], index: 6, kind: input, shape index: {}]
  %s7 = inlined_call_operand.hbm [shape: bf16[4,512,512], index: 7, kind: input, shape index: {}]
  %s8 = inlined_call_operand.hbm [shape: f32[1,512], index: 8, kind: input, shape index: {}]
  %s9 = inlined_call_operand.hbm [shape: f32[4,1,512], index: 9, kind: input, shape index: {}]
  %s10 = inlined_call_operand.hbm [shape: f32[1,512], index: 10, kind: input, shape index: {}]
  %s11 = inlined_call_operand.<no memory space> [shape: f32[1,1], index: 11, kind: input, shape index: {}]
  %s12 = inlined_call_operand.vmem [shape: f32[8,1], index: 12, kind: output, shape index: {}]
  %s13 = sld [smem:[#allocation0]]
  $region82: #{lstm_model_forward.1} parent=0
    _
  %s15 = ssub.s32 1, %s13
  %s16 = scalar_select 0, %s15, %s13
  %v17 = vstv %s11
  %18 = vst [vmem:[#allocation7] sm:$0x1] %v17
  $region1: #{lstm_model_forward.1} parent=0
    #allocation8 [shape = 'u8[49152]{0}', space=vmem, size = 0xc000, scoped, tag = 'input window, operand 2, single buffered']
    #allocation9 [shape = 's32[1]{0}', space=sflag, size = 0x4, scoped, tag = 'scoped memory for lstm_model_forward.1']
    #allocation10 [shape = 'u8[262144]{0}', space=vmem, size = 0x40000, scoped, tag = 'input window, operand 3, single buffered']
    #allocation11 [shape = 's32[1]{0}', space=sflag, size = 0x4, scoped, tag = 'scoped memory for lstm_model_forward.1']
    #allocation12 [shape = 'u8[2048]{0}', space=vmem, size = 0x800, scoped, tag = 'input window, operand 4, single buffered']
    #allocation13 [shape = 'u8[2048]{0}', space=vmem, size = 0x800, scoped, tag = 'input window, operand 8, single buffered']
    #allocation14 [shape = 's32[1]{0}', space=sflag, size = 0x4, scoped, tag = 'scoped memory for lstm_model_forward.1']
    #allocation15 [shape = 'u8[8192]{0}', space=vmem, size = 0x2000, scoped, tag = 'input window, operand 9, single buffered']
    #allocation16 [shape = 'u8[2048]{0}', space=vmem, size = 0x800, scoped, tag = 'input window, operand 10, single buffered']
    #allocation17 [shape = 's32[1]{0}', space=sflag, size = 0x4, scoped, tag = 'scoped memory for lstm_model_forward.1']
    %19 = vsyncpa [#allocation9], 0
    %20 = vsyncpa [#allocation11], 0
    %21 = vsyncpa [#allocation14], 0
    %22 = vsyncpa [#allocation17], 0
    // Predicated region
    $region2: #{lstm_model_forward.1} parent=1 // pred_check
      _
    $region3: #{lstm_model_forward.1} parent=1 // pred_check_branch
      %24 = sbr.rel (0) target = $region5
    $region4: #{lstm_model_forward.1} parent=1 // pred_region
      _
    $region5: #{lstm_model_forward.1} parent=1 // pred_fallthru
      _
    // Predicated region
    $region6: #{lstm_model_forward.1} parent=1 // pred_check
      _
    $region7: #{lstm_model_forward.1} parent=1 // pred_check_branch
      %26 = sbr.rel (0) target = $region9
    $region8: #{lstm_model_forward.1} parent=1 // pred_region
      _
    $region9: #{lstm_model_forward.1} parent=1 // pred_fallthru
      _
    // Predicated region
    $region10: #{lstm_model_forward.1} parent=1 // pred_check
      _
    $region11: #{lstm_model_forward.1} parent=1 // pred_check_branch
      %28 = sbr.rel (0) target = $region13
    $region12: #{lstm_model_forward.1} parent=1 // pred_region
      %s30 = ssub.s32 1536, 1536
      %31 = vsyncadd [#allocation9], %s30
      %s32 = sshll.u32 [#allocation8], 4
      %s33 = int_to_ptr.vmem [resolvable:$true] %s32
      %38 = dma.hbm_to_vmem [thread:$0]  %s2, 1536, %s33, [#allocation9], 512, 512, 32
    $region13: #{lstm_model_forward.1} parent=1 // pred_fallthru
      _
    // Predicated region
    $region14: #{lstm_model_forward.1} parent=1 // pred_check
      _
    $region15: #{lstm_model_forward.1} parent=1 // pred_check_branch
      %40 = sbr.rel (0) target = $region17
    $region16: #{lstm_model_forward.1} parent=1 // pred_region
      %s42 = ssub.s32 8192, 8192
      %43 = vsyncadd [#allocation11], %s42
      %s44 = sshll.u32 [#allocation10], 4
      %s45 = int_to_ptr.vmem [resolvable:$true] %s44
      %50 = dma.hbm_to_vmem [thread:$0]  %s3, 8192, %s45, [#allocation11], 512, 512, 32
    $region17: #{lstm_model_forward.1} parent=1 // pred_fallthru
      _
    // Predicated region
    $region18: #{lstm_model_forward.1} parent=1 // pred_check
      _
    $region19: #{lstm_model_forward.1} parent=1 // pred_check_branch
      %52 = sbr.rel (0) target = $region21
    $region20: #{lstm_model_forward.1} parent=1 // pred_region
      %s54 = ssub.s32 64, 64
      %55 = vsyncadd [#allocation11], %s54
      %s57 = sshll.u32 [#allocation12], 4
      %s58 = int_to_ptr.vmem [resolvable:$true] %s57
      %60 = dma.hbm_to_vmem [thread:$0]  %s4, 64, %s58, [#allocation11]
    $region21: #{lstm_model_forward.1} parent=1 // pred_fallthru
      _
    // Predicated region
    $region22: #{lstm_model_forward.1} parent=1 // pred_check
      _
    $region23: #{lstm_model_forward.1} parent=1 // pred_check_branch
      %62 = sbr.rel (0) target = $region25
    $region24: #{lstm_model_forward.1} parent=1 // pred_region
      %s64 = ssub.s32 64, 64
      %65 = vsyncadd [#allocation14], %s64
      %s67 = sshll.u32 [#allocation13], 4
      %s68 = int_to_ptr.vmem [resolvable:$true] %s67
      %70 = dma.hbm_to_vmem [thread:$0]  %s8, 64, %s68, [#allocation14]
    $region25: #{lstm_model_forward.1} parent=1 // pred_fallthru
      _
    // Predicated region
    $region26: #{lstm_model_forward.1} parent=1 // pred_check
      _
    $region27: #{lstm_model_forward.1} parent=1 // pred_check_branch
      %72 = sbr.rel (0) target = $region29
    $region28: #{lstm_model_forward.1} parent=1 // pred_region
      %s74 = ssub.s32 256, 256
      %75 = vsyncadd [#allocation14], %s74
      %s76 = sshll.u32 [#allocation15], 4
      %s77 = int_to_ptr.vmem [resolvable:$true] %s76
      %82 = dma.hbm_to_vmem [thread:$0]  %s9, 256, %s77, [#allocation14], 64, 64, 4
    $region29: #{lstm_model_forward.1} parent=1 // pred_fallthru
      _
    // Predicated region
    $region30: #{lstm_model_forward.1} parent=1 // pred_check
      _
    $region31: #{lstm_model_forward.1} parent=1 // pred_check_branch
      %84 = sbr.rel (0) target = $region33
    $region32: #{lstm_model_forward.1} parent=1 // pred_region
      %s86 = ssub.s32 64, 64
      %87 = vsyncadd [#allocation17], %s86
      %s89 = sshll.u32 [#allocation16], 4
      %s90 = int_to_ptr.vmem [resolvable:$true] %s89
      %92 = dma.hbm_to_vmem [thread:$0]  %s10, 64, %s90, [#allocation17]
    $region33: #{lstm_model_forward.1} parent=1 // pred_fallthru
      _
    // Predicated region
    $region34: #{lstm_model_forward.1} parent=1 // pred_check
      _
    $region35: #{lstm_model_forward.1} parent=1 // pred_check_branch
      %94 = sbr.rel (0) target = $region37
    $region36: #{lstm_model_forward.1} parent=1 // pred_region
      _
    $region37: #{lstm_model_forward.1} parent=1 // pred_fallthru
      _
    // Predicated region
    $region38: #{lstm_model_forward.1} parent=1 // pred_check
      _
    $region39: #{lstm_model_forward.1} parent=1 // pred_check_branch
      %96 = sbr.rel (0) target = $region41
    $region40: #{lstm_model_forward.1} parent=1 // pred_region
      %97 = dma.done [#allocation9], 1536
    $region41: #{lstm_model_forward.1} parent=1 // pred_fallthru
      _
    // Predicated region
    $region42: #{lstm_model_forward.1} parent=1 // pred_check
      _
    $region43: #{lstm_model_forward.1} parent=1 // pred_check_branch
      %99 = sbr.rel (0) target = $region45
    $region44: #{lstm_model_forward.1} parent=1 // pred_region
      %100 = dma.done [#allocation11], 8192
    $region45: #{lstm_model_forward.1} parent=1 // pred_fallthru
      _
    // Predicated region
    $region46: #{lstm_model_forward.1} parent=1 // pred_check
      _
    $region47: #{lstm_model_forward.1} parent=1 // pred_check_branch
      %102 = sbr.rel (0) target = $region49
    $region48: #{lstm_model_forward.1} parent=1 // pred_region
      %103 = dma.done [#allocation11], 64
    $region49: #{lstm_model_forward.1} parent=1 // pred_fallthru
      _
    // Predicated region
    $region50: #{lstm_model_forward.1} parent=1 // pred_check
      _
    $region51: #{lstm_model_forward.1} parent=1 // pred_check_branch
      %105 = sbr.rel (0) target = $region53
    $region52: #{lstm_model_forward.1} parent=1 // pred_region
      %106 = dma.done [#allocation14], 64
    $region53: #{lstm_model_forward.1} parent=1 // pred_fallthru
      _
    // Predicated region
    $region54: #{lstm_model_forward.1} parent=1 // pred_check
      _
    $region55: #{lstm_model_forward.1} parent=1 // pred_check_branch
      %108 = sbr.rel (0) target = $region57
    $region56: #{lstm_model_forward.1} parent=1 // pred_region
      %109 = dma.done [#allocation14], 256
    $region57: #{lstm_model_forward.1} parent=1 // pred_fallthru
      _
    // Predicated region
    $region58: #{lstm_model_forward.1} parent=1 // pred_check
      _
    $region59: #{lstm_model_forward.1} parent=1 // pred_check_branch
      %111 = sbr.rel (0) target = $region61
    $region60: #{lstm_model_forward.1} parent=1 // pred_region
      %112 = dma.done [#allocation17], 64
    $region61: #{lstm_model_forward.1} parent=1 // pred_fallthru
      _
    // Predicated region
    $region62: #{lstm_model_forward.1} parent=1 // pred_check
      _
    $region63: #{lstm_model_forward.1} parent=1 // pred_check_branch
      %115 = sbr.rel target = $region65
    $region64: #{lstm_model_forward.1} parent=1 // pred_region
      %116 = sst [smem:[#allocation20]] [#allocation19]
      %117 = sst [smem:[#allocation21]] [#allocation18]
    $region65: #{lstm_model_forward.1} parent=1 // pred_fallthru
      _
    %119 = shalt.err (0)
    %s121 = sshll.u32 [#allocation3], 4
    %s122 = int_to_ptr.vmem [resolvable:$true] %s121
    %124 = dma.hbm_to_vmem [thread:$0]  %s5, 4096, %s122, [#allocation6]
    %s125 = scalar_lea.sflag [#allocation6], 1
    // Predicated region
    $region66: #{lstm_model_forward.1} parent=1 // pred_check
      _
    $region67: #{lstm_model_forward.1} parent=1 // pred_check_branch
      %127 = sbr.rel target = $region69
    $region68: #{lstm_model_forward.1} parent=1 // pred_region
      %128 = sst [smem:[#allocation20]] [#allocation23]
      %129 = sst [smem:[#allocation21]] [#allocation22]
    $region69: #{lstm_model_forward.1} parent=1 // pred_fallthru
      _
    %131 = shalt.err (0)
    %s133 = sshll.u32 [#allocation4], 4
    %s134 = int_to_ptr.vmem [resolvable:$true] %s133
    %136 = dma.hbm_to_vmem [thread:$0]  %s6, 2048, %s134, %s125
    %s137 = scalar_lea.sflag [#allocation6], 2
    // Predicated region
    $region70: #{lstm_model_forward.1} parent=1 // pred_check
      _
    $region71: #{lstm_model_forward.1} parent=1 // pred_check_branch
      %139 = sbr.rel target = $region73
    $region72: #{lstm_model_forward.1} parent=1 // pred_region
      %140 = sst [smem:[#allocation20]] [#allocation25]
      %141 = sst [smem:[#allocation21]] [#allocation24]
    $region73: #{lstm_model_forward.1} parent=1 // pred_fallthru
      _
    %143 = shalt.err (0)
    %s145 = sshll.u32 [#allocation5], 4
    %s146 = int_to_ptr.vmem [resolvable:$true] %s145
    %148 = dma.hbm_to_vmem [thread:$0]  %s7, 65536, %s146, %s137
    %v149 = vld [vmem:[%s0] sm:$0xff]
    %v150 = vld [vmem:[%s0 + $0x8] sm:$0xff]
    %v151 = vld [vmem:[%s0 + $0x10] sm:$0xff]
    %v152 = vld [vmem:[%s0 + $0x18] sm:$0xff]
    %v153 = vld [vmem:[%s0 + $0x20] sm:$0xff]
    %v154 = vld [vmem:[%s0 + $0x28] sm:$0xff]
    %v155 = vld [vmem:[%s0 + $0x30] sm:$0xff]
    %v156 = vld [vmem:[%s0 + $0x38] sm:$0xff]
    %v157 = vld [vmem:[#allocation8] sm:$0xff]
    %v158 = vld [vmem:[#allocation8 + $0x8] sm:$0xff]
    %v159 = vld [vmem:[#allocation8 + $0x10] sm:$0xff]
    %v160 = vld [vmem:[#allocation8 + $0x18] sm:$0xff]
    %v161 = vld [vmem:[#allocation8 + $0x20] sm:$0xff]
    %v162 = vld [vmem:[#allocation8 + $0x28] sm:$0xff]
    %v163 = vld [vmem:[#allocation8 + $0x30] sm:$0xff]
    %v164 = vld [vmem:[#allocation8 + $0x38] sm:$0xff]
    %v165 = vld [vmem:[#allocation8 + $0x40] sm:$0xff]
    %v166 = vld [vmem:[#allocation8 + $0x48] sm:$0xff]
    %v167 = vld [vmem:[#allocation8 + $0x50] sm:$0xff]
    %v168 = vld [vmem:[#allocation8 + $0x58] sm:$0xff]
    %v169 = vld [vmem:[#allocation12] sm:$0xf]
    %v171 = vlaneseq
    %v172 = vshrl.u32 %v171, 7
    %v173 = vsub.s32 0, %v172
    %v174 = vrot.slane %v169, %v173
    %v175 = vlaneseq
    %v176 = vshrl.u32 %v175, 7
    %v177 = vsub.s32 1, %v176
    %v178 = vrot.slane %v169, %v177
    %v179 = vlaneseq
    %v180 = vshrl.u32 %v179, 7
    %v181 = vsub.s32 2, %v180
    %v182 = vrot.slane %v169, %v181
    %v183 = vlaneseq
    %v184 = vshrl.u32 %v183, 7
    %v185 = vsub.s32 3, %v184
    %v186 = vrot.slane %v169, %v185
    %vm191 = vcmask 195584
    %v193 = vsel %vm191, %v149, 0
    %v196 = vsel %vm191, %v150, 0
    %v199 = vsel %vm191, %v151, 0
    %v202 = vsel %vm191, %v152, 0
    %v205 = vsel %vm191, %v153, 0
    %v208 = vsel %vm191, %v154, 0
    %v211 = vsel %vm191, %v155, 0
    %v214 = vsel %vm191, %v156, 0
    %216 = vmatprep.subr.mxu0 0.0
    %217 = vmatpush1.msra.mxu0 0.0
    %218 = vmatprep.subr.mxu0 0.0
    %219 = vmatpush1.msra.mxu0 0.0
    %220 = vmatprep.subr.mxu0 0.0
    %221 = vmatpush1.msra.mxu0 0.0
    %222 = vmatprep.subr.mxu0 0.0
    %223 = vmatpush1.msra.mxu0 0.0
    %224 = vmatprep.subr.mxu0 0.0
    %225 = vmatpush1.msra.mxu0 0.0
    %226 = vmatprep.subr.mxu0 0.0
    %227 = vmatpush1.msra.mxu0 0.0
    %228 = vmatprep.subr.mxu0 0.0
    %229 = vmatpush1.msra.mxu0 0.0
    %230 = vmatprep.subr.mxu0 0.0
    %231 = vmatpush1.msra.mxu0 0.0
    %232 = vmatprep.subr.mxu0 0.0
    %233 = vmatpush1.msra.mxu0 0.0
    %234 = vmatprep.subr.mxu0 0.0
    %235 = vmatpush1.msra.mxu0 0.0
    %236 = vmatprep.subr.mxu0 0.0
    %237 = vmatpush1.msra.mxu0 0.0
    %238 = vmatprep.subr.mxu0 0.0
    %239 = vmatpush1.msra.mxu0 0.0
    %240 = vmatprep.subr.mxu0 0.0
    %241 = vmatpush1.msra.mxu0 0.0
    %242 = vmatprep.subr.mxu0 %v166
    %243 = vmatpush1.msra.mxu0 %v165
    %244 = vmatprep.subr.mxu0 %v162
    %245 = vmatpush1.msra.mxu0 %v161
    %246 = vmatprep.subr.mxu0 %v158
    %247 = vmatpush1.msra.mxu0 %v157
    %248 = vmatprep.subr.mxu0 0.0
    %249 = vmatpush2.msra.mxu0 0.0
    %250 = vmatprep.subr.mxu0 0.0
    %251 = vmatpush2.msra.mxu0 0.0
    %252 = vmatprep.subr.mxu0 0.0
    %253 = vmatpush2.msra.mxu0 0.0
    %254 = vmatprep.subr.mxu0 0.0
    %255 = vmatpush2.msra.mxu0 0.0
    %256 = vmatprep.subr.mxu0 0.0
    %257 = vmatpush2.msra.mxu0 0.0
    %258 = vmatprep.subr.mxu0 0.0
    %259 = vmatpush2.msra.mxu0 0.0
    %260 = vmatprep.subr.mxu0 0.0
    %261 = vmatpush2.msra.mxu0 0.0
    %262 = vmatprep.subr.mxu0 0.0
    %263 = vmatpush2.msra.mxu0 0.0
    %264 = vmatprep.subr.mxu0 0.0
    %265 = vmatpush2.msra.mxu0 0.0
    %266 = vmatprep.subr.mxu0 0.0
    %267 = vmatpush2.msra.mxu0 0.0
    %268 = vmatprep.subr.mxu0 0.0
    %269 = vmatpush2.msra.mxu0 0.0
    %270 = vmatprep.subr.mxu0 0.0
    %271 = vmatpush2.msra.mxu0 0.0
    %272 = vmatprep.subr.mxu0 0.0
    %273 = vmatpush2.msra.mxu0 0.0
    %274 = vmatprep.subr.mxu0 0.0
    %275 = vmatpush2.msra.mxu0 0.0
    %276 = vmatprep.subr.mxu0 0.0
    %277 = vmatpush2.msra.mxu0 0.0
    %278 = vmatprep.subr.mxu0 0.0
    %279 = vmatpush2.msra.mxu0 0.0
    %280 = vmatprep.mubr.f32.mxu0 0.0
    %281 = vmatmul.mubr.f32.gmra.mxu0 %v193
    %v282 = vpop.f32.mrf.mxu0
    %v283 = vadd.f32 %v174, %v282
    %v284 = vpop.f32.mrf.mxu0
    %v285 = vadd.f32 %v178, %v284
    %286 = vmatprep.mubr.f32.mxu0 0.0
    %287 = vmatmul.mubr.f32.gmra.mxu0 %v196
    %v288 = vpop.f32.mrf.mxu0
    %v289 = vadd.f32 %v174, %v288
    %v290 = vpop.f32.mrf.mxu0
    %v291 = vadd.f32 %v178, %v290
    %292 = vmatprep.mubr.f32.mxu0 0.0
    %293 = vmatmul.mubr.f32.gmra.mxu0 %v199
    %v294 = vpop.f32.mrf.mxu0
    %v295 = vadd.f32 %v174, %v294
    %v296 = vpop.f32.mrf.mxu0
    %v297 = vadd.f32 %v178, %v296
    %298 = vmatprep.mubr.f32.mxu0 0.0
    %299 = vmatmul.mubr.f32.gmra.mxu0 %v202
    %v300 = vpop.f32.mrf.mxu0
    %v301 = vadd.f32 %v174, %v300
    %v302 = vpop.f32.mrf.mxu0
    %v303 = vadd.f32 %v178, %v302
    %304 = vmatprep.mubr.f32.mxu0 0.0
    %305 = vmatmul.mubr.f32.gmra.mxu0 %v205
    %v306 = vpop.f32.mrf.mxu0
    %v307 = vadd.f32 %v174, %v306
    %v308 = vpop.f32.mrf.mxu0
    %v309 = vadd.f32 %v178, %v308
    %310 = vmatprep.mubr.f32.mxu0 0.0
    %311 = vmatmul.mubr.f32.gmra.mxu0 %v208
    %v312 = vpop.f32.mrf.mxu0
    %v313 = vadd.f32 %v174, %v312
    %v314 = vpop.f32.mrf.mxu0
    %v315 = vadd.f32 %v178, %v314
    %316 = vmatprep.mubr.f32.mxu0 0.0
    %317 = vmatmul.mubr.f32.gmra.mxu0 %v211
    %v318 = vpop.f32.mrf.mxu0
    %v319 = vadd.f32 %v174, %v318
    %v320 = vpop.f32.mrf.mxu0
    %v321 = vadd.f32 %v178, %v320
    %322 = vmatprep.mubr.f32.mxu0 0.0
    %323 = vmatmul.mubr.f32.gmra.mxu0 %v214
    %v324 = vpop.f32.mrf.mxu0
    %v325 = vadd.f32 %v174, %v324
    %v326 = vpop.f32.mrf.mxu0
    %v327 = vadd.f32 %v178, %v326
    %328 = vdwg.mxu0
    %329 = vmatprep.subr.mxu0 0.0
    %330 = vmatpush1.msra.mxu0 0.0
    %331 = vmatprep.subr.mxu0 0.0
    %332 = vmatpush1.msra.mxu0 0.0
    %333 = vmatprep.subr.mxu0 0.0
    %334 = vmatpush1.msra.mxu0 0.0
    %335 = vmatprep.subr.mxu0 0.0
    %336 = vmatpush1.msra.mxu0 0.0
    %337 = vmatprep.subr.mxu0 0.0
    %338 = vmatpush1.msra.mxu0 0.0
    %339 = vmatprep.subr.mxu0 0.0
    %340 = vmatpush1.msra.mxu0 0.0
    %341 = vmatprep.subr.mxu0 0.0
    %342 = vmatpush1.msra.mxu0 0.0
    %343 = vmatprep.subr.mxu0 0.0
    %344 = vmatpush1.msra.mxu0 0.0
    %345 = vmatprep.subr.mxu0 0.0
    %346 = vmatpush1.msra.mxu0 0.0
    %347 = vmatprep.subr.mxu0 0.0
    %348 = vmatpush1.msra.mxu0 0.0
    %349 = vmatprep.subr.mxu0 0.0
    %350 = vmatpush1.msra.mxu0 0.0
    %351 = vmatprep.subr.mxu0 0.0
    %352 = vmatpush1.msra.mxu0 0.0
    %353 = vmatprep.subr.mxu0 0.0
    %354 = vmatpush1.msra.mxu0 0.0
    %355 = vmatprep.subr.mxu0 %v168
    %356 = vmatpush1.msra.mxu0 %v167
    %357 = vmatprep.subr.mxu0 %v164
    %358 = vmatpush1.msra.mxu0 %v163
    %359 = vmatprep.subr.mxu0 %v160
    %360 = vmatpush1.msra.mxu0 %v159
    %361 = vmatprep.subr.mxu0 0.0
    %362 = vmatpush2.msra.mxu0 0.0
    %363 = vmatprep.subr.mxu0 0.0
    %364 = vmatpush2.msra.mxu0 0.0
    %365 = vmatprep.subr.mxu0 0.0
    %366 = vmatpush2.msra.mxu0 0.0
    %367 = vmatprep.subr.mxu0 0.0
    %368 = vmatpush2.msra.mxu0 0.0
    %369 = vmatprep.subr.mxu0 0.0
    %370 = vmatpush2.msra.mxu0 0.0
    %371 = vmatprep.subr.mxu0 0.0
    %372 = vmatpush2.msra.mxu0 0.0
    %373 = vmatprep.subr.mxu0 0.0
    %374 = vmatpush2.msra.mxu0 0.0
    %375 = vmatprep.subr.mxu0 0.0
    %376 = vmatpush2.msra.mxu0 0.0
    %377 = vmatprep.subr.mxu0 0.0
    %378 = vmatpush2.msra.mxu0 0.0
    %379 = vmatprep.subr.mxu0 0.0
    %380 = vmatpush2.msra.mxu0 0.0
    %381 = vmatprep.subr.mxu0 0.0
    %382 = vmatpush2.msra.mxu0 0.0
    %383 = vmatprep.subr.mxu0 0.0
    %384 = vmatpush2.msra.mxu0 0.0
    %385 = vmatprep.subr.mxu0 0.0
    %386 = vmatpush2.msra.mxu0 0.0
    %387 = vmatprep.subr.mxu0 0.0
    %388 = vmatpush2.msra.mxu0 0.0
    %389 = vmatprep.subr.mxu0 0.0
    %390 = vmatpush2.msra.mxu0 0.0
    %391 = vmatprep.subr.mxu0 0.0
    %392 = vmatpush2.msra.mxu0 0.0
    %393 = vmatprep.mubr.f32.mxu0 0.0
    %394 = vmatmul.mubr.f32.gmra.mxu0 %v193
    %v395 = vpop.f32.mrf.mxu0
    %v396 = vadd.f32 %v182, %v395
    %v397 = vpop.f32.mrf.mxu0
    %v398 = vadd.f32 %v186, %v397
    %399 = vmatprep.mubr.f32.mxu0 0.0
    %400 = vmatmul.mubr.f32.gmra.mxu0 %v196
    %v401 = vpop.f32.mrf.mxu0
    %v402 = vadd.f32 %v182, %v401
    %v403 = vpop.f32.mrf.mxu0
    %v404 = vadd.f32 %v186, %v403
    %405 = vmatprep.mubr.f32.mxu0 0.0
    %406 = vmatmul.mubr.f32.gmra.mxu0 %v199
    %v407 = vpop.f32.mrf.mxu0
    %v408 = vadd.f32 %v182, %v407
    %v409 = vpop.f32.mrf.mxu0
    %v410 = vadd.f32 %v186, %v409
    %411 = vmatprep.mubr.f32.mxu0 0.0
    %412 = vmatmul.mubr.f32.gmra.mxu0 %v202
    %v413 = vpop.f32.mrf.mxu0
    %v414 = vadd.f32 %v182, %v413
    %v415 = vpop.f32.mrf.mxu0
    %v416 = vadd.f32 %v186, %v415
    %417 = vmatprep.mubr.f32.mxu0 0.0
    %418 = vmatmul.mubr.f32.gmra.mxu0 %v205
    %v419 = vpop.f32.mrf.mxu0
    %v420 = vadd.f32 %v182, %v419
    %v421 = vpop.f32.mrf.mxu0
    %v422 = vadd.f32 %v186, %v421
    %423 = vmatprep.mubr.f32.mxu0 0.0
    %424 = vmatmul.mubr.f32.gmra.mxu0 %v208
    %v425 = vpop.f32.mrf.mxu0
    %v426 = vadd.f32 %v182, %v425
    %v427 = vpop.f32.mrf.mxu0
    %v428 = vadd.f32 %v186, %v427
    %429 = vmatprep.mubr.f32.mxu0 0.0
    %430 = vmatmul.mubr.f32.gmra.mxu0 %v211
    %v431 = vpop.f32.mrf.mxu0
    %v432 = vadd.f32 %v182, %v431
    %v433 = vpop.f32.mrf.mxu0
    %v434 = vadd.f32 %v186, %v433
    %435 = vmatprep.mubr.f32.mxu0 0.0
    %436 = vmatmul.mubr.f32.gmra.mxu0 %v214
    %v437 = vpop.f32.mrf.mxu0
    %v438 = vadd.f32 %v182, %v437
    %v439 = vpop.f32.mrf.mxu0
    %v440 = vadd.f32 %v186, %v439
    %441 = vdwg.mxu0
    %442 = vst [vmem:[#allocation2] sm:$0xff] %v283
    %443 = vst [vmem:[#allocation2 + $0x8] sm:$0xff] %v285
    %444 = vst [vmem:[#allocation2 + $0x10] sm:$0xff] %v396
    %445 = vst [vmem:[#allocation2 + $0x18] sm:$0xff] %v398
    %446 = vst [vmem:[#allocation2 + $0x20] sm:$0xff] %v289
    %447 = vst [vmem:[#allocation2 + $0x28] sm:$0xff] %v291
    %448 = vst [vmem:[#allocation2 + $0x30] sm:$0xff] %v402
    %449 = vst [vmem:[#allocation2 + $0x38] sm:$0xff] %v404
    %450 = vst [vmem:[#allocation2 + $0x40] sm:$0xff] %v295
    %451 = vst [vmem:[#allocation2 + $0x48] sm:$0xff] %v297
    %452 = vst [vmem:[#allocation2 + $0x50] sm:$0xff] %v408
    %453 = vst [vmem:[#allocation2 + $0x58] sm:$0xff] %v410
    %454 = vst [vmem:[#allocation2 + $0x60] sm:$0xff] %v301
    %455 = vst [vmem:[#allocation2 + $0x68] sm:$0xff] %v303
    %456 = vst [vmem:[#allocation2 + $0x70] sm:$0xff] %v414
    %457 = vst [vmem:[#allocation2 + $0x78] sm:$0xff] %v416
    %458 = vst [vmem:[#allocation2 + $0x80] sm:$0xff] %v307
    %459 = vst [vmem:[#allocation2 + $0x88] sm:$0xff] %v309
    %460 = vst [vmem:[#allocation2 + $0x90] sm:$0xff] %v420
    %461 = vst [vmem:[#allocation2 + $0x98] sm:$0xff] %v422
    %462 = vst [vmem:[#allocation2 + $0xa0] sm:$0xff] %v313
    %463 = vst [vmem:[#allocation2 + $0xa8] sm:$0xff] %v315
    %464 = vst [vmem:[#allocation2 + $0xb0] sm:$0xff] %v426
    %465 = vst [vmem:[#allocation2 + $0xb8] sm:$0xff] %v428
    %466 = vst [vmem:[#allocation2 + $0xc0] sm:$0xff] %v319
    %467 = vst [vmem:[#allocation2 + $0xc8] sm:$0xff] %v321
    %468 = vst [vmem:[#allocation2 + $0xd0] sm:$0xff] %v432
    %469 = vst [vmem:[#allocation2 + $0xd8] sm:$0xff] %v434
    %470 = vst [vmem:[#allocation2 + $0xe0] sm:$0xff] %v325
    %471 = vst [vmem:[#allocation2 + $0xe8] sm:$0xff] %v327
    %472 = vst [vmem:[#allocation2 + $0xf0] sm:$0xff] %v438
    %473 = vst [vmem:[#allocation2 + $0xf8] sm:$0xff] %v440
    %s474 = smul.u32 0, 4
    %s475 = smul.addr %s474, 8
    %s476 = scalar_lea.vmem [#allocation2], %s475
    %v477 = vld [vmem:[%s476] sm:$0xff]
    %v478 = vld [vmem:[%s476 + $0x8] sm:$0xff]
    %v479 = vld [vmem:[%s476 + $0x10] sm:$0xff]
    %v480 = vld [vmem:[%s476 + $0x18] sm:$0xff]
    %v481 = vld [vmem:[#allocation10] sm:$0xff]
    %v482 = vld [vmem:[#allocation10 + $0x8] sm:$0xff]
    %v483 = vld [vmem:[#allocation10 + $0x10] sm:$0xff]
    %v484 = vld [vmem:[#allocation10 + $0x18] sm:$0xff]
    %v485 = vld [vmem:[#allocation10 + $0x20] sm:$0xff]
    %v486 = vld [vmem:[#allocation10 + $0x28] sm:$0xff]
    %v487 = vld [vmem:[#allocation10 + $0x30] sm:$0xff]
    %v488 = vld [vmem:[#allocation10 + $0x38] sm:$0xff]
    %v489 = vld [vmem:[#allocation10 + $0x40] sm:$0xff]
    %v490 = vld [vmem:[#allocation10 + $0x48] sm:$0xff]
    %v491 = vld [vmem:[#allocation10 + $0x50] sm:$0xff]
    %v492 = vld [vmem:[#allocation10 + $0x58] sm:$0xff]
    %v493 = vld [vmem:[#allocation10 + $0x60] sm:$0xff]
    %v494 = vld [vmem:[#allocation10 + $0x68] sm:$0xff]
    %v495 = vld [vmem:[#allocation10 + $0x70] sm:$0xff]
    %v496 = vld [vmem:[#allocation10 + $0x78] sm:$0xff]
    %v497 = vld [vmem:[#allocation10 + $0x80] sm:$0xff]
    %v498 = vld [vmem:[#allocation10 + $0x88] sm:$0xff]
    %v499 = vld [vmem:[#allocation10 + $0x90] sm:$0xff]
    %v500 = vld [vmem:[#allocation10 + $0x98] sm:$0xff]
    %v501 = vld [vmem:[#allocation10 + $0xa0] sm:$0xff]
    %v502 = vld [vmem:[#allocation10 + $0xa8] sm:$0xff]
    %v503 = vld [vmem:[#allocation10 + $0xb0] sm:$0xff]
    %v504 = vld [vmem:[#allocation10 + $0xb8] sm:$0xff]
    %v505 = vld [vmem:[#allocation10 + $0xc0] sm:$0xff]
    %v506 = vld [vmem:[#allocation10 + $0xc8] sm:$0xff]
    %v507 = vld [vmem:[#allocation10 + $0xd0] sm:$0xff]
    %v508 = vld [vmem:[#allocation10 + $0xd8] sm:$0xff]
    %v509 = vld [vmem:[#allocation10 + $0xe0] sm:$0xff]
    %v510 = vld [vmem:[#allocation10 + $0xe8] sm:$0xff]
    %v511 = vld [vmem:[#allocation10 + $0xf0] sm:$0xff]
    %v512 = vld [vmem:[#allocation10 + $0xf8] sm:$0xff]
    %v513 = vld [vmem:[#allocation10 + $0x100] sm:$0xff]
    %v514 = vld [vmem:[#allocation10 + $0x108] sm:$0xff]
    %v515 = vld [vmem:[#allocation10 + $0x110] sm:$0xff]
    %v516 = vld [vmem:[#allocation10 + $0x118] sm:$0xff]
    %v517 = vld [vmem:[#allocation10 + $0x120] sm:$0xff]
    %v518 = vld [vmem:[#allocation10 + $0x128] sm:$0xff]
    %v519 = vld [vmem:[#allocation10 + $0x130] sm:$0xff]
    %v520 = vld [vmem:[#allocation10 + $0x138] sm:$0xff]
    %v521 = vld [vmem:[#allocation10 + $0x140] sm:$0xff]
    %v522 = vld [vmem:[#allocation10 + $0x148] sm:$0xff]
    %v523 = vld [vmem:[#allocation10 + $0x150] sm:$0xff]
    %v524 = vld [vmem:[#allocation10 + $0x158] sm:$0xff]
    %v525 = vld [vmem:[#allocation10 + $0x160] sm:$0xff]
    %v526 = vld [vmem:[#allocation10 + $0x168] sm:$0xff]
    %v527 = vld [vmem:[#allocation10 + $0x170] sm:$0xff]
    %v528 = vld [vmem:[#allocation10 + $0x178] sm:$0xff]
    %v529 = vld [vmem:[#allocation10 + $0x180] sm:$0xff]
    %v530 = vld [vmem:[#allocation10 + $0x188] sm:$0xff]
    %v531 = vld [vmem:[#allocation10 + $0x190] sm:$0xff]
    %v532 = vld [vmem:[#allocation10 + $0x198] sm:$0xff]
    %v533 = vld [vmem:[#allocation10 + $0x1a0] sm:$0xff]
    %v534 = vld [vmem:[#allocation10 + $0x1a8] sm:$0xff]
    %v535 = vld [vmem:[#allocation10 + $0x1b0] sm:$0xff]
    %v536 = vld [vmem:[#allocation10 + $0x1b8] sm:$0xff]
    %v537 = vld [vmem:[#allocation10 + $0x1c0] sm:$0xff]
    %v538 = vld [vmem:[#allocation10 + $0x1c8] sm:$0xff]
    %v539 = vld [vmem:[#allocation10 + $0x1d0] sm:$0xff]
    %v540 = vld [vmem:[#allocation10 + $0x1d8] sm:$0xff]
    %v541 = vld [vmem:[#allocation10 + $0x1e0] sm:$0xff]
    %v542 = vld [vmem:[#allocation10 + $0x1e8] sm:$0xff]
    %v543 = vld [vmem:[#allocation10 + $0x1f0] sm:$0xff]
    %v544 = vld [vmem:[#allocation10 + $0x1f8] sm:$0xff]
    %545 = vmatprep.subr.mxu0 %v542
    %546 = vmatpush1.msra.mxu0 %v541
    %547 = vmatprep.subr.mxu0 %v538
    %548 = vmatpush1.msra.mxu0 %v537
    %549 = vmatprep.subr.mxu0 %v534
    %550 = vmatpush1.msra.mxu0 %v533
    %551 = vmatprep.subr.mxu0 %v530
    %552 = vmatpush1.msra.mxu0 %v529
    %553 = vmatprep.subr.mxu0 %v526
    %554 = vmatpush1.msra.mxu0 %v525
    %555 = vmatprep.subr.mxu0 %v522
    %556 = vmatpush1.msra.mxu0 %v521
    %557 = vmatprep.subr.mxu0 %v518
    %558 = vmatpush1.msra.mxu0 %v517
    %559 = vmatprep.subr.mxu0 %v514
    %560 = vmatpush1.msra.mxu0 %v513
    %561 = vmatprep.subr.mxu0 %v510
    %562 = vmatpush1.msra.mxu0 %v509
    %563 = vmatprep.subr.mxu0 %v506
    %564 = vmatpush1.msra.mxu0 %v505
    %565 = vmatprep.subr.mxu0 %v502
    %566 = vmatpush1.msra.mxu0 %v501
    %567 = vmatprep.subr.mxu0 %v498
    %568 = vmatpush1.msra.mxu0 %v497
    %569 = vmatprep.subr.mxu0 %v494
    %570 = vmatpush1.msra.mxu0 %v493
    %571 = vmatprep.subr.mxu0 %v490
    %572 = vmatpush1.msra.mxu0 %v489
    %573 = vmatprep.subr.mxu0 %v486
    %574 = vmatpush1.msra.mxu0 %v485
    %575 = vmatprep.subr.mxu0 %v482
    %576 = vmatpush1.msra.mxu0 %v481
    %577 = vmatprep.subr.mxu0 0.0
    %578 = vmatpush2.msra.mxu0 0.0
    %579 = vmatprep.subr.mxu0 0.0
    %580 = vmatpush2.msra.mxu0 0.0
    %581 = vmatprep.subr.mxu0 0.0
    %582 = vmatpush2.msra.mxu0 0.0
    %583 = vmatprep.subr.mxu0 0.0
    %584 = vmatpush2.msra.mxu0 0.0
    %585 = vmatprep.subr.mxu0 0.0
    %586 = vmatpush2.msra.mxu0 0.0
    %587 = vmatprep.subr.mxu0 0.0
    %588 = vmatpush2.msra.mxu0 0.0
    %589 = vmatprep.subr.mxu0 0.0
    %590 = vmatpush2.msra.mxu0 0.0
    %591 = vmatprep.subr.mxu0 0.0
    %592 = vmatpush2.msra.mxu0 0.0
    %593 = vmatprep.subr.mxu0 0.0
    %594 = vmatpush2.msra.mxu0 0.0
    %595 = vmatprep.subr.mxu0 0.0
    %596 = vmatpush2.msra.mxu0 0.0
    %597 = vmatprep.subr.mxu0 0.0
    %598 = vmatpush2.msra.mxu0 0.0
    %599 = vmatprep.subr.mxu0 0.0
    %600 = vmatpush2.msra.mxu0 0.0
    %601 = vmatprep.subr.mxu0 0.0
    %602 = vmatpush2.msra.mxu0 0.0
    %603 = vmatprep.subr.mxu0 0.0
    %604 = vmatpush2.msra.mxu0 0.0
    %605 = vmatprep.subr.mxu0 0.0
    %606 = vmatpush2.msra.mxu0 0.0
    %607 = vmatprep.subr.mxu0 0.0
    %608 = vmatpush2.msra.mxu0 0.0
    %609 = vmatprep.mubr.f32.mxu0 0.0
    %610 = vmatmul.mubr.f32.gmra.mxu0 0.0
    %v611 = vpop.f32.mrf.mxu0
    %v612 = vadd.f32 0.0, %v611
    %v613 = vpop.f32.mrf.mxu0
    %v614 = vadd.f32 0.0, %v613
    %615 = vdwg.mxu0
    %616 = vmatprep.subr.mxu0 %v544
    %617 = vmatpush1.msra.mxu0 %v543
    %618 = vmatprep.subr.mxu0 %v540
    %619 = vmatpush1.msra.mxu0 %v539
    %620 = vmatprep.subr.mxu0 %v536
    %621 = vmatpush1.msra.mxu0 %v535
    %622 = vmatprep.subr.mxu0 %v532
    %623 = vmatpush1.msra.mxu0 %v531
    %624 = vmatprep.subr.mxu0 %v528
    %625 = vmatpush1.msra.mxu0 %v527
    %626 = vmatprep.subr.mxu0 %v524
    %627 = vmatpush1.msra.mxu0 %v523
    %628 = vmatprep.subr.mxu0 %v520
    %629 = vmatpush1.msra.mxu0 %v519
    %630 = vmatprep.subr.mxu0 %v516
    %631 = vmatpush1.msra.mxu0 %v515
    %632 = vmatprep.subr.mxu0 %v512
    %633 = vmatpush1.msra.mxu0 %v511
    %634 = vmatprep.subr.mxu0 %v508
    %635 = vmatpush1.msra.mxu0 %v507
    %636 = vmatprep.subr.mxu0 %v504
    %637 = vmatpush1.msra.mxu0 %v503
    %638 = vmatprep.subr.mxu0 %v500
    %639 = vmatpush1.msra.mxu0 %v499
    %640 = vmatprep.subr.mxu0 %v496
    %641 = vmatpush1.msra.mxu0 %v495
    %642 = vmatprep.subr.mxu0 %v492
    %643 = vmatpush1.msra.mxu0 %v491
    %644 = vmatprep.subr.mxu0 %v488
    %645 = vmatpush1.msra.mxu0 %v487
    %646 = vmatprep.subr.mxu0 %v484
    %647 = vmatpush1.msra.mxu0 %v483
    %648 = vmatprep.subr.mxu0 0.0
    %649 = vmatpush2.msra.mxu0 0.0
    %650 = vmatprep.subr.mxu0 0.0
    %651 = vmatpush2.msra.mxu0 0.0
    %652 = vmatprep.subr.mxu0 0.0
    %653 = vmatpush2.msra.mxu0 0.0
    %654 = vmatprep.subr.mxu0 0.0
    %655 = vmatpush2.msra.mxu0 0.0
    %656 = vmatprep.subr.mxu0 0.0
    %657 = vmatpush2.msra.mxu0 0.0
    %658 = vmatprep.subr.mxu0 0.0
    %659 = vmatpush2.msra.mxu0 0.0
    %660 = vmatprep.subr.mxu0 0.0
    %661 = vmatpush2.msra.mxu0 0.0
    %662 = vmatprep.subr.mxu0 0.0
    %663 = vmatpush2.msra.mxu0 0.0
    %664 = vmatprep.subr.mxu0 0.0
    %665 = vmatpush2.msra.mxu0 0.0
    %666 = vmatprep.subr.mxu0 0.0
    %667 = vmatpush2.msra.mxu0 0.0
    %668 = vmatprep.subr.mxu0 0.0
    %669 = vmatpush2.msra.mxu0 0.0
    %670 = vmatprep.subr.mxu0 0.0
    %671 = vmatpush2.msra.mxu0 0.0
    %672 = vmatprep.subr.mxu0 0.0
    %673 = vmatpush2.msra.mxu0 0.0
    %674 = vmatprep.subr.mxu0 0.0
    %675 = vmatpush2.msra.mxu0 0.0
    %676 = vmatprep.subr.mxu0 0.0
    %677 = vmatpush2.msra.mxu0 0.0
    %678 = vmatprep.subr.mxu0 0.0
    %679 = vmatpush2.msra.mxu0 0.0
    %680 = vmatprep.mubr.f32.mxu0 0.0
    %681 = vmatmul.mubr.f32.gmra.mxu0 0.0
    %v682 = vpop.f32.mrf.mxu0
    %v683 = vadd.f32 0.0, %v682
    %v684 = vpop.f32.mrf.mxu0
    %v685 = vadd.f32 0.0, %v684
    %686 = vdwg.mxu0
    %v687 = vadd.f32 %v477, %v612
    %v688 = vadd.f32 %v478, %v614
    %v689 = vadd.f32 %v479, %v683
    %v690 = vadd.f32 %v480, %v685
    %v691 = vxor.u32 %v687, 2147483648
    %v692 = vmul.f32 %v691, 1.442695
    %v693 = vpow.pop %v692
    %v694 = vadd.f32 %v693, 1.0
    %v695 = vrcp.pop %v694
    %v696 = vmul.f32 1.0, %v695
    %v697 = vxor.u32 %v688, 2147483648
    %v698 = vmul.f32 %v697, 1.442695
    %v699 = vpow.pop %v698
    %v700 = vadd.f32 %v699, 1.0
    %v701 = vrcp.pop %v700
    %v702 = vmul.f32 1.0, %v701
    %v703 = vtanh.pop %v689
    %v704 = vxor.u32 %v690, 2147483648
    %v705 = vmul.f32 %v704, 1.442695
    %v706 = vpow.pop %v705
    %v707 = vadd.f32 %v706, 1.0
    %v708 = vrcp.pop %v707
    %v709 = vmul.f32 1.0, %v708
    %v710 = vmul.f32 %v702, 0.0
    %v711 = vmul.f32 %v696, %v703
    %v712 = vadd.f32 %v710, %v711
    %v713 = vtanh.pop %v712
    %v714 = vmul.f32 %v709, %v713
    %s715 = smul.u32 1, 4
    %s716 = smul.addr %s715, 8
    %s717 = scalar_lea.vmem [#allocation2], %s716
    %v718 = vld [vmem:[%s717] sm:$0xff]
    %v719 = vld [vmem:[%s717 + $0x8] sm:$0xff]
    %v720 = vld [vmem:[%s717 + $0x10] sm:$0xff]
    %v721 = vld [vmem:[%s717 + $0x18] sm:$0xff]
    %722 = vmatprep.subr.mxu0 %v542
    %723 = vmatpush1.msra.mxu0 %v541
    %724 = vmatprep.subr.mxu0 %v538
    %725 = vmatpush1.msra.mxu0 %v537
    %726 = vmatprep.subr.mxu0 %v534
    %727 = vmatpush1.msra.mxu0 %v533
    %728 = vmatprep.subr.mxu0 %v530
    %729 = vmatpush1.msra.mxu0 %v529
    %730 = vmatprep.subr.mxu0 %v526
    %731 = vmatpush1.msra.mxu0 %v525
    %732 = vmatprep.subr.mxu0 %v522
    %733 = vmatpush1.msra.mxu0 %v521
    %734 = vmatprep.subr.mxu0 %v518
    %735 = vmatpush1.msra.mxu0 %v517
    %736 = vmatprep.subr.mxu0 %v514
    %737 = vmatpush1.msra.mxu0 %v513
    %738 = vmatprep.subr.mxu0 %v510
    %739 = vmatpush1.msra.mxu0 %v509
    %740 = vmatprep.subr.mxu0 %v506
    %741 = vmatpush1.msra.mxu0 %v505
    %742 = vmatprep.subr.mxu0 %v502
    %743 = vmatpush1.msra.mxu0 %v501
    %744 = vmatprep.subr.mxu0 %v498
    %745 = vmatpush1.msra.mxu0 %v497
    %746 = vmatprep.subr.mxu0 %v494
    %747 = vmatpush1.msra.mxu0 %v493
    %748 = vmatprep.subr.mxu0 %v490
    %749 = vmatpush1.msra.mxu0 %v489
    %750 = vmatprep.subr.mxu0 %v486
    %751 = vmatpush1.msra.mxu0 %v485
    %752 = vmatprep.subr.mxu0 %v482
    %753 = vmatpush1.msra.mxu0 %v481
    %754 = vmatprep.subr.mxu0 0.0
    %755 = vmatpush2.msra.mxu0 0.0
    %756 = vmatprep.subr.mxu0 0.0
    %757 = vmatpush2.msra.mxu0 0.0
    %758 = vmatprep.subr.mxu0 0.0
    %759 = vmatpush2.msra.mxu0 0.0
    %760 = vmatprep.subr.mxu0 0.0
    %761 = vmatpush2.msra.mxu0 0.0
    %762 = vmatprep.subr.mxu0 0.0
    %763 = vmatpush2.msra.mxu0 0.0
    %764 = vmatprep.subr.mxu0 0.0
    %765 = vmatpush2.msra.mxu0 0.0
    %766 = vmatprep.subr.mxu0 0.0
    %767 = vmatpush2.msra.mxu0 0.0
    %768 = vmatprep.subr.mxu0 0.0
    %769 = vmatpush2.msra.mxu0 0.0
    %770 = vmatprep.subr.mxu0 0.0
    %771 = vmatpush2.msra.mxu0 0.0
    %772 = vmatprep.subr.mxu0 0.0
    %773 = vmatpush2.msra.mxu0 0.0
    %774 = vmatprep.subr.mxu0 0.0
    %775 = vmatpush2.msra.mxu0 0.0
    %776 = vmatprep.subr.mxu0 0.0
    %777 = vmatpush2.msra.mxu0 0.0
    %778 = vmatprep.subr.mxu0 0.0
    %779 = vmatpush2.msra.mxu0 0.0
    %780 = vmatprep.subr.mxu0 0.0
    %781 = vmatpush2.msra.mxu0 0.0
    %782 = vmatprep.subr.mxu0 0.0
    %783 = vmatpush2.msra.mxu0 0.0
    %784 = vmatprep.subr.mxu0 0.0
    %785 = vmatpush2.msra.mxu0 0.0
    %786 = vmatprep.mubr.f32.mxu0 0.0
    %787 = vmatmul.mubr.f32.gmra.mxu0 %v714
    %v788 = vpop.f32.mrf.mxu0
    %v789 = vadd.f32 0.0, %v788
    %v790 = vpop.f32.mrf.mxu0
    %v791 = vadd.f32 0.0, %v790
    %792 = vdwg.mxu0
    %793 = vmatprep.subr.mxu0 %v544
    %794 = vmatpush1.msra.mxu0 %v543
    %795 = vmatprep.subr.mxu0 %v540
    %796 = vmatpush1.msra.mxu0 %v539
    %797 = vmatprep.subr.mxu0 %v536
    %798 = vmatpush1.msra.mxu0 %v535
    %799 = vmatprep.subr.mxu0 %v532
    %800 = vmatpush1.msra.mxu0 %v531
    %801 = vmatprep.subr.mxu0 %v528
    %802 = vmatpush1.msra.mxu0 %v527
    %803 = vmatprep.subr.mxu0 %v524
    %804 = vmatpush1.msra.mxu0 %v523
    %805 = vmatprep.subr.mxu0 %v520
    %806 = vmatpush1.msra.mxu0 %v519
    %807 = vmatprep.subr.mxu0 %v516
    %808 = vmatpush1.msra.mxu0 %v515
    %809 = vmatprep.subr.mxu0 %v512
    %810 = vmatpush1.msra.mxu0 %v511
    %811 = vmatprep.subr.mxu0 %v508
    %812 = vmatpush1.msra.mxu0 %v507
    %813 = vmatprep.subr.mxu0 %v504
    %814 = vmatpush1.msra.mxu0 %v503
    %815 = vmatprep.subr.mxu0 %v500
    %816 = vmatpush1.msra.mxu0 %v499
    %817 = vmatprep.subr.mxu0 %v496
    %818 = vmatpush1.msra.mxu0 %v495
    %819 = vmatprep.subr.mxu0 %v492
    %820 = vmatpush1.msra.mxu0 %v491
    %821 = vmatprep.subr.mxu0 %v488
    %822 = vmatpush1.msra.mxu0 %v487
    %823 = vmatprep.subr.mxu0 %v484
    %824 = vmatpush1.msra.mxu0 %v483
    %825 = vmatprep.subr.mxu0 0.0
    %826 = vmatpush2.msra.mxu0 0.0
    %827 = vmatprep.subr.mxu0 0.0
    %828 = vmatpush2.msra.mxu0 0.0
    %829 = vmatprep.subr.mxu0 0.0
    %830 = vmatpush2.msra.mxu0 0.0
    %831 = vmatprep.subr.mxu0 0.0
    %832 = vmatpush2.msra.mxu0 0.0
    %833 = vmatprep.subr.mxu0 0.0
    %834 = vmatpush2.msra.mxu0 0.0
    %835 = vmatprep.subr.mxu0 0.0
    %836 = vmatpush2.msra.mxu0 0.0
    %837 = vmatprep.subr.mxu0 0.0
    %838 = vmatpush2.msra.mxu0 0.0
    %839 = vmatprep.subr.mxu0 0.0
    %840 = vmatpush2.msra.mxu0 0.0
    %841 = vmatprep.subr.mxu0 0.0
    %842 = vmatpush2.msra.mxu0 0.0
    %843 = vmatprep.subr.mxu0 0.0
    %844 = vmatpush2.msra.mxu0 0.0
    %845 = vmatprep.subr.mxu0 0.0
    %846 = vmatpush2.msra.mxu0 0.0
    %847 = vmatprep.subr.mxu0 0.0
    %848 = vmatpush2.msra.mxu0 0.0
    %849 = vmatprep.subr.mxu0 0.0
    %850 = vmatpush2.msra.mxu0 0.0
    %851 = vmatprep.subr.mxu0 0.0
    %852 = vmatpush2.msra.mxu0 0.0
    %853 = vmatprep.subr.mxu0 0.0
    %854 = vmatpush2.msra.mxu0 0.0
    %855 = vmatprep.subr.mxu0 0.0
    %856 = vmatpush2.msra.mxu0 0.0
    %857 = vmatprep.mubr.f32.mxu0 0.0
    %858 = vmatmul.mubr.f32.gmra.mxu0 %v714
    %v859 = vpop.f32.mrf.mxu0
    %v860 = vadd.f32 0.0, %v859
    %v861 = vpop.f32.mrf.mxu0
    %v862 = vadd.f32 0.0, %v861
    %863 = vdwg.mxu0
    %v864 = vadd.f32 %v718, %v789
    %v865 = vadd.f32 %v719, %v791
    %v866 = vadd.f32 %v720, %v860
    %v867 = vadd.f32 %v721, %v862
    %v868 = vxor.u32 %v864, 2147483648
    %v869 = vmul.f32 %v868, 1.442695
    %v870 = vpow.pop %v869
    %v871 = vadd.f32 %v870, 1.0
    %v872 = vrcp.pop %v871
    %v873 = vmul.f32 1.0, %v872
    %v874 = vxor.u32 %v865, 2147483648
    %v875 = vmul.f32 %v874, 1.442695
    %v876 = vpow.pop %v875
    %v877 = vadd.f32 %v876, 1.0
    %v878 = vrcp.pop %v877
    %v879 = vmul.f32 1.0, %v878
    %v880 = vtanh.pop %v866
    %v881 = vxor.u32 %v867, 2147483648
    %v882 = vmul.f32 %v881, 1.442695
    %v883 = vpow.pop %v882
    %v884 = vadd.f32 %v883, 1.0
    %v885 = vrcp.pop %v884
    %v886 = vmul.f32 1.0, %v885
    %v887 = vmul.f32 %v879, %v712
    %v888 = vmul.f32 %v873, %v880
    %v889 = vadd.f32 %v887, %v888
    %v890 = vtanh.pop %v889
    %v891 = vmul.f32 %v886, %v890
    %s892 = smul.u32 2, 4
    %s893 = smul.addr %s892, 8
    %s894 = scalar_lea.vmem [#allocation2], %s893
    %v895 = vld [vmem:[%s894] sm:$0xff]
    %v896 = vld [vmem:[%s894 + $0x8] sm:$0xff]
    %v897 = vld [vmem:[%s894 + $0x10] sm:$0xff]
    %v898 = vld [vmem:[%s894 + $0x18] sm:$0xff]
    %899 = vmatprep.subr.mxu0 %v542
    %900 = vmatpush1.msra.mxu0 %v541
    %901 = vmatprep.subr.mxu0 %v538
    %902 = vmatpush1.msra.mxu0 %v537
    %903 = vmatprep.subr.mxu0 %v534
    %904 = vmatpush1.msra.mxu0 %v533
    %905 = vmatprep.subr.mxu0 %v530
    %906 = vmatpush1.msra.mxu0 %v529
    %907 = vmatprep.subr.mxu0 %v526
    %908 = vmatpush1.msra.mxu0 %v525
    %909 = vmatprep.subr.mxu0 %v522
    %910 = vmatpush1.msra.mxu0 %v521
    %911 = vmatprep.subr.mxu0 %v518
    %912 = vmatpush1.msra.mxu0 %v517
    %913 = vmatprep.subr.mxu0 %v514
    %914 = vmatpush1.msra.mxu0 %v513
    %915 = vmatprep.subr.mxu0 %v510
    %916 = vmatpush1.msra.mxu0 %v509
    %917 = vmatprep.subr.mxu0 %v506
    %918 = vmatpush1.msra.mxu0 %v505
    %919 = vmatprep.subr.mxu0 %v502
    %920 = vmatpush1.msra.mxu0 %v501
    %921 = vmatprep.subr.mxu0 %v498
    %922 = vmatpush1.msra.mxu0 %v497
    %923 = vmatprep.subr.mxu0 %v494
    %924 = vmatpush1.msra.mxu0 %v493
    %925 = vmatprep.subr.mxu0 %v490
    %926 = vmatpush1.msra.mxu0 %v489
    %927 = vmatprep.subr.mxu0 %v486
    %928 = vmatpush1.msra.mxu0 %v485
    %929 = vmatprep.subr.mxu0 %v482
    %930 = vmatpush1.msra.mxu0 %v481
    %931 = vmatprep.subr.mxu0 0.0
    %932 = vmatpush2.msra.mxu0 0.0
    %933 = vmatprep.subr.mxu0 0.0
    %934 = vmatpush2.msra.mxu0 0.0
    %935 = vmatprep.subr.mxu0 0.0
    %936 = vmatpush2.msra.mxu0 0.0
    %937 = vmatprep.subr.mxu0 0.0
    %938 = vmatpush2.msra.mxu0 0.0
    %939 = vmatprep.subr.mxu0 0.0
    %940 = vmatpush2.msra.mxu0 0.0
    %941 = vmatprep.subr.mxu0 0.0
    %942 = vmatpush2.msra.mxu0 0.0
    %943 = vmatprep.subr.mxu0 0.0
    %944 = vmatpush2.msra.mxu0 0.0
    %945 = vmatprep.subr.mxu0 0.0
    %946 = vmatpush2.msra.mxu0 0.0
    %947 = vmatprep.subr.mxu0 0.0
    %948 = vmatpush2.msra.mxu0 0.0
    %949 = vmatprep.subr.mxu0 0.0
    %950 = vmatpush2.msra.mxu0 0.0
    %951 = vmatprep.subr.mxu0 0.0
    %952 = vmatpush2.msra.mxu0 0.0
    %953 = vmatprep.subr.mxu0 0.0
    %954 = vmatpush2.msra.mxu0 0.0
    %955 = vmatprep.subr.mxu0 0.0
    %956 = vmatpush2.msra.mxu0 0.0
    %957 = vmatprep.subr.mxu0 0.0
    %958 = vmatpush2.msra.mxu0 0.0
    %959 = vmatprep.subr.mxu0 0.0
    %960 = vmatpush2.msra.mxu0 0.0
    %961 = vmatprep.subr.mxu0 0.0
    %962 = vmatpush2.msra.mxu0 0.0
    %963 = vmatprep.mubr.f32.mxu0 0.0
    %964 = vmatmul.mubr.f32.gmra.mxu0 %v891
    %v965 = vpop.f32.mrf.mxu0
    %v966 = vadd.f32 0.0, %v965
    %v967 = vpop.f32.mrf.mxu0
    %v968 = vadd.f32 0.0, %v967
    %969 = vdwg.mxu0
    %970 = vmatprep.subr.mxu0 %v544
    %971 = vmatpush1.msra.mxu0 %v543
    %972 = vmatprep.subr.mxu0 %v540
    %973 = vmatpush1.msra.mxu0 %v539
    %974 = vmatprep.subr.mxu0 %v536
    %975 = vmatpush1.msra.mxu0 %v535
    %976 = vmatprep.subr.mxu0 %v532
    %977 = vmatpush1.msra.mxu0 %v531
    %978 = vmatprep.subr.mxu0 %v528
    %979 = vmatpush1.msra.mxu0 %v527
    %980 = vmatprep.subr.mxu0 %v524
    %981 = vmatpush1.msra.mxu0 %v523
    %982 = vmatprep.subr.mxu0 %v520
    %983 = vmatpush1.msra.mxu0 %v519
    %984 = vmatprep.subr.mxu0 %v516
    %985 = vmatpush1.msra.mxu0 %v515
    %986 = vmatprep.subr.mxu0 %v512
    %987 = vmatpush1.msra.mxu0 %v511
    %988 = vmatprep.subr.mxu0 %v508
    %989 = vmatpush1.msra.mxu0 %v507
    %990 = vmatprep.subr.mxu0 %v504
    %991 = vmatpush1.msra.mxu0 %v503
    %992 = vmatprep.subr.mxu0 %v500
    %993 = vmatpush1.msra.mxu0 %v499
    %994 = vmatprep.subr.mxu0 %v496
    %995 = vmatpush1.msra.mxu0 %v495
    %996 = vmatprep.subr.mxu0 %v492
    %997 = vmatpush1.msra.mxu0 %v491
    %998 = vmatprep.subr.mxu0 %v488
    %999 = vmatpush1.msra.mxu0 %v487
    %1000 = vmatprep.subr.mxu0 %v484
    %1001 = vmatpush1.msra.mxu0 %v483
    %1002 = vmatprep.subr.mxu0 0.0
    %1003 = vmatpush2.msra.mxu0 0.0
    %1004 = vmatprep.subr.mxu0 0.0
    %1005 = vmatpush2.msra.mxu0 0.0
    %1006 = vmatprep.subr.mxu0 0.0
    %1007 = vmatpush2.msra.mxu0 0.0
    %1008 = vmatprep.subr.mxu0 0.0
    %1009 = vmatpush2.msra.mxu0 0.0
    %1010 = vmatprep.subr.mxu0 0.0
    %1011 = vmatpush2.msra.mxu0 0.0
    %1012 = vmatprep.subr.mxu0 0.0
    %1013 = vmatpush2.msra.mxu0 0.0
    %1014 = vmatprep.subr.mxu0 0.0
    %1015 = vmatpush2.msra.mxu0 0.0
    %1016 = vmatprep.subr.mxu0 0.0
    %1017 = vmatpush2.msra.mxu0 0.0
    %1018 = vmatprep.subr.mxu0 0.0
    %1019 = vmatpush2.msra.mxu0 0.0
    %1020 = vmatprep.subr.mxu0 0.0
    %1021 = vmatpush2.msra.mxu0 0.0
    %1022 = vmatprep.subr.mxu0 0.0
    %1023 = vmatpush2.msra.mxu0 0.0
    %1024 = vmatprep.subr.mxu0 0.0
    %1025 = vmatpush2.msra.mxu0 0.0
    %1026 = vmatprep.subr.mxu0 0.0
    %1027 = vmatpush2.msra.mxu0 0.0
    %1028 = vmatprep.subr.mxu0 0.0
    %1029 = vmatpush2.msra.mxu0 0.0
    %1030 = vmatprep.subr.mxu0 0.0
    %1031 = vmatpush2.msra.mxu0 0.0
    %1032 = vmatprep.subr.mxu0 0.0
    %1033 = vmatpush2.msra.mxu0 0.0
    %1034 = vmatprep.mubr.f32.mxu0 0.0
    %1035 = vmatmul.mubr.f32.gmra.mxu0 %v891
    %v1036 = vpop.f32.mrf.mxu0
    %v1037 = vadd.f32 0.0, %v1036
    %v1038 = vpop.f32.mrf.mxu0
    %v1039 = vadd.f32 0.0, %v1038
    %1040 = vdwg.mxu0
    %v1041 = vadd.f32 %v895, %v966
    %v1042 = vadd.f32 %v896, %v968
    %v1043 = vadd.f32 %v897, %v1037
    %v1044 = vadd.f32 %v898, %v1039
    %v1045 = vxor.u32 %v1041, 2147483648
    %v1046 = vmul.f32 %v1045, 1.442695
    %v1047 = vpow.pop %v1046
    %v1048 = vadd.f32 %v1047, 1.0
    %v1049 = vrcp.pop %v1048
    %v1050 = vmul.f32 1.0, %v1049
    %v1051 = vxor.u32 %v1042, 2147483648
    %v1052 = vmul.f32 %v1051, 1.442695
    %v1053 = vpow.pop %v1052
    %v1054 = vadd.f32 %v1053, 1.0
    %v1055 = vrcp.pop %v1054
    %v1056 = vmul.f32 1.0, %v1055
    %v1057 = vtanh.pop %v1043
    %v1058 = vxor.u32 %v1044, 2147483648
    %v1059 = vmul.f32 %v1058, 1.442695
    %v1060 = vpow.pop %v1059
    %v1061 = vadd.f32 %v1060, 1.0
    %v1062 = vrcp.pop %v1061
    %v1063 = vmul.f32 1.0, %v1062
    %v1064 = vmul.f32 %v1056, %v889
    %v1065 = vmul.f32 %v1050, %v1057
    %v1066 = vadd.f32 %v1064, %v1065
    %v1067 = vtanh.pop %v1066
    %v1068 = vmul.f32 %v1063, %v1067
    %s1069 = smul.u32 3, 4
    %s1070 = smul.addr %s1069, 8
    %s1071 = scalar_lea.vmem [#allocation2], %s1070
    %v1072 = vld [vmem:[%s1071] sm:$0xff]
    %v1073 = vld [vmem:[%s1071 + $0x8] sm:$0xff]
    %v1074 = vld [vmem:[%s1071 + $0x10] sm:$0xff]
    %v1075 = vld [vmem:[%s1071 + $0x18] sm:$0xff]
    %1076 = vmatprep.subr.mxu0 %v542
    %1077 = vmatpush1.msra.mxu0 %v541
    %1078 = vmatprep.subr.mxu0 %v538
    %1079 = vmatpush1.msra.mxu0 %v537
    %1080 = vmatprep.subr.mxu0 %v534
    %1081 = vmatpush1.msra.mxu0 %v533
    %1082 = vmatprep.subr.mxu0 %v530
    %1083 = vmatpush1.msra.mxu0 %v529
    %1084 = vmatprep.subr.mxu0 %v526
    %1085 = vmatpush1.msra.mxu0 %v525
    %1086 = vmatprep.subr.mxu0 %v522
    %1087 = vmatpush1.msra.mxu0 %v521
    %1088 = vmatprep.subr.mxu0 %v518
    %1089 = vmatpush1.msra.mxu0 %v517
    %1090 = vmatprep.subr.mxu0 %v514
    %1091 = vmatpush1.msra.mxu0 %v513
    %1092 = vmatprep.subr.mxu0 %v510
    %1093 = vmatpush1.msra.mxu0 %v509
    %1094 = vmatprep.subr.mxu0 %v506
    %1095 = vmatpush1.msra.mxu0 %v505
    %1096 = vmatprep.subr.mxu0 %v502
    %1097 = vmatpush1.msra.mxu0 %v501
    %1098 = vmatprep.subr.mxu0 %v498
    %1099 = vmatpush1.msra.mxu0 %v497
    %1100 = vmatprep.subr.mxu0 %v494
    %1101 = vmatpush1.msra.mxu0 %v493
    %1102 = vmatprep.subr.mxu0 %v490
    %1103 = vmatpush1.msra.mxu0 %v489
    %1104 = vmatprep.subr.mxu0 %v486
    %1105 = vmatpush1.msra.mxu0 %v485
    %1106 = vmatprep.subr.mxu0 %v482
    %1107 = vmatpush1.msra.mxu0 %v481
    %1108 = vmatprep.subr.mxu0 0.0
    %1109 = vmatpush2.msra.mxu0 0.0
    %1110 = vmatprep.subr.mxu0 0.0
    %1111 = vmatpush2.msra.mxu0 0.0
    %1112 = vmatprep.subr.mxu0 0.0
    %1113 = vmatpush2.msra.mxu0 0.0
    %1114 = vmatprep.subr.mxu0 0.0
    %1115 = vmatpush2.msra.mxu0 0.0
    %1116 = vmatprep.subr.mxu0 0.0
    %1117 = vmatpush2.msra.mxu0 0.0
    %1118 = vmatprep.subr.mxu0 0.0
    %1119 = vmatpush2.msra.mxu0 0.0
    %1120 = vmatprep.subr.mxu0 0.0
    %1121 = vmatpush2.msra.mxu0 0.0
    %1122 = vmatprep.subr.mxu0 0.0
    %1123 = vmatpush2.msra.mxu0 0.0
    %1124 = vmatprep.subr.mxu0 0.0
    %1125 = vmatpush2.msra.mxu0 0.0
    %1126 = vmatprep.subr.mxu0 0.0
    %1127 = vmatpush2.msra.mxu0 0.0
    %1128 = vmatprep.subr.mxu0 0.0
    %1129 = vmatpush2.msra.mxu0 0.0
    %1130 = vmatprep.subr.mxu0 0.0
    %1131 = vmatpush2.msra.mxu0 0.0
    %1132 = vmatprep.subr.mxu0 0.0
    %1133 = vmatpush2.msra.mxu0 0.0
    %1134 = vmatprep.subr.mxu0 0.0
    %1135 = vmatpush2.msra.mxu0 0.0
    %1136 = vmatprep.subr.mxu0 0.0
    %1137 = vmatpush2.msra.mxu0 0.0
    %1138 = vmatprep.subr.mxu0 0.0
    %1139 = vmatpush2.msra.mxu0 0.0
    %1140 = vmatprep.mubr.f32.mxu0 0.0
    %1141 = vmatmul.mubr.f32.gmra.mxu0 %v1068
    %v1142 = vpop.f32.mrf.mxu0
    %v1143 = vadd.f32 0.0, %v1142
    %v1144 = vpop.f32.mrf.mxu0
    %v1145 = vadd.f32 0.0, %v1144
    %1146 = vdwg.mxu0
    %1147 = vmatprep.subr.mxu0 %v544
    %1148 = vmatpush1.msra.mxu0 %v543
    %1149 = vmatprep.subr.mxu0 %v540
    %1150 = vmatpush1.msra.mxu0 %v539
    %1151 = vmatprep.subr.mxu0 %v536
    %1152 = vmatpush1.msra.mxu0 %v535
    %1153 = vmatprep.subr.mxu0 %v532
    %1154 = vmatpush1.msra.mxu0 %v531
    %1155 = vmatprep.subr.mxu0 %v528
    %1156 = vmatpush1.msra.mxu0 %v527
    %1157 = vmatprep.subr.mxu0 %v524
    %1158 = vmatpush1.msra.mxu0 %v523
    %1159 = vmatprep.subr.mxu0 %v520
    %1160 = vmatpush1.msra.mxu0 %v519
    %1161 = vmatprep.subr.mxu0 %v516
    %1162 = vmatpush1.msra.mxu0 %v515
    %1163 = vmatprep.subr.mxu0 %v512
    %1164 = vmatpush1.msra.mxu0 %v511
    %1165 = vmatprep.subr.mxu0 %v508
    %1166 = vmatpush1.msra.mxu0 %v507
    %1167 = vmatprep.subr.mxu0 %v504
    %1168 = vmatpush1.msra.mxu0 %v503
    %1169 = vmatprep.subr.mxu0 %v500
    %1170 = vmatpush1.msra.mxu0 %v499
    %1171 = vmatprep.subr.mxu0 %v496
    %1172 = vmatpush1.msra.mxu0 %v495
    %1173 = vmatprep.subr.mxu0 %v492
    %1174 = vmatpush1.msra.mxu0 %v491
    %1175 = vmatprep.subr.mxu0 %v488
    %1176 = vmatpush1.msra.mxu0 %v487
    %1177 = vmatprep.subr.mxu0 %v484
    %1178 = vmatpush1.msra.mxu0 %v483
    %1179 = vmatprep.subr.mxu0 0.0
    %1180 = vmatpush2.msra.mxu0 0.0
    %1181 = vmatprep.subr.mxu0 0.0
    %1182 = vmatpush2.msra.mxu0 0.0
    %1183 = vmatprep.subr.mxu0 0.0
    %1184 = vmatpush2.msra.mxu0 0.0
    %1185 = vmatprep.subr.mxu0 0.0
    %1186 = vmatpush2.msra.mxu0 0.0
    %1187 = vmatprep.subr.mxu0 0.0
    %1188 = vmatpush2.msra.mxu0 0.0
    %1189 = vmatprep.subr.mxu0 0.0
    %1190 = vmatpush2.msra.mxu0 0.0
    %1191 = vmatprep.subr.mxu0 0.0
    %1192 = vmatpush2.msra.mxu0 0.0
    %1193 = vmatprep.subr.mxu0 0.0
    %1194 = vmatpush2.msra.mxu0 0.0
    %1195 = vmatprep.subr.mxu0 0.0
    %1196 = vmatpush2.msra.mxu0 0.0
    %1197 = vmatprep.subr.mxu0 0.0
    %1198 = vmatpush2.msra.mxu0 0.0
    %1199 = vmatprep.subr.mxu0 0.0
    %1200 = vmatpush2.msra.mxu0 0.0
    %1201 = vmatprep.subr.mxu0 0.0
    %1202 = vmatpush2.msra.mxu0 0.0
    %1203 = vmatprep.subr.mxu0 0.0
    %1204 = vmatpush2.msra.mxu0 0.0
    %1205 = vmatprep.subr.mxu0 0.0
    %1206 = vmatpush2.msra.mxu0 0.0
    %1207 = vmatprep.subr.mxu0 0.0
    %1208 = vmatpush2.msra.mxu0 0.0
    %1209 = vmatprep.subr.mxu0 0.0
    %1210 = vmatpush2.msra.mxu0 0.0
    %1211 = vmatprep.mubr.f32.mxu0 0.0
    %1212 = vmatmul.mubr.f32.gmra.mxu0 %v1068
    %v1213 = vpop.f32.mrf.mxu0
    %v1214 = vadd.f32 0.0, %v1213
    %v1215 = vpop.f32.mrf.mxu0
    %v1216 = vadd.f32 0.0, %v1215
    %1217 = vdwg.mxu0
    %v1218 = vadd.f32 %v1072, %v1143
    %v1219 = vadd.f32 %v1073, %v1145
    %v1220 = vadd.f32 %v1074, %v1214
    %v1221 = vadd.f32 %v1075, %v1216
    %v1222 = vxor.u32 %v1218, 2147483648
    %v1223 = vmul.f32 %v1222, 1.442695
    %v1224 = vpow.pop %v1223
    %v1225 = vadd.f32 %v1224, 1.0
    %v1226 = vrcp.pop %v1225
    %v1227 = vmul.f32 1.0, %v1226
    %v1228 = vxor.u32 %v1219, 2147483648
    %v1229 = vmul.f32 %v1228, 1.442695
    %v1230 = vpow.pop %v1229
    %v1231 = vadd.f32 %v1230, 1.0
    %v1232 = vrcp.pop %v1231
    %v1233 = vmul.f32 1.0, %v1232
    %v1234 = vtanh.pop %v1220
    %v1235 = vxor.u32 %v1221, 2147483648
    %v1236 = vmul.f32 %v1235, 1.442695
    %v1237 = vpow.pop %v1236
    %v1238 = vadd.f32 %v1237, 1.0
    %v1239 = vrcp.pop %v1238
    %v1240 = vmul.f32 1.0, %v1239
    %v1241 = vmul.f32 %v1233, %v1066
    %v1242 = vmul.f32 %v1227, %v1234
    %v1243 = vadd.f32 %v1241, %v1242
    %v1244 = vtanh.pop %v1243
    %v1245 = vmul.f32 %v1240, %v1244
    %s1246 = smul.u32 4, 4
    %s1247 = smul.addr %s1246, 8
    %s1248 = scalar_lea.vmem [#allocation2], %s1247
    %v1249 = vld [vmem:[%s1248] sm:$0xff]
    %v1250 = vld [vmem:[%s1248 + $0x8] sm:$0xff]
    %v1251 = vld [vmem:[%s1248 + $0x10] sm:$0xff]
    %v1252 = vld [vmem:[%s1248 + $0x18] sm:$0xff]
    %1253 = vmatprep.subr.mxu0 %v542
    %1254 = vmatpush1.msra.mxu0 %v541
    %1255 = vmatprep.subr.mxu0 %v538
    %1256 = vmatpush1.msra.mxu0 %v537
    %1257 = vmatprep.subr.mxu0 %v534
    %1258 = vmatpush1.msra.mxu0 %v533
    %1259 = vmatprep.subr.mxu0 %v530
    %1260 = vmatpush1.msra.mxu0 %v529
    %1261 = vmatprep.subr.mxu0 %v526
    %1262 = vmatpush1.msra.mxu0 %v525
    %1263 = vmatprep.subr.mxu0 %v522
    %1264 = vmatpush1.msra.mxu0 %v521
    %1265 = vmatprep.subr.mxu0 %v518
    %1266 = vmatpush1.msra.mxu0 %v517
    %1267 = vmatprep.subr.mxu0 %v514
    %1268 = vmatpush1.msra.mxu0 %v513
    %1269 = vmatprep.subr.mxu0 %v510
    %1270 = vmatpush1.msra.mxu0 %v509
    %1271 = vmatprep.subr.mxu0 %v506
    %1272 = vmatpush1.msra.mxu0 %v505
    %1273 = vmatprep.subr.mxu0 %v502
    %1274 = vmatpush1.msra.mxu0 %v501
    %1275 = vmatprep.subr.mxu0 %v498
    %1276 = vmatpush1.msra.mxu0 %v497
    %1277 = vmatprep.subr.mxu0 %v494
    %1278 = vmatpush1.msra.mxu0 %v493
    %1279 = vmatprep.subr.mxu0 %v490
    %1280 = vmatpush1.msra.mxu0 %v489
    %1281 = vmatprep.subr.mxu0 %v486
    %1282 = vmatpush1.msra.mxu0 %v485
    %1283 = vmatprep.subr.mxu0 %v482
    %1284 = vmatpush1.msra.mxu0 %v481
    %1285 = vmatprep.subr.mxu0 0.0
    %1286 = vmatpush2.msra.mxu0 0.0
    %1287 = vmatprep.subr.mxu0 0.0
    %1288 = vmatpush2.msra.mxu0 0.0
    %1289 = vmatprep.subr.mxu0 0.0
    %1290 = vmatpush2.msra.mxu0 0.0
    %1291 = vmatprep.subr.mxu0 0.0
    %1292 = vmatpush2.msra.mxu0 0.0
    %1293 = vmatprep.subr.mxu0 0.0
    %1294 = vmatpush2.msra.mxu0 0.0
    %1295 = vmatprep.subr.mxu0 0.0
    %1296 = vmatpush2.msra.mxu0 0.0
    %1297 = vmatprep.subr.mxu0 0.0
    %1298 = vmatpush2.msra.mxu0 0.0
    %1299 = vmatprep.subr.mxu0 0.0
    %1300 = vmatpush2.msra.mxu0 0.0
    %1301 = vmatprep.subr.mxu0 0.0
    %1302 = vmatpush2.msra.mxu0 0.0
    %1303 = vmatprep.subr.mxu0 0.0
    %1304 = vmatpush2.msra.mxu0 0.0
    %1305 = vmatprep.subr.mxu0 0.0
    %1306 = vmatpush2.msra.mxu0 0.0
    %1307 = vmatprep.subr.mxu0 0.0
    %1308 = vmatpush2.msra.mxu0 0.0
    %1309 = vmatprep.subr.mxu0 0.0
    %1310 = vmatpush2.msra.mxu0 0.0
    %1311 = vmatprep.subr.mxu0 0.0
    %1312 = vmatpush2.msra.mxu0 0.0
    %1313 = vmatprep.subr.mxu0 0.0
    %1314 = vmatpush2.msra.mxu0 0.0
    %1315 = vmatprep.subr.mxu0 0.0
    %1316 = vmatpush2.msra.mxu0 0.0
    %1317 = vmatprep.mubr.f32.mxu0 0.0
    %1318 = vmatmul.mubr.f32.gmra.mxu0 %v1245
    %v1319 = vpop.f32.mrf.mxu0
    %v1320 = vadd.f32 0.0, %v1319
    %v1321 = vpop.f32.mrf.mxu0
    %v1322 = vadd.f32 0.0, %v1321
    %1323 = vdwg.mxu0
    %1324 = vmatprep.subr.mxu0 %v544
    %1325 = vmatpush1.msra.mxu0 %v543
    %1326 = vmatprep.subr.mxu0 %v540
    %1327 = vmatpush1.msra.mxu0 %v539
    %1328 = vmatprep.subr.mxu0 %v536
    %1329 = vmatpush1.msra.mxu0 %v535
    %1330 = vmatprep.subr.mxu0 %v532
    %1331 = vmatpush1.msra.mxu0 %v531
    %1332 = vmatprep.subr.mxu0 %v528
    %1333 = vmatpush1.msra.mxu0 %v527
    %1334 = vmatprep.subr.mxu0 %v524
    %1335 = vmatpush1.msra.mxu0 %v523
    %1336 = vmatprep.subr.mxu0 %v520
    %1337 = vmatpush1.msra.mxu0 %v519
    %1338 = vmatprep.subr.mxu0 %v516
    %1339 = vmatpush1.msra.mxu0 %v515
    %1340 = vmatprep.subr.mxu0 %v512
    %1341 = vmatpush1.msra.mxu0 %v511
    %1342 = vmatprep.subr.mxu0 %v508
    %1343 = vmatpush1.msra.mxu0 %v507
    %1344 = vmatprep.subr.mxu0 %v504
    %1345 = vmatpush1.msra.mxu0 %v503
    %1346 = vmatprep.subr.mxu0 %v500
    %1347 = vmatpush1.msra.mxu0 %v499
    %1348 = vmatprep.subr.mxu0 %v496
    %1349 = vmatpush1.msra.mxu0 %v495
    %1350 = vmatprep.subr.mxu0 %v492
    %1351 = vmatpush1.msra.mxu0 %v491
    %1352 = vmatprep.subr.mxu0 %v488
    %1353 = vmatpush1.msra.mxu0 %v487
    %1354 = vmatprep.subr.mxu0 %v484
    %1355 = vmatpush1.msra.mxu0 %v483
    %1356 = vmatprep.subr.mxu0 0.0
    %1357 = vmatpush2.msra.mxu0 0.0
    %1358 = vmatprep.subr.mxu0 0.0
    %1359 = vmatpush2.msra.mxu0 0.0
    %1360 = vmatprep.subr.mxu0 0.0
    %1361 = vmatpush2.msra.mxu0 0.0
    %1362 = vmatprep.subr.mxu0 0.0
    %1363 = vmatpush2.msra.mxu0 0.0
    %1364 = vmatprep.subr.mxu0 0.0
    %1365 = vmatpush2.msra.mxu0 0.0
    %1366 = vmatprep.subr.mxu0 0.0
    %1367 = vmatpush2.msra.mxu0 0.0
    %1368 = vmatprep.subr.mxu0 0.0
    %1369 = vmatpush2.msra.mxu0 0.0
    %1370 = vmatprep.subr.mxu0 0.0
    %1371 = vmatpush2.msra.mxu0 0.0
    %1372 = vmatprep.subr.mxu0 0.0
    %1373 = vmatpush2.msra.mxu0 0.0
    %1374 = vmatprep.subr.mxu0 0.0
    %1375 = vmatpush2.msra.mxu0 0.0
    %1376 = vmatprep.subr.mxu0 0.0
    %1377 = vmatpush2.msra.mxu0 0.0
    %1378 = vmatprep.subr.mxu0 0.0
    %1379 = vmatpush2.msra.mxu0 0.0
    %1380 = vmatprep.subr.mxu0 0.0
    %1381 = vmatpush2.msra.mxu0 0.0
    %1382 = vmatprep.subr.mxu0 0.0
    %1383 = vmatpush2.msra.mxu0 0.0
    %1384 = vmatprep.subr.mxu0 0.0
    %1385 = vmatpush2.msra.mxu0 0.0
    %1386 = vmatprep.subr.mxu0 0.0
    %1387 = vmatpush2.msra.mxu0 0.0
    %1388 = vmatprep.mubr.f32.mxu0 0.0
    %1389 = vmatmul.mubr.f32.gmra.mxu0 %v1245
    %v1390 = vpop.f32.mrf.mxu0
    %v1391 = vadd.f32 0.0, %v1390
    %v1392 = vpop.f32.mrf.mxu0
    %v1393 = vadd.f32 0.0, %v1392
    %1394 = vdwg.mxu0
    %v1395 = vadd.f32 %v1249, %v1320
    %v1396 = vadd.f32 %v1250, %v1322
    %v1397 = vadd.f32 %v1251, %v1391
    %v1398 = vadd.f32 %v1252, %v1393
    %v1399 = vxor.u32 %v1395, 2147483648
    %v1400 = vmul.f32 %v1399, 1.442695
    %v1401 = vpow.pop %v1400
    %v1402 = vadd.f32 %v1401, 1.0
    %v1403 = vrcp.pop %v1402
    %v1404 = vmul.f32 1.0, %v1403
    %v1405 = vxor.u32 %v1396, 2147483648
    %v1406 = vmul.f32 %v1405, 1.442695
    %v1407 = vpow.pop %v1406
    %v1408 = vadd.f32 %v1407, 1.0
    %v1409 = vrcp.pop %v1408
    %v1410 = vmul.f32 1.0, %v1409
    %v1411 = vtanh.pop %v1397
    %v1412 = vxor.u32 %v1398, 2147483648
    %v1413 = vmul.f32 %v1412, 1.442695
    %v1414 = vpow.pop %v1413
    %v1415 = vadd.f32 %v1414, 1.0
    %v1416 = vrcp.pop %v1415
    %v1417 = vmul.f32 1.0, %v1416
    %v1418 = vmul.f32 %v1410, %v1243
    %v1419 = vmul.f32 %v1404, %v1411
    %v1420 = vadd.f32 %v1418, %v1419
    %v1421 = vtanh.pop %v1420
    %v1422 = vmul.f32 %v1417, %v1421
    %s1423 = smul.u32 5, 4
    %s1424 = smul.addr %s1423, 8
    %s1425 = scalar_lea.vmem [#allocation2], %s1424
    %v1426 = vld [vmem:[%s1425] sm:$0xff]
    %v1427 = vld [vmem:[%s1425 + $0x8] sm:$0xff]
    %v1428 = vld [vmem:[%s1425 + $0x10] sm:$0xff]
    %v1429 = vld [vmem:[%s1425 + $0x18] sm:$0xff]
    %1430 = vmatprep.subr.mxu0 %v542
    %1431 = vmatpush1.msra.mxu0 %v541
    %1432 = vmatprep.subr.mxu0 %v538
    %1433 = vmatpush1.msra.mxu0 %v537
    %1434 = vmatprep.subr.mxu0 %v534
    %1435 = vmatpush1.msra.mxu0 %v533
    %1436 = vmatprep.subr.mxu0 %v530
    %1437 = vmatpush1.msra.mxu0 %v529
    %1438 = vmatprep.subr.mxu0 %v526
    %1439 = vmatpush1.msra.mxu0 %v525
    %1440 = vmatprep.subr.mxu0 %v522
    %1441 = vmatpush1.msra.mxu0 %v521
    %1442 = vmatprep.subr.mxu0 %v518
    %1443 = vmatpush1.msra.mxu0 %v517
    %1444 = vmatprep.subr.mxu0 %v514
    %1445 = vmatpush1.msra.mxu0 %v513
    %1446 = vmatprep.subr.mxu0 %v510
    %1447 = vmatpush1.msra.mxu0 %v509
    %1448 = vmatprep.subr.mxu0 %v506
    %1449 = vmatpush1.msra.mxu0 %v505
    %1450 = vmatprep.subr.mxu0 %v502
    %1451 = vmatpush1.msra.mxu0 %v501
    %1452 = vmatprep.subr.mxu0 %v498
    %1453 = vmatpush1.msra.mxu0 %v497
    %1454 = vmatprep.subr.mxu0 %v494
    %1455 = vmatpush1.msra.mxu0 %v493
    %1456 = vmatprep.subr.mxu0 %v490
    %1457 = vmatpush1.msra.mxu0 %v489
    %1458 = vmatprep.subr.mxu0 %v486
    %1459 = vmatpush1.msra.mxu0 %v485
    %1460 = vmatprep.subr.mxu0 %v482
    %1461 = vmatpush1.msra.mxu0 %v481
    %1462 = vmatprep.subr.mxu0 0.0
    %1463 = vmatpush2.msra.mxu0 0.0
    %1464 = vmatprep.subr.mxu0 0.0
    %1465 = vmatpush2.msra.mxu0 0.0
    %1466 = vmatprep.subr.mxu0 0.0
    %1467 = vmatpush2.msra.mxu0 0.0
    %1468 = vmatprep.subr.mxu0 0.0
    %1469 = vmatpush2.msra.mxu0 0.0
    %1470 = vmatprep.subr.mxu0 0.0
    %1471 = vmatpush2.msra.mxu0 0.0
    %1472 = vmatprep.subr.mxu0 0.0
    %1473 = vmatpush2.msra.mxu0 0.0
    %1474 = vmatprep.subr.mxu0 0.0
    %1475 = vmatpush2.msra.mxu0 0.0
    %1476 = vmatprep.subr.mxu0 0.0
    %1477 = vmatpush2.msra.mxu0 0.0
    %1478 = vmatprep.subr.mxu0 0.0
    %1479 = vmatpush2.msra.mxu0 0.0
    %1480 = vmatprep.subr.mxu0 0.0
    %1481 = vmatpush2.msra.mxu0 0.0
    %1482 = vmatprep.subr.mxu0 0.0
    %1483 = vmatpush2.msra.mxu0 0.0
    %1484 = vmatprep.subr.mxu0 0.0
    %1485 = vmatpush2.msra.mxu0 0.0
    %1486 = vmatprep.subr.mxu0 0.0
    %1487 = vmatpush2.msra.mxu0 0.0
    %1488 = vmatprep.subr.mxu0 0.0
    %1489 = vmatpush2.msra.mxu0 0.0
    %1490 = vmatprep.subr.mxu0 0.0
    %1491 = vmatpush2.msra.mxu0 0.0
    %1492 = vmatprep.subr.mxu0 0.0
    %1493 = vmatpush2.msra.mxu0 0.0
    %1494 = vmatprep.mubr.f32.mxu0 0.0
    %1495 = vmatmul.mubr.f32.gmra.mxu0 %v1422
    %v1496 = vpop.f32.mrf.mxu0
    %v1497 = vadd.f32 0.0, %v1496
    %v1498 = vpop.f32.mrf.mxu0
    %v1499 = vadd.f32 0.0, %v1498
    %1500 = vdwg.mxu0
    %1501 = vmatprep.subr.mxu0 %v544
    %1502 = vmatpush1.msra.mxu0 %v543
    %1503 = vmatprep.subr.mxu0 %v540
    %1504 = vmatpush1.msra.mxu0 %v539
    %1505 = vmatprep.subr.mxu0 %v536
    %1506 = vmatpush1.msra.mxu0 %v535
    %1507 = vmatprep.subr.mxu0 %v532
    %1508 = vmatpush1.msra.mxu0 %v531
    %1509 = vmatprep.subr.mxu0 %v528
    %1510 = vmatpush1.msra.mxu0 %v527
    %1511 = vmatprep.subr.mxu0 %v524
    %1512 = vmatpush1.msra.mxu0 %v523
    %1513 = vmatprep.subr.mxu0 %v520
    %1514 = vmatpush1.msra.mxu0 %v519
    %1515 = vmatprep.subr.mxu0 %v516
    %1516 = vmatpush1.msra.mxu0 %v515
    %1517 = vmatprep.subr.mxu0 %v512
    %1518 = vmatpush1.msra.mxu0 %v511
    %1519 = vmatprep.subr.mxu0 %v508
    %1520 = vmatpush1.msra.mxu0 %v507
    %1521 = vmatprep.subr.mxu0 %v504
    %1522 = vmatpush1.msra.mxu0 %v503
    %1523 = vmatprep.subr.mxu0 %v500
    %1524 = vmatpush1.msra.mxu0 %v499
    %1525 = vmatprep.subr.mxu0 %v496
    %1526 = vmatpush1.msra.mxu0 %v495
    %1527 = vmatprep.subr.mxu0 %v492
    %1528 = vmatpush1.msra.mxu0 %v491
    %1529 = vmatprep.subr.mxu0 %v488
    %1530 = vmatpush1.msra.mxu0 %v487
    %1531 = vmatprep.subr.mxu0 %v484
    %1532 = vmatpush1.msra.mxu0 %v483
    %1533 = vmatprep.subr.mxu0 0.0
    %1534 = vmatpush2.msra.mxu0 0.0
    %1535 = vmatprep.subr.mxu0 0.0
    %1536 = vmatpush2.msra.mxu0 0.0
    %1537 = vmatprep.subr.mxu0 0.0
    %1538 = vmatpush2.msra.mxu0 0.0
    %1539 = vmatprep.subr.mxu0 0.0
    %1540 = vmatpush2.msra.mxu0 0.0
    %1541 = vmatprep.subr.mxu0 0.0
    %1542 = vmatpush2.msra.mxu0 0.0
    %1543 = vmatprep.subr.mxu0 0.0
    %1544 = vmatpush2.msra.mxu0 0.0
    %1545 = vmatprep.subr.mxu0 0.0
    %1546 = vmatpush2.msra.mxu0 0.0
    %1547 = vmatprep.subr.mxu0 0.0
    %1548 = vmatpush2.msra.mxu0 0.0
    %1549 = vmatprep.subr.mxu0 0.0
    %1550 = vmatpush2.msra.mxu0 0.0
    %1551 = vmatprep.subr.mxu0 0.0
    %1552 = vmatpush2.msra.mxu0 0.0
    %1553 = vmatprep.subr.mxu0 0.0
    %1554 = vmatpush2.msra.mxu0 0.0
    %1555 = vmatprep.subr.mxu0 0.0
    %1556 = vmatpush2.msra.mxu0 0.0
    %1557 = vmatprep.subr.mxu0 0.0
    %1558 = vmatpush2.msra.mxu0 0.0
    %1559 = vmatprep.subr.mxu0 0.0
    %1560 = vmatpush2.msra.mxu0 0.0
    %1561 = vmatprep.subr.mxu0 0.0
    %1562 = vmatpush2.msra.mxu0 0.0
    %1563 = vmatprep.subr.mxu0 0.0
    %1564 = vmatpush2.msra.mxu0 0.0
    %1565 = vmatprep.mubr.f32.mxu0 0.0
    %1566 = vmatmul.mubr.f32.gmra.mxu0 %v1422
    %v1567 = vpop.f32.mrf.mxu0
    %v1568 = vadd.f32 0.0, %v1567
    %v1569 = vpop.f32.mrf.mxu0
    %v1570 = vadd.f32 0.0, %v1569
    %1571 = vdwg.mxu0
    %v1572 = vadd.f32 %v1426, %v1497
    %v1573 = vadd.f32 %v1427, %v1499
    %v1574 = vadd.f32 %v1428, %v1568
    %v1575 = vadd.f32 %v1429, %v1570
    %v1576 = vxor.u32 %v1572, 2147483648
    %v1577 = vmul.f32 %v1576, 1.442695
    %v1578 = vpow.pop %v1577
    %v1579 = vadd.f32 %v1578, 1.0
    %v1580 = vrcp.pop %v1579
    %v1581 = vmul.f32 1.0, %v1580
    %v1582 = vxor.u32 %v1573, 2147483648
    %v1583 = vmul.f32 %v1582, 1.442695
    %v1584 = vpow.pop %v1583
    %v1585 = vadd.f32 %v1584, 1.0
    %v1586 = vrcp.pop %v1585
    %v1587 = vmul.f32 1.0, %v1586
    %v1588 = vtanh.pop %v1574
    %v1589 = vxor.u32 %v1575, 2147483648
    %v1590 = vmul.f32 %v1589, 1.442695
    %v1591 = vpow.pop %v1590
    %v1592 = vadd.f32 %v1591, 1.0
    %v1593 = vrcp.pop %v1592
    %v1594 = vmul.f32 1.0, %v1593
    %v1595 = vmul.f32 %v1587, %v1420
    %v1596 = vmul.f32 %v1581, %v1588
    %v1597 = vadd.f32 %v1595, %v1596
    %v1598 = vtanh.pop %v1597
    %v1599 = vmul.f32 %v1594, %v1598
    %s1600 = smul.u32 6, 4
    %s1601 = smul.addr %s1600, 8
    %s1602 = scalar_lea.vmem [#allocation2], %s1601
    %v1603 = vld [vmem:[%s1602] sm:$0xff]
    %v1604 = vld [vmem:[%s1602 + $0x8] sm:$0xff]
    %v1605 = vld [vmem:[%s1602 + $0x10] sm:$0xff]
    %v1606 = vld [vmem:[%s1602 + $0x18] sm:$0xff]
    %1607 = vmatprep.subr.mxu0 %v542
    %1608 = vmatpush1.msra.mxu0 %v541
    %1609 = vmatprep.subr.mxu0 %v538
    %1610 = vmatpush1.msra.mxu0 %v537
    %1611 = vmatprep.subr.mxu0 %v534
    %1612 = vmatpush1.msra.mxu0 %v533
    %1613 = vmatprep.subr.mxu0 %v530
    %1614 = vmatpush1.msra.mxu0 %v529
    %1615 = vmatprep.subr.mxu0 %v526
    %1616 = vmatpush1.msra.mxu0 %v525
    %1617 = vmatprep.subr.mxu0 %v522
    %1618 = vmatpush1.msra.mxu0 %v521
    %1619 = vmatprep.subr.mxu0 %v518
    %1620 = vmatpush1.msra.mxu0 %v517
    %1621 = vmatprep.subr.mxu0 %v514
    %1622 = vmatpush1.msra.mxu0 %v513
    %1623 = vmatprep.subr.mxu0 %v510
    %1624 = vmatpush1.msra.mxu0 %v509
    %1625 = vmatprep.subr.mxu0 %v506
    %1626 = vmatpush1.msra.mxu0 %v505
    %1627 = vmatprep.subr.mxu0 %v502
    %1628 = vmatpush1.msra.mxu0 %v501
    %1629 = vmatprep.subr.mxu0 %v498
    %1630 = vmatpush1.msra.mxu0 %v497
    %1631 = vmatprep.subr.mxu0 %v494
    %1632 = vmatpush1.msra.mxu0 %v493
    %1633 = vmatprep.subr.mxu0 %v490
    %1634 = vmatpush1.msra.mxu0 %v489
    %1635 = vmatprep.subr.mxu0 %v486
    %1636 = vmatpush1.msra.mxu0 %v485
    %1637 = vmatprep.subr.mxu0 %v482
    %1638 = vmatpush1.msra.mxu0 %v481
    %1639 = vmatprep.subr.mxu0 0.0
    %1640 = vmatpush2.msra.mxu0 0.0
    %1641 = vmatprep.subr.mxu0 0.0
    %1642 = vmatpush2.msra.mxu0 0.0
    %1643 = vmatprep.subr.mxu0 0.0
    %1644 = vmatpush2.msra.mxu0 0.0
    %1645 = vmatprep.subr.mxu0 0.0
    %1646 = vmatpush2.msra.mxu0 0.0
    %1647 = vmatprep.subr.mxu0 0.0
    %1648 = vmatpush2.msra.mxu0 0.0
    %1649 = vmatprep.subr.mxu0 0.0
    %1650 = vmatpush2.msra.mxu0 0.0
    %1651 = vmatprep.subr.mxu0 0.0
    %1652 = vmatpush2.msra.mxu0 0.0
    %1653 = vmatprep.subr.mxu0 0.0
    %1654 = vmatpush2.msra.mxu0 0.0
    %1655 = vmatprep.subr.mxu0 0.0
    %1656 = vmatpush2.msra.mxu0 0.0
    %1657 = vmatprep.subr.mxu0 0.0
    %1658 = vmatpush2.msra.mxu0 0.0
    %1659 = vmatprep.subr.mxu0 0.0
    %1660 = vmatpush2.msra.mxu0 0.0
    %1661 = vmatprep.subr.mxu0 0.0
    %1662 = vmatpush2.msra.mxu0 0.0
    %1663 = vmatprep.subr.mxu0 0.0
    %1664 = vmatpush2.msra.mxu0 0.0
    %1665 = vmatprep.subr.mxu0 0.0
    %1666 = vmatpush2.msra.mxu0 0.0
    %1667 = vmatprep.subr.mxu0 0.0
    %1668 = vmatpush2.msra.mxu0 0.0
    %1669 = vmatprep.subr.mxu0 0.0
    %1670 = vmatpush2.msra.mxu0 0.0
    %1671 = vmatprep.mubr.f32.mxu0 0.0
    %1672 = vmatmul.mubr.f32.gmra.mxu0 %v1599
    %v1673 = vpop.f32.mrf.mxu0
    %v1674 = vadd.f32 0.0, %v1673
    %v1675 = vpop.f32.mrf.mxu0
    %v1676 = vadd.f32 0.0, %v1675
    %1677 = vdwg.mxu0
    %1678 = vmatprep.subr.mxu0 %v544
    %1679 = vmatpush1.msra.mxu0 %v543
    %1680 = vmatprep.subr.mxu0 %v540
    %1681 = vmatpush1.msra.mxu0 %v539
    %1682 = vmatprep.subr.mxu0 %v536
    %1683 = vmatpush1.msra.mxu0 %v535
    %1684 = vmatprep.subr.mxu0 %v532
    %1685 = vmatpush1.msra.mxu0 %v531
    %1686 = vmatprep.subr.mxu0 %v528
    %1687 = vmatpush1.msra.mxu0 %v527
    %1688 = vmatprep.subr.mxu0 %v524
    %1689 = vmatpush1.msra.mxu0 %v523
    %1690 = vmatprep.subr.mxu0 %v520
    %1691 = vmatpush1.msra.mxu0 %v519
    %1692 = vmatprep.subr.mxu0 %v516
    %1693 = vmatpush1.msra.mxu0 %v515
    %1694 = vmatprep.subr.mxu0 %v512
    %1695 = vmatpush1.msra.mxu0 %v511
    %1696 = vmatprep.subr.mxu0 %v508
    %1697 = vmatpush1.msra.mxu0 %v507
    %1698 = vmatprep.subr.mxu0 %v504
    %1699 = vmatpush1.msra.mxu0 %v503
    %1700 = vmatprep.subr.mxu0 %v500
    %1701 = vmatpush1.msra.mxu0 %v499
    %1702 = vmatprep.subr.mxu0 %v496
    %1703 = vmatpush1.msra.mxu0 %v495
    %1704 = vmatprep.subr.mxu0 %v492
    %1705 = vmatpush1.msra.mxu0 %v491
    %1706 = vmatprep.subr.mxu0 %v488
    %1707 = vmatpush1.msra.mxu0 %v487
    %1708 = vmatprep.subr.mxu0 %v484
    %1709 = vmatpush1.msra.mxu0 %v483
    %1710 = vmatprep.subr.mxu0 0.0
    %1711 = vmatpush2.msra.mxu0 0.0
    %1712 = vmatprep.subr.mxu0 0.0
    %1713 = vmatpush2.msra.mxu0 0.0
    %1714 = vmatprep.subr.mxu0 0.0
    %1715 = vmatpush2.msra.mxu0 0.0
    %1716 = vmatprep.subr.mxu0 0.0
    %1717 = vmatpush2.msra.mxu0 0.0
    %1718 = vmatprep.subr.mxu0 0.0
    %1719 = vmatpush2.msra.mxu0 0.0
    %1720 = vmatprep.subr.mxu0 0.0
    %1721 = vmatpush2.msra.mxu0 0.0
    %1722 = vmatprep.subr.mxu0 0.0
    %1723 = vmatpush2.msra.mxu0 0.0
    %1724 = vmatprep.subr.mxu0 0.0
    %1725 = vmatpush2.msra.mxu0 0.0
    %1726 = vmatprep.subr.mxu0 0.0
    %1727 = vmatpush2.msra.mxu0 0.0
    %1728 = vmatprep.subr.mxu0 0.0
    %1729 = vmatpush2.msra.mxu0 0.0
    %1730 = vmatprep.subr.mxu0 0.0
    %1731 = vmatpush2.msra.mxu0 0.0
    %1732 = vmatprep.subr.mxu0 0.0
    %1733 = vmatpush2.msra.mxu0 0.0
    %1734 = vmatprep.subr.mxu0 0.0
    %1735 = vmatpush2.msra.mxu0 0.0
    %1736 = vmatprep.subr.mxu0 0.0
    %1737 = vmatpush2.msra.mxu0 0.0
    %1738 = vmatprep.subr.mxu0 0.0
    %1739 = vmatpush2.msra.mxu0 0.0
    %1740 = vmatprep.subr.mxu0 0.0
    %1741 = vmatpush2.msra.mxu0 0.0
    %1742 = vmatprep.mubr.f32.mxu0 0.0
    %1743 = vmatmul.mubr.f32.gmra.mxu0 %v1599
    %v1744 = vpop.f32.mrf.mxu0
    %v1745 = vadd.f32 0.0, %v1744
    %v1746 = vpop.f32.mrf.mxu0
    %v1747 = vadd.f32 0.0, %v1746
    %1748 = vdwg.mxu0
    %v1749 = vadd.f32 %v1603, %v1674
    %v1750 = vadd.f32 %v1604, %v1676
    %v1751 = vadd.f32 %v1605, %v1745
    %v1752 = vadd.f32 %v1606, %v1747
    %v1753 = vxor.u32 %v1749, 2147483648
    %v1754 = vmul.f32 %v1753, 1.442695
    %v1755 = vpow.pop %v1754
    %v1756 = vadd.f32 %v1755, 1.0
    %v1757 = vrcp.pop %v1756
    %v1758 = vmul.f32 1.0, %v1757
    %v1759 = vxor.u32 %v1750, 2147483648
    %v1760 = vmul.f32 %v1759, 1.442695
    %v1761 = vpow.pop %v1760
    %v1762 = vadd.f32 %v1761, 1.0
    %v1763 = vrcp.pop %v1762
    %v1764 = vmul.f32 1.0, %v1763
    %v1765 = vtanh.pop %v1751
    %v1766 = vxor.u32 %v1752, 2147483648
    %v1767 = vmul.f32 %v1766, 1.442695
    %v1768 = vpow.pop %v1767
    %v1769 = vadd.f32 %v1768, 1.0
    %v1770 = vrcp.pop %v1769
    %v1771 = vmul.f32 1.0, %v1770
    %v1772 = vmul.f32 %v1764, %v1597
    %v1773 = vmul.f32 %v1758, %v1765
    %v1774 = vadd.f32 %v1772, %v1773
    %v1775 = vtanh.pop %v1774
    %v1776 = vmul.f32 %v1771, %v1775
    %s1777 = smul.u32 7, 4
    %s1778 = smul.addr %s1777, 8
    %s1779 = scalar_lea.vmem [#allocation2], %s1778
    %v1780 = vld [vmem:[%s1779] sm:$0xff]
    %v1781 = vld [vmem:[%s1779 + $0x8] sm:$0xff]
    %v1782 = vld [vmem:[%s1779 + $0x10] sm:$0xff]
    %v1783 = vld [vmem:[%s1779 + $0x18] sm:$0xff]
    %1784 = vmatprep.subr.mxu0 %v542
    %1785 = vmatpush1.msra.mxu0 %v541
    %1786 = vmatprep.subr.mxu0 %v538
    %1787 = vmatpush1.msra.mxu0 %v537
    %1788 = vmatprep.subr.mxu0 %v534
    %1789 = vmatpush1.msra.mxu0 %v533
    %1790 = vmatprep.subr.mxu0 %v530
    %1791 = vmatpush1.msra.mxu0 %v529
    %1792 = vmatprep.subr.mxu0 %v526
    %1793 = vmatpush1.msra.mxu0 %v525
    %1794 = vmatprep.subr.mxu0 %v522
    %1795 = vmatpush1.msra.mxu0 %v521
    %1796 = vmatprep.subr.mxu0 %v518
    %1797 = vmatpush1.msra.mxu0 %v517
    %1798 = vmatprep.subr.mxu0 %v514
    %1799 = vmatpush1.msra.mxu0 %v513
    %1800 = vmatprep.subr.mxu0 %v510
    %1801 = vmatpush1.msra.mxu0 %v509
    %1802 = vmatprep.subr.mxu0 %v506
    %1803 = vmatpush1.msra.mxu0 %v505
    %1804 = vmatprep.subr.mxu0 %v502
    %1805 = vmatpush1.msra.mxu0 %v501
    %1806 = vmatprep.subr.mxu0 %v498
    %1807 = vmatpush1.msra.mxu0 %v497
    %1808 = vmatprep.subr.mxu0 %v494
    %1809 = vmatpush1.msra.mxu0 %v493
    %1810 = vmatprep.subr.mxu0 %v490
    %1811 = vmatpush1.msra.mxu0 %v489
    %1812 = vmatprep.subr.mxu0 %v486
    %1813 = vmatpush1.msra.mxu0 %v485
    %1814 = vmatprep.subr.mxu0 %v482
    %1815 = vmatpush1.msra.mxu0 %v481
    %1816 = vmatprep.subr.mxu0 0.0
    %1817 = vmatpush2.msra.mxu0 0.0
    %1818 = vmatprep.subr.mxu0 0.0
    %1819 = vmatpush2.msra.mxu0 0.0
    %1820 = vmatprep.subr.mxu0 0.0
    %1821 = vmatpush2.msra.mxu0 0.0
    %1822 = vmatprep.subr.mxu0 0.0
    %1823 = vmatpush2.msra.mxu0 0.0
    %1824 = vmatprep.subr.mxu0 0.0
    %1825 = vmatpush2.msra.mxu0 0.0
    %1826 = vmatprep.subr.mxu0 0.0
    %1827 = vmatpush2.msra.mxu0 0.0
    %1828 = vmatprep.subr.mxu0 0.0
    %1829 = vmatpush2.msra.mxu0 0.0
    %1830 = vmatprep.subr.mxu0 0.0
    %1831 = vmatpush2.msra.mxu0 0.0
    %1832 = vmatprep.subr.mxu0 0.0
    %1833 = vmatpush2.msra.mxu0 0.0
    %1834 = vmatprep.subr.mxu0 0.0
    %1835 = vmatpush2.msra.mxu0 0.0
    %1836 = vmatprep.subr.mxu0 0.0
    %1837 = vmatpush2.msra.mxu0 0.0
    %1838 = vmatprep.subr.mxu0 0.0
    %1839 = vmatpush2.msra.mxu0 0.0
    %1840 = vmatprep.subr.mxu0 0.0
    %1841 = vmatpush2.msra.mxu0 0.0
    %1842 = vmatprep.subr.mxu0 0.0
    %1843 = vmatpush2.msra.mxu0 0.0
    %1844 = vmatprep.subr.mxu0 0.0
    %1845 = vmatpush2.msra.mxu0 0.0
    %1846 = vmatprep.subr.mxu0 0.0
    %1847 = vmatpush2.msra.mxu0 0.0
    %1848 = vmatprep.mubr.f32.mxu0 0.0
    %1849 = vmatmul.mubr.f32.gmra.mxu0 %v1776
    %v1850 = vpop.f32.mrf.mxu0
    %v1851 = vadd.f32 0.0, %v1850
    %v1852 = vpop.f32.mrf.mxu0
    %v1853 = vadd.f32 0.0, %v1852
    %1854 = vdwg.mxu0
    %1855 = vmatprep.subr.mxu0 %v544
    %1856 = vmatpush1.msra.mxu0 %v543
    %1857 = vmatprep.subr.mxu0 %v540
    %1858 = vmatpush1.msra.mxu0 %v539
    %1859 = vmatprep.subr.mxu0 %v536
    %1860 = vmatpush1.msra.mxu0 %v535
    %1861 = vmatprep.subr.mxu0 %v532
    %1862 = vmatpush1.msra.mxu0 %v531
    %1863 = vmatprep.subr.mxu0 %v528
    %1864 = vmatpush1.msra.mxu0 %v527
    %1865 = vmatprep.subr.mxu0 %v524
    %1866 = vmatpush1.msra.mxu0 %v523
    %1867 = vmatprep.subr.mxu0 %v520
    %1868 = vmatpush1.msra.mxu0 %v519
    %1869 = vmatprep.subr.mxu0 %v516
    %1870 = vmatpush1.msra.mxu0 %v515
    %1871 = vmatprep.subr.mxu0 %v512
    %1872 = vmatpush1.msra.mxu0 %v511
    %1873 = vmatprep.subr.mxu0 %v508
    %1874 = vmatpush1.msra.mxu0 %v507
    %1875 = vmatprep.subr.mxu0 %v504
    %1876 = vmatpush1.msra.mxu0 %v503
    %1877 = vmatprep.subr.mxu0 %v500
    %1878 = vmatpush1.msra.mxu0 %v499
    %1879 = vmatprep.subr.mxu0 %v496
    %1880 = vmatpush1.msra.mxu0 %v495
    %1881 = vmatprep.subr.mxu0 %v492
    %1882 = vmatpush1.msra.mxu0 %v491
    %1883 = vmatprep.subr.mxu0 %v488
    %1884 = vmatpush1.msra.mxu0 %v487
    %1885 = vmatprep.subr.mxu0 %v484
    %1886 = vmatpush1.msra.mxu0 %v483
    %1887 = vmatprep.subr.mxu0 0.0
    %1888 = vmatpush2.msra.mxu0 0.0
    %1889 = vmatprep.subr.mxu0 0.0
    %1890 = vmatpush2.msra.mxu0 0.0
    %1891 = vmatprep.subr.mxu0 0.0
    %1892 = vmatpush2.msra.mxu0 0.0
    %1893 = vmatprep.subr.mxu0 0.0
    %1894 = vmatpush2.msra.mxu0 0.0
    %1895 = vmatprep.subr.mxu0 0.0
    %1896 = vmatpush2.msra.mxu0 0.0
    %1897 = vmatprep.subr.mxu0 0.0
    %1898 = vmatpush2.msra.mxu0 0.0
    %1899 = vmatprep.subr.mxu0 0.0
    %1900 = vmatpush2.msra.mxu0 0.0
    %1901 = vmatprep.subr.mxu0 0.0
    %1902 = vmatpush2.msra.mxu0 0.0
    %1903 = vmatprep.subr.mxu0 0.0
    %1904 = vmatpush2.msra.mxu0 0.0
    %1905 = vmatprep.subr.mxu0 0.0
    %1906 = vmatpush2.msra.mxu0 0.0
    %1907 = vmatprep.subr.mxu0 0.0
    %1908 = vmatpush2.msra.mxu0 0.0
    %1909 = vmatprep.subr.mxu0 0.0
    %1910 = vmatpush2.msra.mxu0 0.0
    %1911 = vmatprep.subr.mxu0 0.0
    %1912 = vmatpush2.msra.mxu0 0.0
    %1913 = vmatprep.subr.mxu0 0.0
    %1914 = vmatpush2.msra.mxu0 0.0
    %1915 = vmatprep.subr.mxu0 0.0
    %1916 = vmatpush2.msra.mxu0 0.0
    %1917 = vmatprep.subr.mxu0 0.0
    %1918 = vmatpush2.msra.mxu0 0.0
    %1919 = vmatprep.mubr.f32.mxu0 0.0
    %1920 = vmatmul.mubr.f32.gmra.mxu0 %v1776
    %v1921 = vpop.f32.mrf.mxu0
    %v1922 = vadd.f32 0.0, %v1921
    %v1923 = vpop.f32.mrf.mxu0
    %v1924 = vadd.f32 0.0, %v1923
    %1925 = vdwg.mxu0
    %v1926 = vadd.f32 %v1780, %v1851
    %v1927 = vadd.f32 %v1781, %v1853
    %v1928 = vadd.f32 %v1782, %v1922
    %v1929 = vadd.f32 %v1783, %v1924
    %v1930 = vxor.u32 %v1926, 2147483648
    %v1931 = vmul.f32 %v1930, 1.442695
    %v1932 = vpow.pop %v1931
    %v1933 = vadd.f32 %v1932, 1.0
    %v1934 = vrcp.pop %v1933
    %v1935 = vmul.f32 1.0, %v1934
    %v1936 = vxor.u32 %v1927, 2147483648
    %v1937 = vmul.f32 %v1936, 1.442695
    %v1938 = vpow.pop %v1937
    %v1939 = vadd.f32 %v1938, 1.0
    %v1940 = vrcp.pop %v1939
    %v1941 = vmul.f32 1.0, %v1940
    %v1942 = vtanh.pop %v1928
    %v1943 = vxor.u32 %v1929, 2147483648
    %v1944 = vmul.f32 %v1943, 1.442695
    %v1945 = vpow.pop %v1944
    %v1946 = vadd.f32 %v1945, 1.0
    %v1947 = vrcp.pop %v1946
    %v1948 = vmul.f32 1.0, %v1947
    %v1949 = vmul.f32 %v1941, %v1774
    %v1950 = vmul.f32 %v1935, %v1942
    %v1951 = vadd.f32 %v1949, %v1950
    %v1952 = vtanh.pop %v1951
    %v1953 = vmul.f32 %v1948, %v1952
    %s1954 = smul.u32 4, 16
    %s1955 = smul.u32 %s1954, 4
    %s1956 = sshll.u32 %s1955, 4
    %1957 = dma.done [#allocation6], %s1956
    %s1958 = smul.u32 4, 8
    %s1959 = smul.u32 %s1958, 4
    %s1960 = sshll.u32 %s1959, 4
    %1961 = dma.done %s125, %s1960
    %v1962 = vpack.c.bf16 %v1953, %v1953
    %v1963 = vld [vmem:[#allocation3] sm:$0xff]
    %v1964 = vld [vmem:[#allocation3 + $0x8] sm:$0xff]
    %v1965 = vld [vmem:[#allocation3 + $0x10] sm:$0xff]
    %v1966 = vld [vmem:[#allocation3 + $0x18] sm:$0xff]
    %v1967 = vld [vmem:[#allocation3 + $0x20] sm:$0xff]
    %v1968 = vld [vmem:[#allocation3 + $0x28] sm:$0xff]
    %v1969 = vld [vmem:[#allocation3 + $0x30] sm:$0xff]
    %v1970 = vld [vmem:[#allocation3 + $0x38] sm:$0xff]
    %v1971 = vld [vmem:[#allocation3 + $0x40] sm:$0xff]
    %v1972 = vld [vmem:[#allocation3 + $0x48] sm:$0xff]
    %v1973 = vld [vmem:[#allocation3 + $0x50] sm:$0xff]
    %v1974 = vld [vmem:[#allocation3 + $0x58] sm:$0xff]
    %v1975 = vld [vmem:[#allocation3 + $0x60] sm:$0xff]
    %v1976 = vld [vmem:[#allocation3 + $0x68] sm:$0xff]
    %v1977 = vld [vmem:[#allocation3 + $0x70] sm:$0xff]
    %v1978 = vld [vmem:[#allocation3 + $0x78] sm:$0xff]
    %v1979 = vld [vmem:[#allocation3 + $0x80] sm:$0xff]
    %v1980 = vld [vmem:[#allocation3 + $0x88] sm:$0xff]
    %v1981 = vld [vmem:[#allocation3 + $0x90] sm:$0xff]
    %v1982 = vld [vmem:[#allocation3 + $0x98] sm:$0xff]
    %v1983 = vld [vmem:[#allocation3 + $0xa0] sm:$0xff]
    %v1984 = vld [vmem:[#allocation3 + $0xa8] sm:$0xff]
    %v1985 = vld [vmem:[#allocation3 + $0xb0] sm:$0xff]
    %v1986 = vld [vmem:[#allocation3 + $0xb8] sm:$0xff]
    %v1987 = vld [vmem:[#allocation3 + $0xc0] sm:$0xff]
    %v1988 = vld [vmem:[#allocation3 + $0xc8] sm:$0xff]
    %v1989 = vld [vmem:[#allocation3 + $0xd0] sm:$0xff]
    %v1990 = vld [vmem:[#allocation3 + $0xd8] sm:$0xff]
    %v1991 = vld [vmem:[#allocation3 + $0xe0] sm:$0xff]
    %v1992 = vld [vmem:[#allocation3 + $0xe8] sm:$0xff]
    %v1993 = vld [vmem:[#allocation3 + $0xf0] sm:$0xff]
    %v1994 = vld [vmem:[#allocation3 + $0xf8] sm:$0xff]
    %v1995 = vld [vmem:[%s1] sm:$0xff]
    %v1996 = vpack.c.bf16 %v1995, %v1995
    %v1997 = vld [vmem:[#allocation4] sm:$0xff]
    %v1998 = vld [vmem:[#allocation4 + $0x8] sm:$0xff]
    %v1999 = vld [vmem:[#allocation4 + $0x10] sm:$0xff]
    %v2000 = vld [vmem:[#allocation4 + $0x18] sm:$0xff]
    %v2001 = vld [vmem:[#allocation4 + $0x20] sm:$0xff]
    %v2002 = vld [vmem:[#allocation4 + $0x28] sm:$0xff]
    %v2003 = vld [vmem:[#allocation4 + $0x30] sm:$0xff]
    %v2004 = vld [vmem:[#allocation4 + $0x38] sm:$0xff]
    %v2005 = vld [vmem:[#allocation4 + $0x40] sm:$0xff]
    %v2006 = vld [vmem:[#allocation4 + $0x48] sm:$0xff]
    %v2007 = vld [vmem:[#allocation4 + $0x50] sm:$0xff]
    %v2008 = vld [vmem:[#allocation4 + $0x58] sm:$0xff]
    %v2009 = vld [vmem:[#allocation4 + $0x60] sm:$0xff]
    %v2010 = vld [vmem:[#allocation4 + $0x68] sm:$0xff]
    %v2011 = vld [vmem:[#allocation4 + $0x70] sm:$0xff]
    %v2012 = vld [vmem:[#allocation4 + $0x78] sm:$0xff]
    %v2029 = vunpack.c.l.b16 %v1997
    %v2030 = vunpack.c.h.b16 %v1997
    %v2031 = vunpack.c.l.b16 %v1998
    %v2032 = vunpack.c.h.b16 %v1998
    %v2033 = vunpack.c.l.b16 %v1999
    %v2034 = vunpack.c.h.b16 %v1999
    %v2035 = vunpack.c.l.b16 %v2000
    %v2036 = vunpack.c.h.b16 %v2000
    %v2037 = vunpack.c.l.b16 %v2001
    %v2038 = vunpack.c.h.b16 %v2001
    %v2039 = vunpack.c.l.b16 %v2002
    %v2040 = vunpack.c.h.b16 %v2002
    %v2041 = vunpack.c.l.b16 %v2003
    %v2042 = vunpack.c.h.b16 %v2003
    %v2043 = vunpack.c.l.b16 %v2004
    %v2044 = vunpack.c.h.b16 %v2004
    %v2045 = vunpack.c.l.b16 %v2005
    %v2046 = vunpack.c.h.b16 %v2005
    %v2047 = vunpack.c.l.b16 %v2006
    %v2048 = vunpack.c.h.b16 %v2006
    %v2049 = vunpack.c.l.b16 %v2007
    %v2050 = vunpack.c.h.b16 %v2007
    %v2051 = vunpack.c.l.b16 %v2008
    %v2052 = vunpack.c.h.b16 %v2008
    %v2053 = vunpack.c.l.b16 %v2009
    %v2054 = vunpack.c.h.b16 %v2009
    %v2055 = vunpack.c.l.b16 %v2010
    %v2056 = vunpack.c.h.b16 %v2010
    %v2057 = vunpack.c.l.b16 %v2011
    %v2058 = vunpack.c.h.b16 %v2011
    %v2059 = vunpack.c.l.b16 %v2012
    %v2060 = vunpack.c.h.b16 %v2012
    %v2061 = vpack.c.b16 %v2033, %v2029
    %v2062 = vpack.c.b16 %v2034, %v2030
    %v2063 = vpack.c.b16 %v2035, %v2031
    %v2064 = vpack.c.b16 %v2036, %v2032
    %v2065 = vpack.c.b16 %v2041, %v2037
    %v2066 = vpack.c.b16 %v2042, %v2038
    %v2067 = vpack.c.b16 %v2043, %v2039
    %v2068 = vpack.c.b16 %v2044, %v2040
    %v2069 = vpack.c.b16 %v2049, %v2045
    %v2070 = vpack.c.b16 %v2050, %v2046
    %v2071 = vpack.c.b16 %v2051, %v2047
    %v2072 = vpack.c.b16 %v2052, %v2048
    %v2073 = vpack.c.b16 %v2057, %v2053
    %v2074 = vpack.c.b16 %v2058, %v2054
    %v2075 = vpack.c.b16 %v2059, %v2055
    %v2076 = vpack.c.b16 %v2060, %v2056
    %vm2093 = vcmask 523264
    %v2095 = vsel %vm2093, %v1996, 0
    %2097 = vmatprep.subr.bf16.mxu0 0
    %2098 = vmatpush1.bf16.msra.mxu0 0
    %2099 = vmatprep.subr.bf16.mxu0 0
    %2100 = vmatpush1.bf16.msra.mxu0 0
    %2101 = vmatprep.subr.bf16.mxu0 0
    %2102 = vmatpush1.bf16.msra.mxu0 0
    %2103 = vmatprep.subr.bf16.mxu0 0
    %2104 = vmatpush1.bf16.msra.mxu0 0
    %2105 = vmatprep.subr.bf16.mxu0 %v2074
    %2106 = vmatpush1.bf16.msra.mxu0 %v2073
    %2107 = vmatprep.subr.bf16.mxu0 %v2070
    %2108 = vmatpush1.bf16.msra.mxu0 %v2069
    %2109 = vmatprep.subr.bf16.mxu0 %v2066
    %2110 = vmatpush1.bf16.msra.mxu0 %v2065
    %2111 = vmatprep.subr.bf16.mxu0 %v2062
    %2112 = vmatpush1.bf16.msra.mxu0 %v2061
    %2113 = vmatprep.subr.bf16.mxu0 0
    %2114 = vmatpush2.bf16.msra.mxu0 0
    %2115 = vmatprep.subr.bf16.mxu0 0
    %2116 = vmatpush2.bf16.msra.mxu0 0
    %2117 = vmatprep.subr.bf16.mxu0 0
    %2118 = vmatpush2.bf16.msra.mxu0 0
    %2119 = vmatprep.subr.bf16.mxu0 0
    %2120 = vmatpush2.bf16.msra.mxu0 0
    %2121 = vmatprep.subr.bf16.mxu0 0
    %2122 = vmatpush2.bf16.msra.mxu0 0
    %2123 = vmatprep.subr.bf16.mxu0 0
    %2124 = vmatpush2.bf16.msra.mxu0 0
    %2125 = vmatprep.subr.bf16.mxu0 0
    %2126 = vmatpush2.bf16.msra.mxu0 0
    %2127 = vmatprep.subr.bf16.mxu0 0
    %2128 = vmatpush2.bf16.msra.mxu0 0
    %2129 = vmatprep.mubr.bf16.mxu0 0
    %2130 = vmatmul.mubr.bf16.gmra.mxu0 %v2095
    %v2131 = vpop.f32.mrf.mxu0
    %v2132 = vadd.f32 0.0, %v2131
    %v2133 = vpop.f32.mrf.mxu0
    %v2134 = vadd.f32 0.0, %v2133
    %v2135 = vpop.f32.mrf.mxu0
    %v2136 = vpop.f32.mrf.mxu0
    %2137 = vdwg.mxu0
    %2138 = vmatprep.subr.bf16.mxu0 0
    %2139 = vmatpush1.bf16.msra.mxu0 0
    %2140 = vmatprep.subr.bf16.mxu0 0
    %2141 = vmatpush1.bf16.msra.mxu0 0
    %2142 = vmatprep.subr.bf16.mxu0 0
    %2143 = vmatpush1.bf16.msra.mxu0 0
    %2144 = vmatprep.subr.bf16.mxu0 0
    %2145 = vmatpush1.bf16.msra.mxu0 0
    %2146 = vmatprep.subr.bf16.mxu0 %v2076
    %2147 = vmatpush1.bf16.msra.mxu0 %v2075
    %2148 = vmatprep.subr.bf16.mxu0 %v2072
    %2149 = vmatpush1.bf16.msra.mxu0 %v2071
    %2150 = vmatprep.subr.bf16.mxu0 %v2068
    %2151 = vmatpush1.bf16.msra.mxu0 %v2067
    %2152 = vmatprep.subr.bf16.mxu0 %v2064
    %2153 = vmatpush1.bf16.msra.mxu0 %v2063
    %2154 = vmatprep.subr.bf16.mxu0 0
    %2155 = vmatpush2.bf16.msra.mxu0 0
    %2156 = vmatprep.subr.bf16.mxu0 0
    %2157 = vmatpush2.bf16.msra.mxu0 0
    %2158 = vmatprep.subr.bf16.mxu0 0
    %2159 = vmatpush2.bf16.msra.mxu0 0
    %2160 = vmatprep.subr.bf16.mxu0 0
    %2161 = vmatpush2.bf16.msra.mxu0 0
    %2162 = vmatprep.subr.bf16.mxu0 0
    %2163 = vmatpush2.bf16.msra.mxu0 0
    %2164 = vmatprep.subr.bf16.mxu0 0
    %2165 = vmatpush2.bf16.msra.mxu0 0
    %2166 = vmatprep.subr.bf16.mxu0 0
    %2167 = vmatpush2.bf16.msra.mxu0 0
    %2168 = vmatprep.subr.bf16.mxu0 0
    %2169 = vmatpush2.bf16.msra.mxu0 0
    %2170 = vmatprep.mubr.bf16.mxu0 0
    %2171 = vmatmul.mubr.bf16.gmra.mxu0 %v2095
    %v2172 = vpop.f32.mrf.mxu0
    %v2173 = vadd.f32 0.0, %v2172
    %v2174 = vpop.f32.mrf.mxu0
    %v2175 = vadd.f32 0.0, %v2174
    %v2176 = vpop.f32.mrf.mxu0
    %v2177 = vpop.f32.mrf.mxu0
    %2178 = vdwg.mxu0
    %v2211 = vunpack.c.l.b16 %v1963
    %v2212 = vunpack.c.h.b16 %v1963
    %v2213 = vunpack.c.l.b16 %v1964
    %v2214 = vunpack.c.h.b16 %v1964
    %v2215 = vunpack.c.l.b16 %v1965
    %v2216 = vunpack.c.h.b16 %v1965
    %v2217 = vunpack.c.l.b16 %v1966
    %v2218 = vunpack.c.h.b16 %v1966
    %v2219 = vunpack.c.l.b16 %v1967
    %v2220 = vunpack.c.h.b16 %v1967
    %v2221 = vunpack.c.l.b16 %v1968
    %v2222 = vunpack.c.h.b16 %v1968
    %v2223 = vunpack.c.l.b16 %v1969
    %v2224 = vunpack.c.h.b16 %v1969
    %v2225 = vunpack.c.l.b16 %v1970
    %v2226 = vunpack.c.h.b16 %v1970
    %v2227 = vunpack.c.l.b16 %v1971
    %v2228 = vunpack.c.h.b16 %v1971
    %v2229 = vunpack.c.l.b16 %v1972
    %v2230 = vunpack.c.h.b16 %v1972
    %v2231 = vunpack.c.l.b16 %v1973
    %v2232 = vunpack.c.h.b16 %v1973
    %v2233 = vunpack.c.l.b16 %v1974
    %v2234 = vunpack.c.h.b16 %v1974
    %v2235 = vunpack.c.l.b16 %v1975
    %v2236 = vunpack.c.h.b16 %v1975
    %v2237 = vunpack.c.l.b16 %v1976
    %v2238 = vunpack.c.h.b16 %v1976
    %v2239 = vunpack.c.l.b16 %v1977
    %v2240 = vunpack.c.h.b16 %v1977
    %v2241 = vunpack.c.l.b16 %v1978
    %v2242 = vunpack.c.h.b16 %v1978
    %v2243 = vunpack.c.l.b16 %v1979
    %v2244 = vunpack.c.h.b16 %v1979
    %v2245 = vunpack.c.l.b16 %v1980
    %v2246 = vunpack.c.h.b16 %v1980
    %v2247 = vunpack.c.l.b16 %v1981
    %v2248 = vunpack.c.h.b16 %v1981
    %v2249 = vunpack.c.l.b16 %v1982
    %v2250 = vunpack.c.h.b16 %v1982
    %v2251 = vunpack.c.l.b16 %v1983
    %v2252 = vunpack.c.h.b16 %v1983
    %v2253 = vunpack.c.l.b16 %v1984
    %v2254 = vunpack.c.h.b16 %v1984
    %v2255 = vunpack.c.l.b16 %v1985
    %v2256 = vunpack.c.h.b16 %v1985
    %v2257 = vunpack.c.l.b16 %v1986
    %v2258 = vunpack.c.h.b16 %v1986
    %v2259 = vunpack.c.l.b16 %v1987
    %v2260 = vunpack.c.h.b16 %v1987
    %v2261 = vunpack.c.l.b16 %v1988
    %v2262 = vunpack.c.h.b16 %v1988
    %v2263 = vunpack.c.l.b16 %v1989
    %v2264 = vunpack.c.h.b16 %v1989
    %v2265 = vunpack.c.l.b16 %v1990
    %v2266 = vunpack.c.h.b16 %v1990
    %v2267 = vunpack.c.l.b16 %v1991
    %v2268 = vunpack.c.h.b16 %v1991
    %v2269 = vunpack.c.l.b16 %v1992
    %v2270 = vunpack.c.h.b16 %v1992
    %v2271 = vunpack.c.l.b16 %v1993
    %v2272 = vunpack.c.h.b16 %v1993
    %v2273 = vunpack.c.l.b16 %v1994
    %v2274 = vunpack.c.h.b16 %v1994
    %v2275 = vpack.c.b16 %v2215, %v2211
    %v2276 = vpack.c.b16 %v2216, %v2212
    %v2277 = vpack.c.b16 %v2217, %v2213
    %v2278 = vpack.c.b16 %v2218, %v2214
    %v2279 = vpack.c.b16 %v2223, %v2219
    %v2280 = vpack.c.b16 %v2224, %v2220
    %v2281 = vpack.c.b16 %v2225, %v2221
    %v2282 = vpack.c.b16 %v2226, %v2222
    %v2283 = vpack.c.b16 %v2231, %v2227
    %v2284 = vpack.c.b16 %v2232, %v2228
    %v2285 = vpack.c.b16 %v2233, %v2229
    %v2286 = vpack.c.b16 %v2234, %v2230
    %v2287 = vpack.c.b16 %v2239, %v2235
    %v2288 = vpack.c.b16 %v2240, %v2236
    %v2289 = vpack.c.b16 %v2241, %v2237
    %v2290 = vpack.c.b16 %v2242, %v2238
    %v2291 = vpack.c.b16 %v2247, %v2243
    %v2292 = vpack.c.b16 %v2248, %v2244
    %v2293 = vpack.c.b16 %v2249, %v2245
    %v2294 = vpack.c.b16 %v2250, %v2246
    %v2295 = vpack.c.b16 %v2255, %v2251
    %v2296 = vpack.c.b16 %v2256, %v2252
    %v2297 = vpack.c.b16 %v2257, %v2253
    %v2298 = vpack.c.b16 %v2258, %v2254
    %v2299 = vpack.c.b16 %v2263, %v2259
    %v2300 = vpack.c.b16 %v2264, %v2260
    %v2301 = vpack.c.b16 %v2265, %v2261
    %v2302 = vpack.c.b16 %v2266, %v2262
    %v2303 = vpack.c.b16 %v2271, %v2267
    %v2304 = vpack.c.b16 %v2272, %v2268
    %v2305 = vpack.c.b16 %v2273, %v2269
    %v2306 = vpack.c.b16 %v2274, %v2270
    %2339 = vmatprep.subr.bf16.mxu0 %v2304
    %2340 = vmatpush1.bf16.msra.mxu0 %v2303
    %2341 = vmatprep.subr.bf16.mxu0 %v2300
    %2342 = vmatpush1.bf16.msra.mxu0 %v2299
    %2343 = vmatprep.subr.bf16.mxu0 %v2296
    %2344 = vmatpush1.bf16.msra.mxu0 %v2295
    %2345 = vmatprep.subr.bf16.mxu0 %v2292
    %2346 = vmatpush1.bf16.msra.mxu0 %v2291
    %2347 = vmatprep.subr.bf16.mxu0 %v2288
    %2348 = vmatpush1.bf16.msra.mxu0 %v2287
    %2349 = vmatprep.subr.bf16.mxu0 %v2284
    %2350 = vmatpush1.bf16.msra.mxu0 %v2283
    %2351 = vmatprep.subr.bf16.mxu0 %v2280
    %2352 = vmatpush1.bf16.msra.mxu0 %v2279
    %2353 = vmatprep.subr.bf16.mxu0 %v2276
    %2354 = vmatpush1.bf16.msra.mxu0 %v2275
    %2355 = vmatprep.subr.bf16.mxu0 0
    %2356 = vmatpush2.bf16.msra.mxu0 0
    %2357 = vmatprep.subr.bf16.mxu0 0
    %2358 = vmatpush2.bf16.msra.mxu0 0
    %2359 = vmatprep.subr.bf16.mxu0 0
    %2360 = vmatpush2.bf16.msra.mxu0 0
    %2361 = vmatprep.subr.bf16.mxu0 0
    %2362 = vmatpush2.bf16.msra.mxu0 0
    %2363 = vmatprep.subr.bf16.mxu0 0
    %2364 = vmatpush2.bf16.msra.mxu0 0
    %2365 = vmatprep.subr.bf16.mxu0 0
    %2366 = vmatpush2.bf16.msra.mxu0 0
    %2367 = vmatprep.subr.bf16.mxu0 0
    %2368 = vmatpush2.bf16.msra.mxu0 0
    %2369 = vmatprep.subr.bf16.mxu0 0
    %2370 = vmatpush2.bf16.msra.mxu0 0
    %2371 = vmatprep.mubr.bf16.mxu0 0
    %2372 = vmatmul.mubr.bf16.gmra.mxu0 %v1962
    %v2373 = vpop.f32.mrf.mxu0
    %v2374 = vadd.f32 %v2132, %v2373
    %v2375 = vpop.f32.mrf.mxu0
    %v2376 = vadd.f32 %v2134, %v2375
    %v2377 = vpop.f32.mrf.mxu0
    %v2378 = vpop.f32.mrf.mxu0
    %2379 = vdwg.mxu0
    %2380 = vmatprep.subr.bf16.mxu0 %v2306
    %2381 = vmatpush1.bf16.msra.mxu0 %v2305
    %2382 = vmatprep.subr.bf16.mxu0 %v2302
    %2383 = vmatpush1.bf16.msra.mxu0 %v2301
    %2384 = vmatprep.subr.bf16.mxu0 %v2298
    %2385 = vmatpush1.bf16.msra.mxu0 %v2297
    %2386 = vmatprep.subr.bf16.mxu0 %v2294
    %2387 = vmatpush1.bf16.msra.mxu0 %v2293
    %2388 = vmatprep.subr.bf16.mxu0 %v2290
    %2389 = vmatpush1.bf16.msra.mxu0 %v2289
    %2390 = vmatprep.subr.bf16.mxu0 %v2286
    %2391 = vmatpush1.bf16.msra.mxu0 %v2285
    %2392 = vmatprep.subr.bf16.mxu0 %v2282
    %2393 = vmatpush1.bf16.msra.mxu0 %v2281
    %2394 = vmatprep.subr.bf16.mxu0 %v2278
    %2395 = vmatpush1.bf16.msra.mxu0 %v2277
    %2396 = vmatprep.subr.bf16.mxu0 0
    %2397 = vmatpush2.bf16.msra.mxu0 0
    %2398 = vmatprep.subr.bf16.mxu0 0
    %2399 = vmatpush2.bf16.msra.mxu0 0
    %2400 = vmatprep.subr.bf16.mxu0 0
    %2401 = vmatpush2.bf16.msra.mxu0 0
    %2402 = vmatprep.subr.bf16.mxu0 0
    %2403 = vmatpush2.bf16.msra.mxu0 0
    %2404 = vmatprep.subr.bf16.mxu0 0
    %2405 = vmatpush2.bf16.msra.mxu0 0
    %2406 = vmatprep.subr.bf16.mxu0 0
    %2407 = vmatpush2.bf16.msra.mxu0 0
    %2408 = vmatprep.subr.bf16.mxu0 0
    %2409 = vmatpush2.bf16.msra.mxu0 0
    %2410 = vmatprep.subr.bf16.mxu0 0
    %2411 = vmatpush2.bf16.msra.mxu0 0
    %2412 = vmatprep.mubr.bf16.mxu0 0
    %2413 = vmatmul.mubr.bf16.gmra.mxu0 %v1962
    %v2414 = vpop.f32.mrf.mxu0
    %v2415 = vadd.f32 %v2173, %v2414
    %v2416 = vpop.f32.mrf.mxu0
    %v2417 = vadd.f32 %v2175, %v2416
    %v2418 = vpop.f32.mrf.mxu0
    %v2419 = vpop.f32.mrf.mxu0
    %2420 = vdwg.mxu0
    %v2421 = vld [vmem:[#allocation13] sm:$0xf]
    %v2423 = vlaneseq
    %v2424 = vshrl.u32 %v2423, 7
    %v2425 = vsub.s32 0, %v2424
    %v2426 = vrot.slane %v2421, %v2425
    %v2427 = vlaneseq
    %v2428 = vshrl.u32 %v2427, 7
    %v2429 = vsub.s32 1, %v2428
    %v2430 = vrot.slane %v2421, %v2429
    %v2431 = vlaneseq
    %v2432 = vshrl.u32 %v2431, 7
    %v2433 = vsub.s32 2, %v2432
    %v2434 = vrot.slane %v2421, %v2433
    %v2435 = vlaneseq
    %v2436 = vshrl.u32 %v2435, 7
    %v2437 = vsub.s32 3, %v2436
    %v2438 = vrot.slane %v2421, %v2437
    %v2443 = vadd.f32 %v2374, %v2426
    %v2444 = vadd.f32 %v2376, %v2430
    %v2445 = vadd.f32 %v2415, %v2434
    %v2446 = vadd.f32 %v2417, %v2438
    %v2447 = vmax.f32 %v2443, 0.0
    %v2448 = vmax.f32 %v2444, 0.0
    %v2449 = vmax.f32 %v2445, 0.0
    %v2450 = vmax.f32 %v2446, 0.0
    %s2451 = smul.u32 4, 4
    %s2452 = smul.u32 %s2451, 64
    %s2453 = smul.u32 %s2452, 4
    %s2454 = sshll.u32 %s2453, 4
    %2455 = dma.done %s137, %s2454
    %v2456 = vpack.c.bf16 %v2447, %v2447
    %v2457 = vpack.c.bf16 %v2448, %v2448
    %v2458 = vpack.c.bf16 %v2449, %v2449
    %v2459 = vpack.c.bf16 %v2450, %v2450
    %v2460 = vld [vmem:[#allocation5] sm:$0xff]
    %v2461 = vld [vmem:[#allocation5 + $0x8] sm:$0xff]
    %v2462 = vld [vmem:[#allocation5 + $0x10] sm:$0xff]
    %v2463 = vld [vmem:[#allocation5 + $0x18] sm:$0xff]
    %v2464 = vld [vmem:[#allocation5 + $0x20] sm:$0xff]
    %v2465 = vld [vmem:[#allocation5 + $0x28] sm:$0xff]
    %v2466 = vld [vmem:[#allocation5 + $0x30] sm:$0xff]
    %v2467 = vld [vmem:[#allocation5 + $0x38] sm:$0xff]
    %v2468 = vld [vmem:[#allocation5 + $0x40] sm:$0xff]
    %v2469 = vld [vmem:[#allocation5 + $0x48] sm:$0xff]
    %v2470 = vld [vmem:[#allocation5 + $0x50] sm:$0xff]
    %v2471 = vld [vmem:[#allocation5 + $0x58] sm:$0xff]
    %v2472 = vld [vmem:[#allocation5 + $0x60] sm:$0xff]
    %v2473 = vld [vmem:[#allocation5 + $0x68] sm:$0xff]
    %v2474 = vld [vmem:[#allocation5 + $0x70] sm:$0xff]
    %v2475 = vld [vmem:[#allocation5 + $0x78] sm:$0xff]
    %v2476 = vld [vmem:[#allocation5 + $0x80] sm:$0xff]
    %v2477 = vld [vmem:[#allocation5 + $0x88] sm:$0xff]
    %v2478 = vld [vmem:[#allocation5 + $0x90] sm:$0xff]
    %v2479 = vld [vmem:[#allocation5 + $0x98] sm:$0xff]
    %v2480 = vld [vmem:[#allocation5 + $0xa0] sm:$0xff]
    %v2481 = vld [vmem:[#allocation5 + $0xa8] sm:$0xff]
    %v2482 = vld [vmem:[#allocation5 + $0xb0] sm:$0xff]
    %v2483 = vld [vmem:[#allocation5 + $0xb8] sm:$0xff]
    %v2484 = vld [vmem:[#allocation5 + $0xc0] sm:$0xff]
    %v2485 = vld [vmem:[#allocation5 + $0xc8] sm:$0xff]
    %v2486 = vld [vmem:[#allocation5 + $0xd0] sm:$0xff]
    %v2487 = vld [vmem:[#allocation5 + $0xd8] sm:$0xff]
    %v2488 = vld [vmem:[#allocation5 + $0xe0] sm:$0xff]
    %v2489 = vld [vmem:[#allocation5 + $0xe8] sm:$0xff]
    %v2490 = vld [vmem:[#allocation5 + $0xf0] sm:$0xff]
    %v2491 = vld [vmem:[#allocation5 + $0xf8] sm:$0xff]
    %v2492 = vld [vmem:[#allocation5 + $0x100] sm:$0xff]
    %v2493 = vld [vmem:[#allocation5 + $0x108] sm:$0xff]
    %v2494 = vld [vmem:[#allocation5 + $0x110] sm:$0xff]
    %v2495 = vld [vmem:[#allocation5 + $0x118] sm:$0xff]
    %v2496 = vld [vmem:[#allocation5 + $0x120] sm:$0xff]
    %v2497 = vld [vmem:[#allocation5 + $0x128] sm:$0xff]
    %v2498 = vld [vmem:[#allocation5 + $0x130] sm:$0xff]
    %v2499 = vld [vmem:[#allocation5 + $0x138] sm:$0xff]
    %v2500 = vld [vmem:[#allocation5 + $0x140] sm:$0xff]
    %v2501 = vld [vmem:[#allocation5 + $0x148] sm:$0xff]
    %v2502 = vld [vmem:[#allocation5 + $0x150] sm:$0xff]
    %v2503 = vld [vmem:[#allocation5 + $0x158] sm:$0xff]
    %v2504 = vld [vmem:[#allocation5 + $0x160] sm:$0xff]
    %v2505 = vld [vmem:[#allocation5 + $0x168] sm:$0xff]
    %v2506 = vld [vmem:[#allocation5 + $0x170] sm:$0xff]
    %v2507 = vld [vmem:[#allocation5 + $0x178] sm:$0xff]
    %v2508 = vld [vmem:[#allocation5 + $0x180] sm:$0xff]
    %v2509 = vld [vmem:[#allocation5 + $0x188] sm:$0xff]
    %v2510 = vld [vmem:[#allocation5 + $0x190] sm:$0xff]
    %v2511 = vld [vmem:[#allocation5 + $0x198] sm:$0xff]
    %v2512 = vld [vmem:[#allocation5 + $0x1a0] sm:$0xff]
    %v2513 = vld [vmem:[#allocation5 + $0x1a8] sm:$0xff]
    %v2514 = vld [vmem:[#allocation5 + $0x1b0] sm:$0xff]
    %v2515 = vld [vmem:[#allocation5 + $0x1b8] sm:$0xff]
    %v2516 = vld [vmem:[#allocation5 + $0x1c0] sm:$0xff]
    %v2517 = vld [vmem:[#allocation5 + $0x1c8] sm:$0xff]
    %v2518 = vld [vmem:[#allocation5 + $0x1d0] sm:$0xff]
    %v2519 = vld [vmem:[#allocation5 + $0x1d8] sm:$0xff]
    %v2520 = vld [vmem:[#allocation5 + $0x1e0] sm:$0xff]
    %v2521 = vld [vmem:[#allocation5 + $0x1e8] sm:$0xff]
    %v2522 = vld [vmem:[#allocation5 + $0x1f0] sm:$0xff]
    %v2523 = vld [vmem:[#allocation5 + $0x1f8] sm:$0xff]
    %v2524 = vld [vmem:[#allocation5 + $0x200] sm:$0xff]
    %v2525 = vld [vmem:[#allocation5 + $0x208] sm:$0xff]
    %v2526 = vld [vmem:[#allocation5 + $0x210] sm:$0xff]
    %v2527 = vld [vmem:[#allocation5 + $0x218] sm:$0xff]
    %v2528 = vld [vmem:[#allocation5 + $0x220] sm:$0xff]
    %v2529 = vld [vmem:[#allocation5 + $0x228] sm:$0xff]
    %v2530 = vld [vmem:[#allocation5 + $0x230] sm:$0xff]
    %v2531 = vld [vmem:[#allocation5 + $0x238] sm:$0xff]
    %v2532 = vld [vmem:[#allocation5 + $0x240] sm:$0xff]
    %v2533 = vld [vmem:[#allocation5 + $0x248] sm:$0xff]
    %v2534 = vld [vmem:[#allocation5 + $0x250] sm:$0xff]
    %v2535 = vld [vmem:[#allocation5 + $0x258] sm:$0xff]
    %v2536 = vld [vmem:[#allocation5 + $0x260] sm:$0xff]
    %v2537 = vld [vmem:[#allocation5 + $0x268] sm:$0xff]
    %v2538 = vld [vmem:[#allocation5 + $0x270] sm:$0xff]
    %v2539 = vld [vmem:[#allocation5 + $0x278] sm:$0xff]
    %v2540 = vld [vmem:[#allocation5 + $0x280] sm:$0xff]
    %v2541 = vld [vmem:[#allocation5 + $0x288] sm:$0xff]
    %v2542 = vld [vmem:[#allocation5 + $0x290] sm:$0xff]
    %v2543 = vld [vmem:[#allocation5 + $0x298] sm:$0xff]
    %v2544 = vld [vmem:[#allocation5 + $0x2a0] sm:$0xff]
    %v2545 = vld [vmem:[#allocation5 + $0x2a8] sm:$0xff]
    %v2546 = vld [vmem:[#allocation5 + $0x2b0] sm:$0xff]
    %v2547 = vld [vmem:[#allocation5 + $0x2b8] sm:$0xff]
    %v2548 = vld [vmem:[#allocation5 + $0x2c0] sm:$0xff]
    %v2549 = vld [vmem:[#allocation5 + $0x2c8] sm:$0xff]
    %v2550 = vld [vmem:[#allocation5 + $0x2d0] sm:$0xff]
    %v2551 = vld [vmem:[#allocation5 + $0x2d8] sm:$0xff]
    %v2552 = vld [vmem:[#allocation5 + $0x2e0] sm:$0xff]
    %v2553 = vld [vmem:[#allocation5 + $0x2e8] sm:$0xff]
    %v2554 = vld [vmem:[#allocation5 + $0x2f0] sm:$0xff]
    %v2555 = vld [vmem:[#allocation5 + $0x2f8] sm:$0xff]
    %v2556 = vld [vmem:[#allocation5 + $0x300] sm:$0xff]
    %v2557 = vld [vmem:[#allocation5 + $0x308] sm:$0xff]
    %v2558 = vld [vmem:[#allocation5 + $0x310] sm:$0xff]
    %v2559 = vld [vmem:[#allocation5 + $0x318] sm:$0xff]
    %v2560 = vld [vmem:[#allocation5 + $0x320] sm:$0xff]
    %v2561 = vld [vmem:[#allocation5 + $0x328] sm:$0xff]
    %v2562 = vld [vmem:[#allocation5 + $0x330] sm:$0xff]
    %v2563 = vld [vmem:[#allocation5 + $0x338] sm:$0xff]
    %v2564 = vld [vmem:[#allocation5 + $0x340] sm:$0xff]
    %v2565 = vld [vmem:[#allocation5 + $0x348] sm:$0xff]
    %v2566 = vld [vmem:[#allocation5 + $0x350] sm:$0xff]
    %v2567 = vld [vmem:[#allocation5 + $0x358] sm:$0xff]
    %v2568 = vld [vmem:[#allocation5 + $0x360] sm:$0xff]
    %v2569 = vld [vmem:[#allocation5 + $0x368] sm:$0xff]
    %v2570 = vld [vmem:[#allocation5 + $0x370] sm:$0xff]
    %v2571 = vld [vmem:[#allocation5 + $0x378] sm:$0xff]
    %v2572 = vld [vmem:[#allocation5 + $0x380] sm:$0xff]
    %v2573 = vld [vmem:[#allocation5 + $0x388] sm:$0xff]
    %v2574 = vld [vmem:[#allocation5 + $0x390] sm:$0xff]
    %v2575 = vld [vmem:[#allocation5 + $0x398] sm:$0xff]
    %v2576 = vld [vmem:[#allocation5 + $0x3a0] sm:$0xff]
    %v2577 = vld [vmem:[#allocation5 + $0x3a8] sm:$0xff]
    %v2578 = vld [vmem:[#allocation5 + $0x3b0] sm:$0xff]
    %v2579 = vld [vmem:[#allocation5 + $0x3b8] sm:$0xff]
    %v2580 = vld [vmem:[#allocation5 + $0x3c0] sm:$0xff]
    %v2581 = vld [vmem:[#allocation5 + $0x3c8] sm:$0xff]
    %v2582 = vld [vmem:[#allocation5 + $0x3d0] sm:$0xff]
    %v2583 = vld [vmem:[#allocation5 + $0x3d8] sm:$0xff]
    %v2584 = vld [vmem:[#allocation5 + $0x3e0] sm:$0xff]
    %v2585 = vld [vmem:[#allocation5 + $0x3e8] sm:$0xff]
    %v2586 = vld [vmem:[#allocation5 + $0x3f0] sm:$0xff]
    %v2587 = vld [vmem:[#allocation5 + $0x3f8] sm:$0xff]
    %v2588 = vld [vmem:[#allocation15] sm:$0xf]
    %v2590 = vlaneseq
    %v2591 = vshrl.u32 %v2590, 7
    %v2592 = vsub.s32 0, %v2591
    %v2593 = vrot.slane %v2588, %v2592
    %v2594 = vlaneseq
    %v2595 = vshrl.u32 %v2594, 7
    %v2596 = vsub.s32 1, %v2595
    %v2597 = vrot.slane %v2588, %v2596
    %v2598 = vlaneseq
    %v2599 = vshrl.u32 %v2598, 7
    %v2600 = vsub.s32 2, %v2599
    %v2601 = vrot.slane %v2588, %v2600
    %v2602 = vlaneseq
    %v2603 = vshrl.u32 %v2602, 7
    %v2604 = vsub.s32 3, %v2603
    %v2605 = vrot.slane %v2588, %v2604
    %v2738 = vunpack.c.l.b16 %v2460
    %v2739 = vunpack.c.h.b16 %v2460
    %v2740 = vunpack.c.l.b16 %v2461
    %v2741 = vunpack.c.h.b16 %v2461
    %v2742 = vunpack.c.l.b16 %v2462
    %v2743 = vunpack.c.h.b16 %v2462
    %v2744 = vunpack.c.l.b16 %v2463
    %v2745 = vunpack.c.h.b16 %v2463
    %v2746 = vunpack.c.l.b16 %v2464
    %v2747 = vunpack.c.h.b16 %v2464
    %v2748 = vunpack.c.l.b16 %v2465
    %v2749 = vunpack.c.h.b16 %v2465
    %v2750 = vunpack.c.l.b16 %v2466
    %v2751 = vunpack.c.h.b16 %v2466
    %v2752 = vunpack.c.l.b16 %v2467
    %v2753 = vunpack.c.h.b16 %v2467
    %v2754 = vunpack.c.l.b16 %v2468
    %v2755 = vunpack.c.h.b16 %v2468
    %v2756 = vunpack.c.l.b16 %v2469
    %v2757 = vunpack.c.h.b16 %v2469
    %v2758 = vunpack.c.l.b16 %v2470
    %v2759 = vunpack.c.h.b16 %v2470
    %v2760 = vunpack.c.l.b16 %v2471
    %v2761 = vunpack.c.h.b16 %v2471
    %v2762 = vunpack.c.l.b16 %v2472
    %v2763 = vunpack.c.h.b16 %v2472
    %v2764 = vunpack.c.l.b16 %v2473
    %v2765 = vunpack.c.h.b16 %v2473
    %v2766 = vunpack.c.l.b16 %v2474
    %v2767 = vunpack.c.h.b16 %v2474
    %v2768 = vunpack.c.l.b16 %v2475
    %v2769 = vunpack.c.h.b16 %v2475
    %v2770 = vunpack.c.l.b16 %v2476
    %v2771 = vunpack.c.h.b16 %v2476
    %v2772 = vunpack.c.l.b16 %v2477
    %v2773 = vunpack.c.h.b16 %v2477
    %v2774 = vunpack.c.l.b16 %v2478
    %v2775 = vunpack.c.h.b16 %v2478
    %v2776 = vunpack.c.l.b16 %v2479
    %v2777 = vunpack.c.h.b16 %v2479
    %v2778 = vunpack.c.l.b16 %v2480
    %v2779 = vunpack.c.h.b16 %v2480
    %v2780 = vunpack.c.l.b16 %v2481
    %v2781 = vunpack.c.h.b16 %v2481
    %v2782 = vunpack.c.l.b16 %v2482
    %v2783 = vunpack.c.h.b16 %v2482
    %v2784 = vunpack.c.l.b16 %v2483
    %v2785 = vunpack.c.h.b16 %v2483
    %v2786 = vunpack.c.l.b16 %v2484
    %v2787 = vunpack.c.h.b16 %v2484
    %v2788 = vunpack.c.l.b16 %v2485
    %v2789 = vunpack.c.h.b16 %v2485
    %v2790 = vunpack.c.l.b16 %v2486
    %v2791 = vunpack.c.h.b16 %v2486
    %v2792 = vunpack.c.l.b16 %v2487
    %v2793 = vunpack.c.h.b16 %v2487
    %v2794 = vunpack.c.l.b16 %v2488
    %v2795 = vunpack.c.h.b16 %v2488
    %v2796 = vunpack.c.l.b16 %v2489
    %v2797 = vunpack.c.h.b16 %v2489
    %v2798 = vunpack.c.l.b16 %v2490
    %v2799 = vunpack.c.h.b16 %v2490
    %v2800 = vunpack.c.l.b16 %v2491
    %v2801 = vunpack.c.h.b16 %v2491
    %v2802 = vunpack.c.l.b16 %v2492
    %v2803 = vunpack.c.h.b16 %v2492
    %v2804 = vunpack.c.l.b16 %v2493
    %v2805 = vunpack.c.h.b16 %v2493
    %v2806 = vunpack.c.l.b16 %v2494
    %v2807 = vunpack.c.h.b16 %v2494
    %v2808 = vunpack.c.l.b16 %v2495
    %v2809 = vunpack.c.h.b16 %v2495
    %v2810 = vunpack.c.l.b16 %v2496
    %v2811 = vunpack.c.h.b16 %v2496
    %v2812 = vunpack.c.l.b16 %v2497
    %v2813 = vunpack.c.h.b16 %v2497
    %v2814 = vunpack.c.l.b16 %v2498
    %v2815 = vunpack.c.h.b16 %v2498
    %v2816 = vunpack.c.l.b16 %v2499
    %v2817 = vunpack.c.h.b16 %v2499
    %v2818 = vunpack.c.l.b16 %v2500
    %v2819 = vunpack.c.h.b16 %v2500
    %v2820 = vunpack.c.l.b16 %v2501
    %v2821 = vunpack.c.h.b16 %v2501
    %v2822 = vunpack.c.l.b16 %v2502
    %v2823 = vunpack.c.h.b16 %v2502
    %v2824 = vunpack.c.l.b16 %v2503
    %v2825 = vunpack.c.h.b16 %v2503
    %v2826 = vunpack.c.l.b16 %v2504
    %v2827 = vunpack.c.h.b16 %v2504
    %v2828 = vunpack.c.l.b16 %v2505
    %v2829 = vunpack.c.h.b16 %v2505
    %v2830 = vunpack.c.l.b16 %v2506
    %v2831 = vunpack.c.h.b16 %v2506
    %v2832 = vunpack.c.l.b16 %v2507
    %v2833 = vunpack.c.h.b16 %v2507
    %v2834 = vunpack.c.l.b16 %v2508
    %v2835 = vunpack.c.h.b16 %v2508
    %v2836 = vunpack.c.l.b16 %v2509
    %v2837 = vunpack.c.h.b16 %v2509
    %v2838 = vunpack.c.l.b16 %v2510
    %v2839 = vunpack.c.h.b16 %v2510
    %v2840 = vunpack.c.l.b16 %v2511
    %v2841 = vunpack.c.h.b16 %v2511
    %v2842 = vunpack.c.l.b16 %v2512
    %v2843 = vunpack.c.h.b16 %v2512
    %v2844 = vunpack.c.l.b16 %v2513
    %v2845 = vunpack.c.h.b16 %v2513
    %v2846 = vunpack.c.l.b16 %v2514
    %v2847 = vunpack.c.h.b16 %v2514
    %v2848 = vunpack.c.l.b16 %v2515
    %v2849 = vunpack.c.h.b16 %v2515
    %v2850 = vunpack.c.l.b16 %v2516
    %v2851 = vunpack.c.h.b16 %v2516
    %v2852 = vunpack.c.l.b16 %v2517
    %v2853 = vunpack.c.h.b16 %v2517
    %v2854 = vunpack.c.l.b16 %v2518
    %v2855 = vunpack.c.h.b16 %v2518
    %v2856 = vunpack.c.l.b16 %v2519
    %v2857 = vunpack.c.h.b16 %v2519
    %v2858 = vunpack.c.l.b16 %v2520
    %v2859 = vunpack.c.h.b16 %v2520
    %v2860 = vunpack.c.l.b16 %v2521
    %v2861 = vunpack.c.h.b16 %v2521
    %v2862 = vunpack.c.l.b16 %v2522
    %v2863 = vunpack.c.h.b16 %v2522
    %v2864 = vunpack.c.l.b16 %v2523
    %v2865 = vunpack.c.h.b16 %v2523
    %v2866 = vunpack.c.l.b16 %v2524
    %v2867 = vunpack.c.h.b16 %v2524
    %v2868 = vunpack.c.l.b16 %v2525
    %v2869 = vunpack.c.h.b16 %v2525
    %v2870 = vunpack.c.l.b16 %v2526
    %v2871 = vunpack.c.h.b16 %v2526
    %v2872 = vunpack.c.l.b16 %v2527
    %v2873 = vunpack.c.h.b16 %v2527
    %v2874 = vunpack.c.l.b16 %v2528
    %v2875 = vunpack.c.h.b16 %v2528
    %v2876 = vunpack.c.l.b16 %v2529
    %v2877 = vunpack.c.h.b16 %v2529
    %v2878 = vunpack.c.l.b16 %v2530
    %v2879 = vunpack.c.h.b16 %v2530
    %v2880 = vunpack.c.l.b16 %v2531
    %v2881 = vunpack.c.h.b16 %v2531
    %v2882 = vunpack.c.l.b16 %v2532
    %v2883 = vunpack.c.h.b16 %v2532
    %v2884 = vunpack.c.l.b16 %v2533
    %v2885 = vunpack.c.h.b16 %v2533
    %v2886 = vunpack.c.l.b16 %v2534
    %v2887 = vunpack.c.h.b16 %v2534
    %v2888 = vunpack.c.l.b16 %v2535
    %v2889 = vunpack.c.h.b16 %v2535
    %v2890 = vunpack.c.l.b16 %v2536
    %v2891 = vunpack.c.h.b16 %v2536
    %v2892 = vunpack.c.l.b16 %v2537
    %v2893 = vunpack.c.h.b16 %v2537
    %v2894 = vunpack.c.l.b16 %v2538
    %v2895 = vunpack.c.h.b16 %v2538
    %v2896 = vunpack.c.l.b16 %v2539
    %v2897 = vunpack.c.h.b16 %v2539
    %v2898 = vunpack.c.l.b16 %v2540
    %v2899 = vunpack.c.h.b16 %v2540
    %v2900 = vunpack.c.l.b16 %v2541
    %v2901 = vunpack.c.h.b16 %v2541
    %v2902 = vunpack.c.l.b16 %v2542
    %v2903 = vunpack.c.h.b16 %v2542
    %v2904 = vunpack.c.l.b16 %v2543
    %v2905 = vunpack.c.h.b16 %v2543
    %v2906 = vunpack.c.l.b16 %v2544
    %v2907 = vunpack.c.h.b16 %v2544
    %v2908 = vunpack.c.l.b16 %v2545
    %v2909 = vunpack.c.h.b16 %v2545
    %v2910 = vunpack.c.l.b16 %v2546
    %v2911 = vunpack.c.h.b16 %v2546
    %v2912 = vunpack.c.l.b16 %v2547
    %v2913 = vunpack.c.h.b16 %v2547
    %v2914 = vunpack.c.l.b16 %v2548
    %v2915 = vunpack.c.h.b16 %v2548
    %v2916 = vunpack.c.l.b16 %v2549
    %v2917 = vunpack.c.h.b16 %v2549
    %v2918 = vunpack.c.l.b16 %v2550
    %v2919 = vunpack.c.h.b16 %v2550
    %v2920 = vunpack.c.l.b16 %v2551
    %v2921 = vunpack.c.h.b16 %v2551
    %v2922 = vunpack.c.l.b16 %v2552
    %v2923 = vunpack.c.h.b16 %v2552
    %v2924 = vunpack.c.l.b16 %v2553
    %v2925 = vunpack.c.h.b16 %v2553
    %v2926 = vunpack.c.l.b16 %v2554
    %v2927 = vunpack.c.h.b16 %v2554
    %v2928 = vunpack.c.l.b16 %v2555
    %v2929 = vunpack.c.h.b16 %v2555
    %v2930 = vunpack.c.l.b16 %v2556
    %v2931 = vunpack.c.h.b16 %v2556
    %v2932 = vunpack.c.l.b16 %v2557
    %v2933 = vunpack.c.h.b16 %v2557
    %v2934 = vunpack.c.l.b16 %v2558
    %v2935 = vunpack.c.h.b16 %v2558
    %v2936 = vunpack.c.l.b16 %v2559
    %v2937 = vunpack.c.h.b16 %v2559
    %v2938 = vunpack.c.l.b16 %v2560
    %v2939 = vunpack.c.h.b16 %v2560
    %v2940 = vunpack.c.l.b16 %v2561
    %v2941 = vunpack.c.h.b16 %v2561
    %v2942 = vunpack.c.l.b16 %v2562
    %v2943 = vunpack.c.h.b16 %v2562
    %v2944 = vunpack.c.l.b16 %v2563
    %v2945 = vunpack.c.h.b16 %v2563
    %v2946 = vunpack.c.l.b16 %v2564
    %v2947 = vunpack.c.h.b16 %v2564
    %v2948 = vunpack.c.l.b16 %v2565
    %v2949 = vunpack.c.h.b16 %v2565
    %v2950 = vunpack.c.l.b16 %v2566
    %v2951 = vunpack.c.h.b16 %v2566
    %v2952 = vunpack.c.l.b16 %v2567
    %v2953 = vunpack.c.h.b16 %v2567
    %v2954 = vunpack.c.l.b16 %v2568
    %v2955 = vunpack.c.h.b16 %v2568
    %v2956 = vunpack.c.l.b16 %v2569
    %v2957 = vunpack.c.h.b16 %v2569
    %v2958 = vunpack.c.l.b16 %v2570
    %v2959 = vunpack.c.h.b16 %v2570
    %v2960 = vunpack.c.l.b16 %v2571
    %v2961 = vunpack.c.h.b16 %v2571
    %v2962 = vunpack.c.l.b16 %v2572
    %v2963 = vunpack.c.h.b16 %v2572
    %v2964 = vunpack.c.l.b16 %v2573
    %v2965 = vunpack.c.h.b16 %v2573
    %v2966 = vunpack.c.l.b16 %v2574
    %v2967 = vunpack.c.h.b16 %v2574
    %v2968 = vunpack.c.l.b16 %v2575
    %v2969 = vunpack.c.h.b16 %v2575
    %v2970 = vunpack.c.l.b16 %v2576
    %v2971 = vunpack.c.h.b16 %v2576
    %v2972 = vunpack.c.l.b16 %v2577
    %v2973 = vunpack.c.h.b16 %v2577
    %v2974 = vunpack.c.l.b16 %v2578
    %v2975 = vunpack.c.h.b16 %v2578
    %v2976 = vunpack.c.l.b16 %v2579
    %v2977 = vunpack.c.h.b16 %v2579
    %v2978 = vunpack.c.l.b16 %v2580
    %v2979 = vunpack.c.h.b16 %v2580
    %v2980 = vunpack.c.l.b16 %v2581
    %v2981 = vunpack.c.h.b16 %v2581
    %v2982 = vunpack.c.l.b16 %v2582
    %v2983 = vunpack.c.h.b16 %v2582
    %v2984 = vunpack.c.l.b16 %v2583
    %v2985 = vunpack.c.h.b16 %v2583
    %v2986 = vunpack.c.l.b16 %v2584
    %v2987 = vunpack.c.h.b16 %v2584
    %v2988 = vunpack.c.l.b16 %v2585
    %v2989 = vunpack.c.h.b16 %v2585
    %v2990 = vunpack.c.l.b16 %v2586
    %v2991 = vunpack.c.h.b16 %v2586
    %v2992 = vunpack.c.l.b16 %v2587
    %v2993 = vunpack.c.h.b16 %v2587
    %v2994 = vpack.c.b16 %v2742, %v2738
    %v2995 = vpack.c.b16 %v2743, %v2739
    %v2996 = vpack.c.b16 %v2744, %v2740
    %v2997 = vpack.c.b16 %v2745, %v2741
    %v2998 = vpack.c.b16 %v2750, %v2746
    %v2999 = vpack.c.b16 %v2751, %v2747
    %v3000 = vpack.c.b16 %v2752, %v2748
    %v3001 = vpack.c.b16 %v2753, %v2749
    %v3002 = vpack.c.b16 %v2758, %v2754
    %v3003 = vpack.c.b16 %v2759, %v2755
    %v3004 = vpack.c.b16 %v2760, %v2756
    %v3005 = vpack.c.b16 %v2761, %v2757
    %v3006 = vpack.c.b16 %v2766, %v2762
    %v3007 = vpack.c.b16 %v2767, %v2763
    %v3008 = vpack.c.b16 %v2768, %v2764
    %v3009 = vpack.c.b16 %v2769, %v2765
    %v3010 = vpack.c.b16 %v2774, %v2770
    %v3011 = vpack.c.b16 %v2775, %v2771
    %v3012 = vpack.c.b16 %v2776, %v2772
    %v3013 = vpack.c.b16 %v2777, %v2773
    %v3014 = vpack.c.b16 %v2782, %v2778
    %v3015 = vpack.c.b16 %v2783, %v2779
    %v3016 = vpack.c.b16 %v2784, %v2780
    %v3017 = vpack.c.b16 %v2785, %v2781
    %v3018 = vpack.c.b16 %v2790, %v2786
    %v3019 = vpack.c.b16 %v2791, %v2787
    %v3020 = vpack.c.b16 %v2792, %v2788
    %v3021 = vpack.c.b16 %v2793, %v2789
    %v3022 = vpack.c.b16 %v2798, %v2794
    %v3023 = vpack.c.b16 %v2799, %v2795
    %v3024 = vpack.c.b16 %v2800, %v2796
    %v3025 = vpack.c.b16 %v2801, %v2797
    %v3026 = vpack.c.b16 %v2806, %v2802
    %v3027 = vpack.c.b16 %v2807, %v2803
    %v3028 = vpack.c.b16 %v2808, %v2804
    %v3029 = vpack.c.b16 %v2809, %v2805
    %v3030 = vpack.c.b16 %v2814, %v2810
    %v3031 = vpack.c.b16 %v2815, %v2811
    %v3032 = vpack.c.b16 %v2816, %v2812
    %v3033 = vpack.c.b16 %v2817, %v2813
    %v3034 = vpack.c.b16 %v2822, %v2818
    %v3035 = vpack.c.b16 %v2823, %v2819
    %v3036 = vpack.c.b16 %v2824, %v2820
    %v3037 = vpack.c.b16 %v2825, %v2821
    %v3038 = vpack.c.b16 %v2830, %v2826
    %v3039 = vpack.c.b16 %v2831, %v2827
    %v3040 = vpack.c.b16 %v2832, %v2828
    %v3041 = vpack.c.b16 %v2833, %v2829
    %v3042 = vpack.c.b16 %v2838, %v2834
    %v3043 = vpack.c.b16 %v2839, %v2835
    %v3044 = vpack.c.b16 %v2840, %v2836
    %v3045 = vpack.c.b16 %v2841, %v2837
    %v3046 = vpack.c.b16 %v2846, %v2842
    %v3047 = vpack.c.b16 %v2847, %v2843
    %v3048 = vpack.c.b16 %v2848, %v2844
    %v3049 = vpack.c.b16 %v2849, %v2845
    %v3050 = vpack.c.b16 %v2854, %v2850
    %v3051 = vpack.c.b16 %v2855, %v2851
    %v3052 = vpack.c.b16 %v2856, %v2852
    %v3053 = vpack.c.b16 %v2857, %v2853
    %v3054 = vpack.c.b16 %v2862, %v2858
    %v3055 = vpack.c.b16 %v2863, %v2859
    %v3056 = vpack.c.b16 %v2864, %v2860
    %v3057 = vpack.c.b16 %v2865, %v2861
    %v3058 = vpack.c.b16 %v2870, %v2866
    %v3059 = vpack.c.b16 %v2871, %v2867
    %v3060 = vpack.c.b16 %v2872, %v2868
    %v3061 = vpack.c.b16 %v2873, %v2869
    %v3062 = vpack.c.b16 %v2878, %v2874
    %v3063 = vpack.c.b16 %v2879, %v2875
    %v3064 = vpack.c.b16 %v2880, %v2876
    %v3065 = vpack.c.b16 %v2881, %v2877
    %v3066 = vpack.c.b16 %v2886, %v2882
    %v3067 = vpack.c.b16 %v2887, %v2883
    %v3068 = vpack.c.b16 %v2888, %v2884
    %v3069 = vpack.c.b16 %v2889, %v2885
    %v3070 = vpack.c.b16 %v2894, %v2890
    %v3071 = vpack.c.b16 %v2895, %v2891
    %v3072 = vpack.c.b16 %v2896, %v2892
    %v3073 = vpack.c.b16 %v2897, %v2893
    %v3074 = vpack.c.b16 %v2902, %v2898
    %v3075 = vpack.c.b16 %v2903, %v2899
    %v3076 = vpack.c.b16 %v2904, %v2900
    %v3077 = vpack.c.b16 %v2905, %v2901
    %v3078 = vpack.c.b16 %v2910, %v2906
    %v3079 = vpack.c.b16 %v2911, %v2907
    %v3080 = vpack.c.b16 %v2912, %v2908
    %v3081 = vpack.c.b16 %v2913, %v2909
    %v3082 = vpack.c.b16 %v2918, %v2914
    %v3083 = vpack.c.b16 %v2919, %v2915
    %v3084 = vpack.c.b16 %v2920, %v2916
    %v3085 = vpack.c.b16 %v2921, %v2917
    %v3086 = vpack.c.b16 %v2926, %v2922
    %v3087 = vpack.c.b16 %v2927, %v2923
    %v3088 = vpack.c.b16 %v2928, %v2924
    %v3089 = vpack.c.b16 %v2929, %v2925
    %v3090 = vpack.c.b16 %v2934, %v2930
    %v3091 = vpack.c.b16 %v2935, %v2931
    %v3092 = vpack.c.b16 %v2936, %v2932
    %v3093 = vpack.c.b16 %v2937, %v2933
    %v3094 = vpack.c.b16 %v2942, %v2938
    %v3095 = vpack.c.b16 %v2943, %v2939
    %v3096 = vpack.c.b16 %v2944, %v2940
    %v3097 = vpack.c.b16 %v2945, %v2941
    %v3098 = vpack.c.b16 %v2950, %v2946
    %v3099 = vpack.c.b16 %v2951, %v2947
    %v3100 = vpack.c.b16 %v2952, %v2948
    %v3101 = vpack.c.b16 %v2953, %v2949
    %v3102 = vpack.c.b16 %v2958, %v2954
    %v3103 = vpack.c.b16 %v2959, %v2955
    %v3104 = vpack.c.b16 %v2960, %v2956
    %v3105 = vpack.c.b16 %v2961, %v2957
    %v3106 = vpack.c.b16 %v2966, %v2962
    %v3107 = vpack.c.b16 %v2967, %v2963
    %v3108 = vpack.c.b16 %v2968, %v2964
    %v3109 = vpack.c.b16 %v2969, %v2965
    %v3110 = vpack.c.b16 %v2974, %v2970
    %v3111 = vpack.c.b16 %v2975, %v2971
    %v3112 = vpack.c.b16 %v2976, %v2972
    %v3113 = vpack.c.b16 %v2977, %v2973
    %v3114 = vpack.c.b16 %v2982, %v2978
    %v3115 = vpack.c.b16 %v2983, %v2979
    %v3116 = vpack.c.b16 %v2984, %v2980
    %v3117 = vpack.c.b16 %v2985, %v2981
    %v3118 = vpack.c.b16 %v2990, %v2986
    %v3119 = vpack.c.b16 %v2991, %v2987
    %v3120 = vpack.c.b16 %v2992, %v2988
    %v3121 = vpack.c.b16 %v2993, %v2989
    %3250 = vmatprep.subr.bf16.mxu0 %v3023
    %3251 = vmatpush1.bf16.msra.mxu0 %v3022
    %3252 = vmatprep.subr.bf16.mxu0 %v3019
    %3253 = vmatpush1.bf16.msra.mxu0 %v3018
    %3254 = vmatprep.subr.bf16.mxu0 %v3015
    %3255 = vmatpush1.bf16.msra.mxu0 %v3014
    %3256 = vmatprep.subr.bf16.mxu0 %v3011
    %3257 = vmatpush1.bf16.msra.mxu0 %v3010
    %3258 = vmatprep.subr.bf16.mxu0 %v3007
    %3259 = vmatpush1.bf16.msra.mxu0 %v3006
    %3260 = vmatprep.subr.bf16.mxu0 %v3003
    %3261 = vmatpush1.bf16.msra.mxu0 %v3002
    %3262 = vmatprep.subr.bf16.mxu0 %v2999
    %3263 = vmatpush1.bf16.msra.mxu0 %v2998
    %3264 = vmatprep.subr.bf16.mxu0 %v2995
    %3265 = vmatpush1.bf16.msra.mxu0 %v2994
    %3266 = vmatprep.subr.bf16.mxu0 %v3055
    %3267 = vmatpush2.bf16.msra.mxu0 %v3054
    %3268 = vmatprep.subr.bf16.mxu0 %v3051
    %3269 = vmatpush2.bf16.msra.mxu0 %v3050
    %3270 = vmatprep.subr.bf16.mxu0 %v3047
    %3271 = vmatpush2.bf16.msra.mxu0 %v3046
    %3272 = vmatprep.subr.bf16.mxu0 %v3043
    %3273 = vmatpush2.bf16.msra.mxu0 %v3042
    %3274 = vmatprep.subr.bf16.mxu0 %v3039
    %3275 = vmatpush2.bf16.msra.mxu0 %v3038
    %3276 = vmatprep.subr.bf16.mxu0 %v3035
    %3277 = vmatpush2.bf16.msra.mxu0 %v3034
    %3278 = vmatprep.subr.bf16.mxu0 %v3031
    %3279 = vmatpush2.bf16.msra.mxu0 %v3030
    %3280 = vmatprep.subr.bf16.mxu0 %v3027
    %3281 = vmatpush2.bf16.msra.mxu0 %v3026
    %3282 = vmatprep.mubr.bf16.mxu0 %v2457
    %3283 = vmatmul.mubr.bf16.gmra.mxu0 %v2456
    %v3284 = vpop.f32.mrf.mxu0
    %v3285 = vadd.f32 %v2593, %v3284
    %v3286 = vpop.f32.mrf.mxu0
    %v3287 = vadd.f32 %v2597, %v3286
    %v3288 = vpop.f32.mrf.mxu0
    %v3289 = vpop.f32.mrf.mxu0
    %3290 = vdwg.mxu0
    %3291 = vmatprep.subr.bf16.mxu0 %v3087
    %3292 = vmatpush1.bf16.msra.mxu0 %v3086
    %3293 = vmatprep.subr.bf16.mxu0 %v3083
    %3294 = vmatpush1.bf16.msra.mxu0 %v3082
    %3295 = vmatprep.subr.bf16.mxu0 %v3079
    %3296 = vmatpush1.bf16.msra.mxu0 %v3078
    %3297 = vmatprep.subr.bf16.mxu0 %v3075
    %3298 = vmatpush1.bf16.msra.mxu0 %v3074
    %3299 = vmatprep.subr.bf16.mxu0 %v3071
    %3300 = vmatpush1.bf16.msra.mxu0 %v3070
    %3301 = vmatprep.subr.bf16.mxu0 %v3067
    %3302 = vmatpush1.bf16.msra.mxu0 %v3066
    %3303 = vmatprep.subr.bf16.mxu0 %v3063
    %3304 = vmatpush1.bf16.msra.mxu0 %v3062
    %3305 = vmatprep.subr.bf16.mxu0 %v3059
    %3306 = vmatpush1.bf16.msra.mxu0 %v3058
    %3307 = vmatprep.subr.bf16.mxu0 %v3119
    %3308 = vmatpush2.bf16.msra.mxu0 %v3118
    %3309 = vmatprep.subr.bf16.mxu0 %v3115
    %3310 = vmatpush2.bf16.msra.mxu0 %v3114
    %3311 = vmatprep.subr.bf16.mxu0 %v3111
    %3312 = vmatpush2.bf16.msra.mxu0 %v3110
    %3313 = vmatprep.subr.bf16.mxu0 %v3107
    %3314 = vmatpush2.bf16.msra.mxu0 %v3106
    %3315 = vmatprep.subr.bf16.mxu0 %v3103
    %3316 = vmatpush2.bf16.msra.mxu0 %v3102
    %3317 = vmatprep.subr.bf16.mxu0 %v3099
    %3318 = vmatpush2.bf16.msra.mxu0 %v3098
    %3319 = vmatprep.subr.bf16.mxu0 %v3095
    %3320 = vmatpush2.bf16.msra.mxu0 %v3094
    %3321 = vmatprep.subr.bf16.mxu0 %v3091
    %3322 = vmatpush2.bf16.msra.mxu0 %v3090
    %3323 = vmatprep.mubr.bf16.mxu0 %v2459
    %3324 = vmatmul.mubr.bf16.gmra.mxu0 %v2458
    %v3325 = vpop.f32.mrf.mxu0
    %v3326 = vadd.f32 %v3285, %v3325
    %v3327 = vpop.f32.mrf.mxu0
    %v3328 = vadd.f32 %v3287, %v3327
    %v3329 = vpop.f32.mrf.mxu0
    %v3330 = vpop.f32.mrf.mxu0
    %3331 = vdwg.mxu0
    %3332 = vmatprep.subr.bf16.mxu0 %v3025
    %3333 = vmatpush1.bf16.msra.mxu0 %v3024
    %3334 = vmatprep.subr.bf16.mxu0 %v3021
    %3335 = vmatpush1.bf16.msra.mxu0 %v3020
    %3336 = vmatprep.subr.bf16.mxu0 %v3017
    %3337 = vmatpush1.bf16.msra.mxu0 %v3016
    %3338 = vmatprep.subr.bf16.mxu0 %v3013
    %3339 = vmatpush1.bf16.msra.mxu0 %v3012
    %3340 = vmatprep.subr.bf16.mxu0 %v3009
    %3341 = vmatpush1.bf16.msra.mxu0 %v3008
    %3342 = vmatprep.subr.bf16.mxu0 %v3005
    %3343 = vmatpush1.bf16.msra.mxu0 %v3004
    %3344 = vmatprep.subr.bf16.mxu0 %v3001
    %3345 = vmatpush1.bf16.msra.mxu0 %v3000
    %3346 = vmatprep.subr.bf16.mxu0 %v2997
    %3347 = vmatpush1.bf16.msra.mxu0 %v2996
    %3348 = vmatprep.subr.bf16.mxu0 %v3057
    %3349 = vmatpush2.bf16.msra.mxu0 %v3056
    %3350 = vmatprep.subr.bf16.mxu0 %v3053
    %3351 = vmatpush2.bf16.msra.mxu0 %v3052
    %3352 = vmatprep.subr.bf16.mxu0 %v3049
    %3353 = vmatpush2.bf16.msra.mxu0 %v3048
    %3354 = vmatprep.subr.bf16.mxu0 %v3045
    %3355 = vmatpush2.bf16.msra.mxu0 %v3044
    %3356 = vmatprep.subr.bf16.mxu0 %v3041
    %3357 = vmatpush2.bf16.msra.mxu0 %v3040
    %3358 = vmatprep.subr.bf16.mxu0 %v3037
    %3359 = vmatpush2.bf16.msra.mxu0 %v3036
    %3360 = vmatprep.subr.bf16.mxu0 %v3033
    %3361 = vmatpush2.bf16.msra.mxu0 %v3032
    %3362 = vmatprep.subr.bf16.mxu0 %v3029
    %3363 = vmatpush2.bf16.msra.mxu0 %v3028
    %3364 = vmatprep.mubr.bf16.mxu0 %v2457
    %3365 = vmatmul.mubr.bf16.gmra.mxu0 %v2456
    %v3366 = vpop.f32.mrf.mxu0
    %v3367 = vadd.f32 %v2601, %v3366
    %v3368 = vpop.f32.mrf.mxu0
    %v3369 = vadd.f32 %v2605, %v3368
    %v3370 = vpop.f32.mrf.mxu0
    %v3371 = vpop.f32.mrf.mxu0
    %3372 = vdwg.mxu0
    %3373 = vmatprep.subr.bf16.mxu0 %v3089
    %3374 = vmatpush1.bf16.msra.mxu0 %v3088
    %3375 = vmatprep.subr.bf16.mxu0 %v3085
    %3376 = vmatpush1.bf16.msra.mxu0 %v3084
    %3377 = vmatprep.subr.bf16.mxu0 %v3081
    %3378 = vmatpush1.bf16.msra.mxu0 %v3080
    %3379 = vmatprep.subr.bf16.mxu0 %v3077
    %3380 = vmatpush1.bf16.msra.mxu0 %v3076
    %3381 = vmatprep.subr.bf16.mxu0 %v3073
    %3382 = vmatpush1.bf16.msra.mxu0 %v3072
    %3383 = vmatprep.subr.bf16.mxu0 %v3069
    %3384 = vmatpush1.bf16.msra.mxu0 %v3068
    %3385 = vmatprep.subr.bf16.mxu0 %v3065
    %3386 = vmatpush1.bf16.msra.mxu0 %v3064
    %3387 = vmatprep.subr.bf16.mxu0 %v3061
    %3388 = vmatpush1.bf16.msra.mxu0 %v3060
    %3389 = vmatprep.subr.bf16.mxu0 %v3121
    %3390 = vmatpush2.bf16.msra.mxu0 %v3120
    %3391 = vmatprep.subr.bf16.mxu0 %v3117
    %3392 = vmatpush2.bf16.msra.mxu0 %v3116
    %3393 = vmatprep.subr.bf16.mxu0 %v3113
    %3394 = vmatpush2.bf16.msra.mxu0 %v3112
    %3395 = vmatprep.subr.bf16.mxu0 %v3109
    %3396 = vmatpush2.bf16.msra.mxu0 %v3108
    %3397 = vmatprep.subr.bf16.mxu0 %v3105
    %3398 = vmatpush2.bf16.msra.mxu0 %v3104
    %3399 = vmatprep.subr.bf16.mxu0 %v3101
    %3400 = vmatpush2.bf16.msra.mxu0 %v3100
    %3401 = vmatprep.subr.bf16.mxu0 %v3097
    %3402 = vmatpush2.bf16.msra.mxu0 %v3096
    %3403 = vmatprep.subr.bf16.mxu0 %v3093
    %3404 = vmatpush2.bf16.msra.mxu0 %v3092
    %3405 = vmatprep.mubr.bf16.mxu0 %v2459
    %3406 = vmatmul.mubr.bf16.gmra.mxu0 %v2458
    %v3407 = vpop.f32.mrf.mxu0
    %v3408 = vadd.f32 %v3367, %v3407
    %v3409 = vpop.f32.mrf.mxu0
    %v3410 = vadd.f32 %v3369, %v3409
    %v3411 = vpop.f32.mrf.mxu0
    %v3412 = vpop.f32.mrf.mxu0
    %3413 = vdwg.mxu0
    %v3414 = vmax.f32 %v3326, 0.0
    %v3415 = vmax.f32 %v3328, 0.0
    %v3416 = vmax.f32 %v3408, 0.0
    %v3417 = vmax.f32 %v3410, 0.0
    %v3418 = vpack.c.bf16 %v3414, %v3414
    %v3419 = vpack.c.bf16 %v3415, %v3415
    %v3420 = vpack.c.bf16 %v3416, %v3416
    %v3421 = vpack.c.bf16 %v3417, %v3417
    %s3422 = scalar_lea.vmem [#allocation5], 1024
    %v3423 = vld [vmem:[%s3422] sm:$0xff]
    %v3424 = vld [vmem:[%s3422 + $0x8] sm:$0xff]
    %v3425 = vld [vmem:[%s3422 + $0x10] sm:$0xff]
    %v3426 = vld [vmem:[%s3422 + $0x18] sm:$0xff]
    %v3427 = vld [vmem:[%s3422 + $0x20] sm:$0xff]
    %v3428 = vld [vmem:[%s3422 + $0x28] sm:$0xff]
    %v3429 = vld [vmem:[%s3422 + $0x30] sm:$0xff]
    %v3430 = vld [vmem:[%s3422 + $0x38] sm:$0xff]
    %v3431 = vld [vmem:[%s3422 + $0x40] sm:$0xff]
    %v3432 = vld [vmem:[%s3422 + $0x48] sm:$0xff]
    %v3433 = vld [vmem:[%s3422 + $0x50] sm:$0xff]
    %v3434 = vld [vmem:[%s3422 + $0x58] sm:$0xff]
    %v3435 = vld [vmem:[%s3422 + $0x60] sm:$0xff]
    %v3436 = vld [vmem:[%s3422 + $0x68] sm:$0xff]
    %v3437 = vld [vmem:[%s3422 + $0x70] sm:$0xff]
    %v3438 = vld [vmem:[%s3422 + $0x78] sm:$0xff]
    %v3439 = vld [vmem:[%s3422 + $0x80] sm:$0xff]
    %v3440 = vld [vmem:[%s3422 + $0x88] sm:$0xff]
    %v3441 = vld [vmem:[%s3422 + $0x90] sm:$0xff]
    %v3442 = vld [vmem:[%s3422 + $0x98] sm:$0xff]
    %v3443 = vld [vmem:[%s3422 + $0xa0] sm:$0xff]
    %v3444 = vld [vmem:[%s3422 + $0xa8] sm:$0xff]
    %v3445 = vld [vmem:[%s3422 + $0xb0] sm:$0xff]
    %v3446 = vld [vmem:[%s3422 + $0xb8] sm:$0xff]
    %v3447 = vld [vmem:[%s3422 + $0xc0] sm:$0xff]
    %v3448 = vld [vmem:[%s3422 + $0xc8] sm:$0xff]
    %v3449 = vld [vmem:[%s3422 + $0xd0] sm:$0xff]
    %v3450 = vld [vmem:[%s3422 + $0xd8] sm:$0xff]
    %v3451 = vld [vmem:[%s3422 + $0xe0] sm:$0xff]
    %v3452 = vld [vmem:[%s3422 + $0xe8] sm:$0xff]
    %v3453 = vld [vmem:[%s3422 + $0xf0] sm:$0xff]
    %v3454 = vld [vmem:[%s3422 + $0xf8] sm:$0xff]
    %v3455 = vld [vmem:[%s3422 + $0x100] sm:$0xff]
    %v3456 = vld [vmem:[%s3422 + $0x108] sm:$0xff]
    %v3457 = vld [vmem:[%s3422 + $0x110] sm:$0xff]
    %v3458 = vld [vmem:[%s3422 + $0x118] sm:$0xff]
    %v3459 = vld [vmem:[%s3422 + $0x120] sm:$0xff]
    %v3460 = vld [vmem:[%s3422 + $0x128] sm:$0xff]
    %v3461 = vld [vmem:[%s3422 + $0x130] sm:$0xff]
    %v3462 = vld [vmem:[%s3422 + $0x138] sm:$0xff]
    %v3463 = vld [vmem:[%s3422 + $0x140] sm:$0xff]
    %v3464 = vld [vmem:[%s3422 + $0x148] sm:$0xff]
    %v3465 = vld [vmem:[%s3422 + $0x150] sm:$0xff]
    %v3466 = vld [vmem:[%s3422 + $0x158] sm:$0xff]
    %v3467 = vld [vmem:[%s3422 + $0x160] sm:$0xff]
    %v3468 = vld [vmem:[%s3422 + $0x168] sm:$0xff]
    %v3469 = vld [vmem:[%s3422 + $0x170] sm:$0xff]
    %v3470 = vld [vmem:[%s3422 + $0x178] sm:$0xff]
    %v3471 = vld [vmem:[%s3422 + $0x180] sm:$0xff]
    %v3472 = vld [vmem:[%s3422 + $0x188] sm:$0xff]
    %v3473 = vld [vmem:[%s3422 + $0x190] sm:$0xff]
    %v3474 = vld [vmem:[%s3422 + $0x198] sm:$0xff]
    %v3475 = vld [vmem:[%s3422 + $0x1a0] sm:$0xff]
    %v3476 = vld [vmem:[%s3422 + $0x1a8] sm:$0xff]
    %v3477 = vld [vmem:[%s3422 + $0x1b0] sm:$0xff]
    %v3478 = vld [vmem:[%s3422 + $0x1b8] sm:$0xff]
    %v3479 = vld [vmem:[%s3422 + $0x1c0] sm:$0xff]
    %v3480 = vld [vmem:[%s3422 + $0x1c8] sm:$0xff]
    %v3481 = vld [vmem:[%s3422 + $0x1d0] sm:$0xff]
    %v3482 = vld [vmem:[%s3422 + $0x1d8] sm:$0xff]
    %v3483 = vld [vmem:[%s3422 + $0x1e0] sm:$0xff]
    %v3484 = vld [vmem:[%s3422 + $0x1e8] sm:$0xff]
    %v3485 = vld [vmem:[%s3422 + $0x1f0] sm:$0xff]
    %v3486 = vld [vmem:[%s3422 + $0x1f8] sm:$0xff]
    %v3487 = vld [vmem:[%s3422 + $0x200] sm:$0xff]
    %v3488 = vld [vmem:[%s3422 + $0x208] sm:$0xff]
    %v3489 = vld [vmem:[%s3422 + $0x210] sm:$0xff]
    %v3490 = vld [vmem:[%s3422 + $0x218] sm:$0xff]
    %v3491 = vld [vmem:[%s3422 + $0x220] sm:$0xff]
    %v3492 = vld [vmem:[%s3422 + $0x228] sm:$0xff]
    %v3493 = vld [vmem:[%s3422 + $0x230] sm:$0xff]
    %v3494 = vld [vmem:[%s3422 + $0x238] sm:$0xff]
    %v3495 = vld [vmem:[%s3422 + $0x240] sm:$0xff]
    %v3496 = vld [vmem:[%s3422 + $0x248] sm:$0xff]
    %v3497 = vld [vmem:[%s3422 + $0x250] sm:$0xff]
    %v3498 = vld [vmem:[%s3422 + $0x258] sm:$0xff]
    %v3499 = vld [vmem:[%s3422 + $0x260] sm:$0xff]
    %v3500 = vld [vmem:[%s3422 + $0x268] sm:$0xff]
    %v3501 = vld [vmem:[%s3422 + $0x270] sm:$0xff]
    %v3502 = vld [vmem:[%s3422 + $0x278] sm:$0xff]
    %v3503 = vld [vmem:[%s3422 + $0x280] sm:$0xff]
    %v3504 = vld [vmem:[%s3422 + $0x288] sm:$0xff]
    %v3505 = vld [vmem:[%s3422 + $0x290] sm:$0xff]
    %v3506 = vld [vmem:[%s3422 + $0x298] sm:$0xff]
    %v3507 = vld [vmem:[%s3422 + $0x2a0] sm:$0xff]
    %v3508 = vld [vmem:[%s3422 + $0x2a8] sm:$0xff]
    %v3509 = vld [vmem:[%s3422 + $0x2b0] sm:$0xff]
    %v3510 = vld [vmem:[%s3422 + $0x2b8] sm:$0xff]
    %v3511 = vld [vmem:[%s3422 + $0x2c0] sm:$0xff]
    %v3512 = vld [vmem:[%s3422 + $0x2c8] sm:$0xff]
    %v3513 = vld [vmem:[%s3422 + $0x2d0] sm:$0xff]
    %v3514 = vld [vmem:[%s3422 + $0x2d8] sm:$0xff]
    %v3515 = vld [vmem:[%s3422 + $0x2e0] sm:$0xff]
    %v3516 = vld [vmem:[%s3422 + $0x2e8] sm:$0xff]
    %v3517 = vld [vmem:[%s3422 + $0x2f0] sm:$0xff]
    %v3518 = vld [vmem:[%s3422 + $0x2f8] sm:$0xff]
    %v3519 = vld [vmem:[%s3422 + $0x300] sm:$0xff]
    %v3520 = vld [vmem:[%s3422 + $0x308] sm:$0xff]
    %v3521 = vld [vmem:[%s3422 + $0x310] sm:$0xff]
    %v3522 = vld [vmem:[%s3422 + $0x318] sm:$0xff]
    %v3523 = vld [vmem:[%s3422 + $0x320] sm:$0xff]
    %v3524 = vld [vmem:[%s3422 + $0x328] sm:$0xff]
    %v3525 = vld [vmem:[%s3422 + $0x330] sm:$0xff]
    %v3526 = vld [vmem:[%s3422 + $0x338] sm:$0xff]
    %v3527 = vld [vmem:[%s3422 + $0x340] sm:$0xff]
    %v3528 = vld [vmem:[%s3422 + $0x348] sm:$0xff]
    %v3529 = vld [vmem:[%s3422 + $0x350] sm:$0xff]
    %v3530 = vld [vmem:[%s3422 + $0x358] sm:$0xff]
    %v3531 = vld [vmem:[%s3422 + $0x360] sm:$0xff]
    %v3532 = vld [vmem:[%s3422 + $0x368] sm:$0xff]
    %v3533 = vld [vmem:[%s3422 + $0x370] sm:$0xff]
    %v3534 = vld [vmem:[%s3422 + $0x378] sm:$0xff]
    %v3535 = vld [vmem:[%s3422 + $0x380] sm:$0xff]
    %v3536 = vld [vmem:[%s3422 + $0x388] sm:$0xff]
    %v3537 = vld [vmem:[%s3422 + $0x390] sm:$0xff]
    %v3538 = vld [vmem:[%s3422 + $0x398] sm:$0xff]
    %v3539 = vld [vmem:[%s3422 + $0x3a0] sm:$0xff]
    %v3540 = vld [vmem:[%s3422 + $0x3a8] sm:$0xff]
    %v3541 = vld [vmem:[%s3422 + $0x3b0] sm:$0xff]
    %v3542 = vld [vmem:[%s3422 + $0x3b8] sm:$0xff]
    %v3543 = vld [vmem:[%s3422 + $0x3c0] sm:$0xff]
    %v3544 = vld [vmem:[%s3422 + $0x3c8] sm:$0xff]
    %v3545 = vld [vmem:[%s3422 + $0x3d0] sm:$0xff]
    %v3546 = vld [vmem:[%s3422 + $0x3d8] sm:$0xff]
    %v3547 = vld [vmem:[%s3422 + $0x3e0] sm:$0xff]
    %v3548 = vld [vmem:[%s3422 + $0x3e8] sm:$0xff]
    %v3549 = vld [vmem:[%s3422 + $0x3f0] sm:$0xff]
    %v3550 = vld [vmem:[%s3422 + $0x3f8] sm:$0xff]
    %s3551 = scalar_lea.vmem [#allocation15], 4
    %v3552 = vld [vmem:[%s3551] sm:$0xf]
    %v3554 = vlaneseq
    %v3555 = vshrl.u32 %v3554, 7
    %v3556 = vsub.s32 0, %v3555
    %v3557 = vrot.slane %v3552, %v3556
    %v3558 = vlaneseq
    %v3559 = vshrl.u32 %v3558, 7
    %v3560 = vsub.s32 1, %v3559
    %v3561 = vrot.slane %v3552, %v3560
    %v3562 = vlaneseq
    %v3563 = vshrl.u32 %v3562, 7
    %v3564 = vsub.s32 2, %v3563
    %v3565 = vrot.slane %v3552, %v3564
    %v3566 = vlaneseq
    %v3567 = vshrl.u32 %v3566, 7
    %v3568 = vsub.s32 3, %v3567
    %v3569 = vrot.slane %v3552, %v3568
    %v3702 = vunpack.c.l.b16 %v3423
    %v3703 = vunpack.c.h.b16 %v3423
    %v3704 = vunpack.c.l.b16 %v3424
    %v3705 = vunpack.c.h.b16 %v3424
    %v3706 = vunpack.c.l.b16 %v3425
    %v3707 = vunpack.c.h.b16 %v3425
    %v3708 = vunpack.c.l.b16 %v3426
    %v3709 = vunpack.c.h.b16 %v3426
    %v3710 = vunpack.c.l.b16 %v3427
    %v3711 = vunpack.c.h.b16 %v3427
    %v3712 = vunpack.c.l.b16 %v3428
    %v3713 = vunpack.c.h.b16 %v3428
    %v3714 = vunpack.c.l.b16 %v3429
    %v3715 = vunpack.c.h.b16 %v3429
    %v3716 = vunpack.c.l.b16 %v3430
    %v3717 = vunpack.c.h.b16 %v3430
    %v3718 = vunpack.c.l.b16 %v3431
    %v3719 = vunpack.c.h.b16 %v3431
    %v3720 = vunpack.c.l.b16 %v3432
    %v3721 = vunpack.c.h.b16 %v3432
    %v3722 = vunpack.c.l.b16 %v3433
    %v3723 = vunpack.c.h.b16 %v3433
    %v3724 = vunpack.c.l.b16 %v3434
    %v3725 = vunpack.c.h.b16 %v3434
    %v3726 = vunpack.c.l.b16 %v3435
    %v3727 = vunpack.c.h.b16 %v3435
    %v3728 = vunpack.c.l.b16 %v3436
    %v3729 = vunpack.c.h.b16 %v3436
    %v3730 = vunpack.c.l.b16 %v3437
    %v3731 = vunpack.c.h.b16 %v3437
    %v3732 = vunpack.c.l.b16 %v3438
    %v3733 = vunpack.c.h.b16 %v3438
    %v3734 = vunpack.c.l.b16 %v3439
    %v3735 = vunpack.c.h.b16 %v3439
    %v3736 = vunpack.c.l.b16 %v3440
    %v3737 = vunpack.c.h.b16 %v3440
    %v3738 = vunpack.c.l.b16 %v3441
    %v3739 = vunpack.c.h.b16 %v3441
    %v3740 = vunpack.c.l.b16 %v3442
    %v3741 = vunpack.c.h.b16 %v3442
    %v3742 = vunpack.c.l.b16 %v3443
    %v3743 = vunpack.c.h.b16 %v3443
    %v3744 = vunpack.c.l.b16 %v3444
    %v3745 = vunpack.c.h.b16 %v3444
    %v3746 = vunpack.c.l.b16 %v3445
    %v3747 = vunpack.c.h.b16 %v3445
    %v3748 = vunpack.c.l.b16 %v3446
    %v3749 = vunpack.c.h.b16 %v3446
    %v3750 = vunpack.c.l.b16 %v3447
    %v3751 = vunpack.c.h.b16 %v3447
    %v3752 = vunpack.c.l.b16 %v3448
    %v3753 = vunpack.c.h.b16 %v3448
    %v3754 = vunpack.c.l.b16 %v3449
    %v3755 = vunpack.c.h.b16 %v3449
    %v3756 = vunpack.c.l.b16 %v3450
    %v3757 = vunpack.c.h.b16 %v3450
    %v3758 = vunpack.c.l.b16 %v3451
    %v3759 = vunpack.c.h.b16 %v3451
    %v3760 = vunpack.c.l.b16 %v3452
    %v3761 = vunpack.c.h.b16 %v3452
    %v3762 = vunpack.c.l.b16 %v3453
    %v3763 = vunpack.c.h.b16 %v3453
    %v3764 = vunpack.c.l.b16 %v3454
    %v3765 = vunpack.c.h.b16 %v3454
    %v3766 = vunpack.c.l.b16 %v3455
    %v3767 = vunpack.c.h.b16 %v3455
    %v3768 = vunpack.c.l.b16 %v3456
    %v3769 = vunpack.c.h.b16 %v3456
    %v3770 = vunpack.c.l.b16 %v3457
    %v3771 = vunpack.c.h.b16 %v3457
    %v3772 = vunpack.c.l.b16 %v3458
    %v3773 = vunpack.c.h.b16 %v3458
    %v3774 = vunpack.c.l.b16 %v3459
    %v3775 = vunpack.c.h.b16 %v3459
    %v3776 = vunpack.c.l.b16 %v3460
    %v3777 = vunpack.c.h.b16 %v3460
    %v3778 = vunpack.c.l.b16 %v3461
    %v3779 = vunpack.c.h.b16 %v3461
    %v3780 = vunpack.c.l.b16 %v3462
    %v3781 = vunpack.c.h.b16 %v3462
    %v3782 = vunpack.c.l.b16 %v3463
    %v3783 = vunpack.c.h.b16 %v3463
    %v3784 = vunpack.c.l.b16 %v3464
    %v3785 = vunpack.c.h.b16 %v3464
    %v3786 = vunpack.c.l.b16 %v3465
    %v3787 = vunpack.c.h.b16 %v3465
    %v3788 = vunpack.c.l.b16 %v3466
    %v3789 = vunpack.c.h.b16 %v3466
    %v3790 = vunpack.c.l.b16 %v3467
    %v3791 = vunpack.c.h.b16 %v3467
    %v3792 = vunpack.c.l.b16 %v3468
    %v3793 = vunpack.c.h.b16 %v3468
    %v3794 = vunpack.c.l.b16 %v3469
    %v3795 = vunpack.c.h.b16 %v3469
    %v3796 = vunpack.c.l.b16 %v3470
    %v3797 = vunpack.c.h.b16 %v3470
    %v3798 = vunpack.c.l.b16 %v3471
    %v3799 = vunpack.c.h.b16 %v3471
    %v3800 = vunpack.c.l.b16 %v3472
    %v3801 = vunpack.c.h.b16 %v3472
    %v3802 = vunpack.c.l.b16 %v3473
    %v3803 = vunpack.c.h.b16 %v3473
    %v3804 = vunpack.c.l.b16 %v3474
    %v3805 = vunpack.c.h.b16 %v3474
    %v3806 = vunpack.c.l.b16 %v3475
    %v3807 = vunpack.c.h.b16 %v3475
    %v3808 = vunpack.c.l.b16 %v3476
    %v3809 = vunpack.c.h.b16 %v3476
    %v3810 = vunpack.c.l.b16 %v3477
    %v3811 = vunpack.c.h.b16 %v3477
    %v3812 = vunpack.c.l.b16 %v3478
    %v3813 = vunpack.c.h.b16 %v3478
    %v3814 = vunpack.c.l.b16 %v3479
    %v3815 = vunpack.c.h.b16 %v3479
    %v3816 = vunpack.c.l.b16 %v3480
    %v3817 = vunpack.c.h.b16 %v3480
    %v3818 = vunpack.c.l.b16 %v3481
    %v3819 = vunpack.c.h.b16 %v3481
    %v3820 = vunpack.c.l.b16 %v3482
    %v3821 = vunpack.c.h.b16 %v3482
    %v3822 = vunpack.c.l.b16 %v3483
    %v3823 = vunpack.c.h.b16 %v3483
    %v3824 = vunpack.c.l.b16 %v3484
    %v3825 = vunpack.c.h.b16 %v3484
    %v3826 = vunpack.c.l.b16 %v3485
    %v3827 = vunpack.c.h.b16 %v3485
    %v3828 = vunpack.c.l.b16 %v3486
    %v3829 = vunpack.c.h.b16 %v3486
    %v3830 = vunpack.c.l.b16 %v3487
    %v3831 = vunpack.c.h.b16 %v3487
    %v3832 = vunpack.c.l.b16 %v3488
    %v3833 = vunpack.c.h.b16 %v3488
    %v3834 = vunpack.c.l.b16 %v3489
    %v3835 = vunpack.c.h.b16 %v3489
    %v3836 = vunpack.c.l.b16 %v3490
    %v3837 = vunpack.c.h.b16 %v3490
    %v3838 = vunpack.c.l.b16 %v3491
    %v3839 = vunpack.c.h.b16 %v3491
    %v3840 = vunpack.c.l.b16 %v3492
    %v3841 = vunpack.c.h.b16 %v3492
    %v3842 = vunpack.c.l.b16 %v3493
    %v3843 = vunpack.c.h.b16 %v3493
    %v3844 = vunpack.c.l.b16 %v3494
    %v3845 = vunpack.c.h.b16 %v3494
    %v3846 = vunpack.c.l.b16 %v3495
    %v3847 = vunpack.c.h.b16 %v3495
    %v3848 = vunpack.c.l.b16 %v3496
    %v3849 = vunpack.c.h.b16 %v3496
    %v3850 = vunpack.c.l.b16 %v3497
    %v3851 = vunpack.c.h.b16 %v3497
    %v3852 = vunpack.c.l.b16 %v3498
    %v3853 = vunpack.c.h.b16 %v3498
    %v3854 = vunpack.c.l.b16 %v3499
    %v3855 = vunpack.c.h.b16 %v3499
    %v3856 = vunpack.c.l.b16 %v3500
    %v3857 = vunpack.c.h.b16 %v3500
    %v3858 = vunpack.c.l.b16 %v3501
    %v3859 = vunpack.c.h.b16 %v3501
    %v3860 = vunpack.c.l.b16 %v3502
    %v3861 = vunpack.c.h.b16 %v3502
    %v3862 = vunpack.c.l.b16 %v3503
    %v3863 = vunpack.c.h.b16 %v3503
    %v3864 = vunpack.c.l.b16 %v3504
    %v3865 = vunpack.c.h.b16 %v3504
    %v3866 = vunpack.c.l.b16 %v3505
    %v3867 = vunpack.c.h.b16 %v3505
    %v3868 = vunpack.c.l.b16 %v3506
    %v3869 = vunpack.c.h.b16 %v3506
    %v3870 = vunpack.c.l.b16 %v3507
    %v3871 = vunpack.c.h.b16 %v3507
    %v3872 = vunpack.c.l.b16 %v3508
    %v3873 = vunpack.c.h.b16 %v3508
    %v3874 = vunpack.c.l.b16 %v3509
    %v3875 = vunpack.c.h.b16 %v3509
    %v3876 = vunpack.c.l.b16 %v3510
    %v3877 = vunpack.c.h.b16 %v3510
    %v3878 = vunpack.c.l.b16 %v3511
    %v3879 = vunpack.c.h.b16 %v3511
    %v3880 = vunpack.c.l.b16 %v3512
    %v3881 = vunpack.c.h.b16 %v3512
    %v3882 = vunpack.c.l.b16 %v3513
    %v3883 = vunpack.c.h.b16 %v3513
    %v3884 = vunpack.c.l.b16 %v3514
    %v3885 = vunpack.c.h.b16 %v3514
    %v3886 = vunpack.c.l.b16 %v3515
    %v3887 = vunpack.c.h.b16 %v3515
    %v3888 = vunpack.c.l.b16 %v3516
    %v3889 = vunpack.c.h.b16 %v3516
    %v3890 = vunpack.c.l.b16 %v3517
    %v3891 = vunpack.c.h.b16 %v3517
    %v3892 = vunpack.c.l.b16 %v3518
    %v3893 = vunpack.c.h.b16 %v3518
    %v3894 = vunpack.c.l.b16 %v3519
    %v3895 = vunpack.c.h.b16 %v3519
    %v3896 = vunpack.c.l.b16 %v3520
    %v3897 = vunpack.c.h.b16 %v3520
    %v3898 = vunpack.c.l.b16 %v3521
    %v3899 = vunpack.c.h.b16 %v3521
    %v3900 = vunpack.c.l.b16 %v3522
    %v3901 = vunpack.c.h.b16 %v3522
    %v3902 = vunpack.c.l.b16 %v3523
    %v3903 = vunpack.c.h.b16 %v3523
    %v3904 = vunpack.c.l.b16 %v3524
    %v3905 = vunpack.c.h.b16 %v3524
    %v3906 = vunpack.c.l.b16 %v3525
    %v3907 = vunpack.c.h.b16 %v3525
    %v3908 = vunpack.c.l.b16 %v3526
    %v3909 = vunpack.c.h.b16 %v3526
    %v3910 = vunpack.c.l.b16 %v3527
    %v3911 = vunpack.c.h.b16 %v3527
    %v3912 = vunpack.c.l.b16 %v3528
    %v3913 = vunpack.c.h.b16 %v3528
    %v3914 = vunpack.c.l.b16 %v3529
    %v3915 = vunpack.c.h.b16 %v3529
    %v3916 = vunpack.c.l.b16 %v3530
    %v3917 = vunpack.c.h.b16 %v3530
    %v3918 = vunpack.c.l.b16 %v3531
    %v3919 = vunpack.c.h.b16 %v3531
    %v3920 = vunpack.c.l.b16 %v3532
    %v3921 = vunpack.c.h.b16 %v3532
    %v3922 = vunpack.c.l.b16 %v3533
    %v3923 = vunpack.c.h.b16 %v3533
    %v3924 = vunpack.c.l.b16 %v3534
    %v3925 = vunpack.c.h.b16 %v3534
    %v3926 = vunpack.c.l.b16 %v3535
    %v3927 = vunpack.c.h.b16 %v3535
    %v3928 = vunpack.c.l.b16 %v3536
    %v3929 = vunpack.c.h.b16 %v3536
    %v3930 = vunpack.c.l.b16 %v3537
    %v3931 = vunpack.c.h.b16 %v3537
    %v3932 = vunpack.c.l.b16 %v3538
    %v3933 = vunpack.c.h.b16 %v3538
    %v3934 = vunpack.c.l.b16 %v3539
    %v3935 = vunpack.c.h.b16 %v3539
    %v3936 = vunpack.c.l.b16 %v3540
    %v3937 = vunpack.c.h.b16 %v3540
    %v3938 = vunpack.c.l.b16 %v3541
    %v3939 = vunpack.c.h.b16 %v3541
    %v3940 = vunpack.c.l.b16 %v3542
    %v3941 = vunpack.c.h.b16 %v3542
    %v3942 = vunpack.c.l.b16 %v3543
    %v3943 = vunpack.c.h.b16 %v3543
    %v3944 = vunpack.c.l.b16 %v3544
    %v3945 = vunpack.c.h.b16 %v3544
    %v3946 = vunpack.c.l.b16 %v3545
    %v3947 = vunpack.c.h.b16 %v3545
    %v3948 = vunpack.c.l.b16 %v3546
    %v3949 = vunpack.c.h.b16 %v3546
    %v3950 = vunpack.c.l.b16 %v3547
    %v3951 = vunpack.c.h.b16 %v3547
    %v3952 = vunpack.c.l.b16 %v3548
    %v3953 = vunpack.c.h.b16 %v3548
    %v3954 = vunpack.c.l.b16 %v3549
    %v3955 = vunpack.c.h.b16 %v3549
    %v3956 = vunpack.c.l.b16 %v3550
    %v3957 = vunpack.c.h.b16 %v3550
    %v3958 = vpack.c.b16 %v3706, %v3702
    %v3959 = vpack.c.b16 %v3707, %v3703
    %v3960 = vpack.c.b16 %v3708, %v3704
    %v3961 = vpack.c.b16 %v3709, %v3705
    %v3962 = vpack.c.b16 %v3714, %v3710
    %v3963 = vpack.c.b16 %v3715, %v3711
    %v3964 = vpack.c.b16 %v3716, %v3712
    %v3965 = vpack.c.b16 %v3717, %v3713
    %v3966 = vpack.c.b16 %v3722, %v3718
    %v3967 = vpack.c.b16 %v3723, %v3719
    %v3968 = vpack.c.b16 %v3724, %v3720
    %v3969 = vpack.c.b16 %v3725, %v3721
    %v3970 = vpack.c.b16 %v3730, %v3726
    %v3971 = vpack.c.b16 %v3731, %v3727
    %v3972 = vpack.c.b16 %v3732, %v3728
    %v3973 = vpack.c.b16 %v3733, %v3729
    %v3974 = vpack.c.b16 %v3738, %v3734
    %v3975 = vpack.c.b16 %v3739, %v3735
    %v3976 = vpack.c.b16 %v3740, %v3736
    %v3977 = vpack.c.b16 %v3741, %v3737
    %v3978 = vpack.c.b16 %v3746, %v3742
    %v3979 = vpack.c.b16 %v3747, %v3743
    %v3980 = vpack.c.b16 %v3748, %v3744
    %v3981 = vpack.c.b16 %v3749, %v3745
    %v3982 = vpack.c.b16 %v3754, %v3750
    %v3983 = vpack.c.b16 %v3755, %v3751
    %v3984 = vpack.c.b16 %v3756, %v3752
    %v3985 = vpack.c.b16 %v3757, %v3753
    %v3986 = vpack.c.b16 %v3762, %v3758
    %v3987 = vpack.c.b16 %v3763, %v3759
    %v3988 = vpack.c.b16 %v3764, %v3760
    %v3989 = vpack.c.b16 %v3765, %v3761
    %v3990 = vpack.c.b16 %v3770, %v3766
    %v3991 = vpack.c.b16 %v3771, %v3767
    %v3992 = vpack.c.b16 %v3772, %v3768
    %v3993 = vpack.c.b16 %v3773, %v3769
    %v3994 = vpack.c.b16 %v3778, %v3774
    %v3995 = vpack.c.b16 %v3779, %v3775
    %v3996 = vpack.c.b16 %v3780, %v3776
    %v3997 = vpack.c.b16 %v3781, %v3777
    %v3998 = vpack.c.b16 %v3786, %v3782
    %v3999 = vpack.c.b16 %v3787, %v3783
    %v4000 = vpack.c.b16 %v3788, %v3784
    %v4001 = vpack.c.b16 %v3789, %v3785
    %v4002 = vpack.c.b16 %v3794, %v3790
    %v4003 = vpack.c.b16 %v3795, %v3791
    %v4004 = vpack.c.b16 %v3796, %v3792
    %v4005 = vpack.c.b16 %v3797, %v3793
    %v4006 = vpack.c.b16 %v3802, %v3798
    %v4007 = vpack.c.b16 %v3803, %v3799
    %v4008 = vpack.c.b16 %v3804, %v3800
    %v4009 = vpack.c.b16 %v3805, %v3801
    %v4010 = vpack.c.b16 %v3810, %v3806
    %v4011 = vpack.c.b16 %v3811, %v3807
    %v4012 = vpack.c.b16 %v3812, %v3808
    %v4013 = vpack.c.b16 %v3813, %v3809
    %v4014 = vpack.c.b16 %v3818, %v3814
    %v4015 = vpack.c.b16 %v3819, %v3815
    %v4016 = vpack.c.b16 %v3820, %v3816
    %v4017 = vpack.c.b16 %v3821, %v3817
    %v4018 = vpack.c.b16 %v3826, %v3822
    %v4019 = vpack.c.b16 %v3827, %v3823
    %v4020 = vpack.c.b16 %v3828, %v3824
    %v4021 = vpack.c.b16 %v3829, %v3825
    %v4022 = vpack.c.b16 %v3834, %v3830
    %v4023 = vpack.c.b16 %v3835, %v3831
    %v4024 = vpack.c.b16 %v3836, %v3832
    %v4025 = vpack.c.b16 %v3837, %v3833
    %v4026 = vpack.c.b16 %v3842, %v3838
    %v4027 = vpack.c.b16 %v3843, %v3839
    %v4028 = vpack.c.b16 %v3844, %v3840
    %v4029 = vpack.c.b16 %v3845, %v3841
    %v4030 = vpack.c.b16 %v3850, %v3846
    %v4031 = vpack.c.b16 %v3851, %v3847
    %v4032 = vpack.c.b16 %v3852, %v3848
    %v4033 = vpack.c.b16 %v3853, %v3849
    %v4034 = vpack.c.b16 %v3858, %v3854
    %v4035 = vpack.c.b16 %v3859, %v3855
    %v4036 = vpack.c.b16 %v3860, %v3856
    %v4037 = vpack.c.b16 %v3861, %v3857
    %v4038 = vpack.c.b16 %v3866, %v3862
    %v4039 = vpack.c.b16 %v3867, %v3863
    %v4040 = vpack.c.b16 %v3868, %v3864
    %v4041 = vpack.c.b16 %v3869, %v3865
    %v4042 = vpack.c.b16 %v3874, %v3870
    %v4043 = vpack.c.b16 %v3875, %v3871
    %v4044 = vpack.c.b16 %v3876, %v3872
    %v4045 = vpack.c.b16 %v3877, %v3873
    %v4046 = vpack.c.b16 %v3882, %v3878
    %v4047 = vpack.c.b16 %v3883, %v3879
    %v4048 = vpack.c.b16 %v3884, %v3880
    %v4049 = vpack.c.b16 %v3885, %v3881
    %v4050 = vpack.c.b16 %v3890, %v3886
    %v4051 = vpack.c.b16 %v3891, %v3887
    %v4052 = vpack.c.b16 %v3892, %v3888
    %v4053 = vpack.c.b16 %v3893, %v3889
    %v4054 = vpack.c.b16 %v3898, %v3894
    %v4055 = vpack.c.b16 %v3899, %v3895
    %v4056 = vpack.c.b16 %v3900, %v3896
    %v4057 = vpack.c.b16 %v3901, %v3897
    %v4058 = vpack.c.b16 %v3906, %v3902
    %v4059 = vpack.c.b16 %v3907, %v3903
    %v4060 = vpack.c.b16 %v3908, %v3904
    %v4061 = vpack.c.b16 %v3909, %v3905
    %v4062 = vpack.c.b16 %v3914, %v3910
    %v4063 = vpack.c.b16 %v3915, %v3911
    %v4064 = vpack.c.b16 %v3916, %v3912
    %v4065 = vpack.c.b16 %v3917, %v3913
    %v4066 = vpack.c.b16 %v3922, %v3918
    %v4067 = vpack.c.b16 %v3923, %v3919
    %v4068 = vpack.c.b16 %v3924, %v3920
    %v4069 = vpack.c.b16 %v3925, %v3921
    %v4070 = vpack.c.b16 %v3930, %v3926
    %v4071 = vpack.c.b16 %v3931, %v3927
    %v4072 = vpack.c.b16 %v3932, %v3928
    %v4073 = vpack.c.b16 %v3933, %v3929
    %v4074 = vpack.c.b16 %v3938, %v3934
    %v4075 = vpack.c.b16 %v3939, %v3935
    %v4076 = vpack.c.b16 %v3940, %v3936
    %v4077 = vpack.c.b16 %v3941, %v3937
    %v4078 = vpack.c.b16 %v3946, %v3942
    %v4079 = vpack.c.b16 %v3947, %v3943
    %v4080 = vpack.c.b16 %v3948, %v3944
    %v4081 = vpack.c.b16 %v3949, %v3945
    %v4082 = vpack.c.b16 %v3954, %v3950
    %v4083 = vpack.c.b16 %v3955, %v3951
    %v4084 = vpack.c.b16 %v3956, %v3952
    %v4085 = vpack.c.b16 %v3957, %v3953
    %4214 = vmatprep.subr.bf16.mxu0 %v3987
    %4215 = vmatpush1.bf16.msra.mxu0 %v3986
    %4216 = vmatprep.subr.bf16.mxu0 %v3983
    %4217 = vmatpush1.bf16.msra.mxu0 %v3982
    %4218 = vmatprep.subr.bf16.mxu0 %v3979
    %4219 = vmatpush1.bf16.msra.mxu0 %v3978
    %4220 = vmatprep.subr.bf16.mxu0 %v3975
    %4221 = vmatpush1.bf16.msra.mxu0 %v3974
    %4222 = vmatprep.subr.bf16.mxu0 %v3971
    %4223 = vmatpush1.bf16.msra.mxu0 %v3970
    %4224 = vmatprep.subr.bf16.mxu0 %v3967
    %4225 = vmatpush1.bf16.msra.mxu0 %v3966
    %4226 = vmatprep.subr.bf16.mxu0 %v3963
    %4227 = vmatpush1.bf16.msra.mxu0 %v3962
    %4228 = vmatprep.subr.bf16.mxu0 %v3959
    %4229 = vmatpush1.bf16.msra.mxu0 %v3958
    %4230 = vmatprep.subr.bf16.mxu0 %v4019
    %4231 = vmatpush2.bf16.msra.mxu0 %v4018
    %4232 = vmatprep.subr.bf16.mxu0 %v4015
    %4233 = vmatpush2.bf16.msra.mxu0 %v4014
    %4234 = vmatprep.subr.bf16.mxu0 %v4011
    %4235 = vmatpush2.bf16.msra.mxu0 %v4010
    %4236 = vmatprep.subr.bf16.mxu0 %v4007
    %4237 = vmatpush2.bf16.msra.mxu0 %v4006
    %4238 = vmatprep.subr.bf16.mxu0 %v4003
    %4239 = vmatpush2.bf16.msra.mxu0 %v4002
    %4240 = vmatprep.subr.bf16.mxu0 %v3999
    %4241 = vmatpush2.bf16.msra.mxu0 %v3998
    %4242 = vmatprep.subr.bf16.mxu0 %v3995
    %4243 = vmatpush2.bf16.msra.mxu0 %v3994
    %4244 = vmatprep.subr.bf16.mxu0 %v3991
    %4245 = vmatpush2.bf16.msra.mxu0 %v3990
    %4246 = vmatprep.mubr.bf16.mxu0 %v3419
    %4247 = vmatmul.mubr.bf16.gmra.mxu0 %v3418
    %v4248 = vpop.f32.mrf.mxu0
    %v4249 = vadd.f32 %v3557, %v4248
    %v4250 = vpop.f32.mrf.mxu0
    %v4251 = vadd.f32 %v3561, %v4250
    %v4252 = vpop.f32.mrf.mxu0
    %v4253 = vpop.f32.mrf.mxu0
    %4254 = vdwg.mxu0
    %4255 = vmatprep.subr.bf16.mxu0 %v4051
    %4256 = vmatpush1.bf16.msra.mxu0 %v4050
    %4257 = vmatprep.subr.bf16.mxu0 %v4047
    %4258 = vmatpush1.bf16.msra.mxu0 %v4046
    %4259 = vmatprep.subr.bf16.mxu0 %v4043
    %4260 = vmatpush1.bf16.msra.mxu0 %v4042
    %4261 = vmatprep.subr.bf16.mxu0 %v4039
    %4262 = vmatpush1.bf16.msra.mxu0 %v4038
    %4263 = vmatprep.subr.bf16.mxu0 %v4035
    %4264 = vmatpush1.bf16.msra.mxu0 %v4034
    %4265 = vmatprep.subr.bf16.mxu0 %v4031
    %4266 = vmatpush1.bf16.msra.mxu0 %v4030
    %4267 = vmatprep.subr.bf16.mxu0 %v4027
    %4268 = vmatpush1.bf16.msra.mxu0 %v4026
    %4269 = vmatprep.subr.bf16.mxu0 %v4023
    %4270 = vmatpush1.bf16.msra.mxu0 %v4022
    %4271 = vmatprep.subr.bf16.mxu0 %v4083
    %4272 = vmatpush2.bf16.msra.mxu0 %v4082
    %4273 = vmatprep.subr.bf16.mxu0 %v4079
    %4274 = vmatpush2.bf16.msra.mxu0 %v4078
    %4275 = vmatprep.subr.bf16.mxu0 %v4075
    %4276 = vmatpush2.bf16.msra.mxu0 %v4074
    %4277 = vmatprep.subr.bf16.mxu0 %v4071
    %4278 = vmatpush2.bf16.msra.mxu0 %v4070
    %4279 = vmatprep.subr.bf16.mxu0 %v4067
    %4280 = vmatpush2.bf16.msra.mxu0 %v4066
    %4281 = vmatprep.subr.bf16.mxu0 %v4063
    %4282 = vmatpush2.bf16.msra.mxu0 %v4062
    %4283 = vmatprep.subr.bf16.mxu0 %v4059
    %4284 = vmatpush2.bf16.msra.mxu0 %v4058
    %4285 = vmatprep.subr.bf16.mxu0 %v4055
    %4286 = vmatpush2.bf16.msra.mxu0 %v4054
    %4287 = vmatprep.mubr.bf16.mxu0 %v3421
    %4288 = vmatmul.mubr.bf16.gmra.mxu0 %v3420
    %v4289 = vpop.f32.mrf.mxu0
    %v4290 = vadd.f32 %v4249, %v4289
    %v4291 = vpop.f32.mrf.mxu0
    %v4292 = vadd.f32 %v4251, %v4291
    %v4293 = vpop.f32.mrf.mxu0
    %v4294 = vpop.f32.mrf.mxu0
    %4295 = vdwg.mxu0
    %4296 = vmatprep.subr.bf16.mxu0 %v3989
    %4297 = vmatpush1.bf16.msra.mxu0 %v3988
    %4298 = vmatprep.subr.bf16.mxu0 %v3985
    %4299 = vmatpush1.bf16.msra.mxu0 %v3984
    %4300 = vmatprep.subr.bf16.mxu0 %v3981
    %4301 = vmatpush1.bf16.msra.mxu0 %v3980
    %4302 = vmatprep.subr.bf16.mxu0 %v3977
    %4303 = vmatpush1.bf16.msra.mxu0 %v3976
    %4304 = vmatprep.subr.bf16.mxu0 %v3973
    %4305 = vmatpush1.bf16.msra.mxu0 %v3972
    %4306 = vmatprep.subr.bf16.mxu0 %v3969
    %4307 = vmatpush1.bf16.msra.mxu0 %v3968
    %4308 = vmatprep.subr.bf16.mxu0 %v3965
    %4309 = vmatpush1.bf16.msra.mxu0 %v3964
    %4310 = vmatprep.subr.bf16.mxu0 %v3961
    %4311 = vmatpush1.bf16.msra.mxu0 %v3960
    %4312 = vmatprep.subr.bf16.mxu0 %v4021
    %4313 = vmatpush2.bf16.msra.mxu0 %v4020
    %4314 = vmatprep.subr.bf16.mxu0 %v4017
    %4315 = vmatpush2.bf16.msra.mxu0 %v4016
    %4316 = vmatprep.subr.bf16.mxu0 %v4013
    %4317 = vmatpush2.bf16.msra.mxu0 %v4012
    %4318 = vmatprep.subr.bf16.mxu0 %v4009
    %4319 = vmatpush2.bf16.msra.mxu0 %v4008
    %4320 = vmatprep.subr.bf16.mxu0 %v4005
    %4321 = vmatpush2.bf16.msra.mxu0 %v4004
    %4322 = vmatprep.subr.bf16.mxu0 %v4001
    %4323 = vmatpush2.bf16.msra.mxu0 %v4000
    %4324 = vmatprep.subr.bf16.mxu0 %v3997
    %4325 = vmatpush2.bf16.msra.mxu0 %v3996
    %4326 = vmatprep.subr.bf16.mxu0 %v3993
    %4327 = vmatpush2.bf16.msra.mxu0 %v3992
    %4328 = vmatprep.mubr.bf16.mxu0 %v3419
    %4329 = vmatmul.mubr.bf16.gmra.mxu0 %v3418
    %v4330 = vpop.f32.mrf.mxu0
    %v4331 = vadd.f32 %v3565, %v4330
    %v4332 = vpop.f32.mrf.mxu0
    %v4333 = vadd.f32 %v3569, %v4332
    %v4334 = vpop.f32.mrf.mxu0
    %v4335 = vpop.f32.mrf.mxu0
    %4336 = vdwg.mxu0
    %4337 = vmatprep.subr.bf16.mxu0 %v4053
    %4338 = vmatpush1.bf16.msra.mxu0 %v4052
    %4339 = vmatprep.subr.bf16.mxu0 %v4049
    %4340 = vmatpush1.bf16.msra.mxu0 %v4048
    %4341 = vmatprep.subr.bf16.mxu0 %v4045
    %4342 = vmatpush1.bf16.msra.mxu0 %v4044
    %4343 = vmatprep.subr.bf16.mxu0 %v4041
    %4344 = vmatpush1.bf16.msra.mxu0 %v4040
    %4345 = vmatprep.subr.bf16.mxu0 %v4037
    %4346 = vmatpush1.bf16.msra.mxu0 %v4036
    %4347 = vmatprep.subr.bf16.mxu0 %v4033
    %4348 = vmatpush1.bf16.msra.mxu0 %v4032
    %4349 = vmatprep.subr.bf16.mxu0 %v4029
    %4350 = vmatpush1.bf16.msra.mxu0 %v4028
    %4351 = vmatprep.subr.bf16.mxu0 %v4025
    %4352 = vmatpush1.bf16.msra.mxu0 %v4024
    %4353 = vmatprep.subr.bf16.mxu0 %v4085
    %4354 = vmatpush2.bf16.msra.mxu0 %v4084
    %4355 = vmatprep.subr.bf16.mxu0 %v4081
    %4356 = vmatpush2.bf16.msra.mxu0 %v4080
    %4357 = vmatprep.subr.bf16.mxu0 %v4077
    %4358 = vmatpush2.bf16.msra.mxu0 %v4076
    %4359 = vmatprep.subr.bf16.mxu0 %v4073
    %4360 = vmatpush2.bf16.msra.mxu0 %v4072
    %4361 = vmatprep.subr.bf16.mxu0 %v4069
    %4362 = vmatpush2.bf16.msra.mxu0 %v4068
    %4363 = vmatprep.subr.bf16.mxu0 %v4065
    %4364 = vmatpush2.bf16.msra.mxu0 %v4064
    %4365 = vmatprep.subr.bf16.mxu0 %v4061
    %4366 = vmatpush2.bf16.msra.mxu0 %v4060
    %4367 = vmatprep.subr.bf16.mxu0 %v4057
    %4368 = vmatpush2.bf16.msra.mxu0 %v4056
    %4369 = vmatprep.mubr.bf16.mxu0 %v3421
    %4370 = vmatmul.mubr.bf16.gmra.mxu0 %v3420
    %v4371 = vpop.f32.mrf.mxu0
    %v4372 = vadd.f32 %v4331, %v4371
    %v4373 = vpop.f32.mrf.mxu0
    %v4374 = vadd.f32 %v4333, %v4373
    %v4375 = vpop.f32.mrf.mxu0
    %v4376 = vpop.f32.mrf.mxu0
    %4377 = vdwg.mxu0
    %v4378 = vmax.f32 %v4290, 0.0
    %v4379 = vmax.f32 %v4292, 0.0
    %v4380 = vmax.f32 %v4372, 0.0
    %v4381 = vmax.f32 %v4374, 0.0
    %v4382 = vpack.c.bf16 %v4378, %v4378
    %v4383 = vpack.c.bf16 %v4379, %v4379
    %v4384 = vpack.c.bf16 %v4380, %v4380
    %v4385 = vpack.c.bf16 %v4381, %v4381
    %s4386 = scalar_lea.vmem [#allocation5], 2048
    %v4387 = vld [vmem:[%s4386] sm:$0xff]
    %v4388 = vld [vmem:[%s4386 + $0x8] sm:$0xff]
    %v4389 = vld [vmem:[%s4386 + $0x10] sm:$0xff]
    %v4390 = vld [vmem:[%s4386 + $0x18] sm:$0xff]
    %v4391 = vld [vmem:[%s4386 + $0x20] sm:$0xff]
    %v4392 = vld [vmem:[%s4386 + $0x28] sm:$0xff]
    %v4393 = vld [vmem:[%s4386 + $0x30] sm:$0xff]
    %v4394 = vld [vmem:[%s4386 + $0x38] sm:$0xff]
    %v4395 = vld [vmem:[%s4386 + $0x40] sm:$0xff]
    %v4396 = vld [vmem:[%s4386 + $0x48] sm:$0xff]
    %v4397 = vld [vmem:[%s4386 + $0x50] sm:$0xff]
    %v4398 = vld [vmem:[%s4386 + $0x58] sm:$0xff]
    %v4399 = vld [vmem:[%s4386 + $0x60] sm:$0xff]
    %v4400 = vld [vmem:[%s4386 + $0x68] sm:$0xff]
    %v4401 = vld [vmem:[%s4386 + $0x70] sm:$0xff]
    %v4402 = vld [vmem:[%s4386 + $0x78] sm:$0xff]
    %v4403 = vld [vmem:[%s4386 + $0x80] sm:$0xff]
    %v4404 = vld [vmem:[%s4386 + $0x88] sm:$0xff]
    %v4405 = vld [vmem:[%s4386 + $0x90] sm:$0xff]
    %v4406 = vld [vmem:[%s4386 + $0x98] sm:$0xff]
    %v4407 = vld [vmem:[%s4386 + $0xa0] sm:$0xff]
    %v4408 = vld [vmem:[%s4386 + $0xa8] sm:$0xff]
    %v4409 = vld [vmem:[%s4386 + $0xb0] sm:$0xff]
    %v4410 = vld [vmem:[%s4386 + $0xb8] sm:$0xff]
    %v4411 = vld [vmem:[%s4386 + $0xc0] sm:$0xff]
    %v4412 = vld [vmem:[%s4386 + $0xc8] sm:$0xff]
    %v4413 = vld [vmem:[%s4386 + $0xd0] sm:$0xff]
    %v4414 = vld [vmem:[%s4386 + $0xd8] sm:$0xff]
    %v4415 = vld [vmem:[%s4386 + $0xe0] sm:$0xff]
    %v4416 = vld [vmem:[%s4386 + $0xe8] sm:$0xff]
    %v4417 = vld [vmem:[%s4386 + $0xf0] sm:$0xff]
    %v4418 = vld [vmem:[%s4386 + $0xf8] sm:$0xff]
    %v4419 = vld [vmem:[%s4386 + $0x100] sm:$0xff]
    %v4420 = vld [vmem:[%s4386 + $0x108] sm:$0xff]
    %v4421 = vld [vmem:[%s4386 + $0x110] sm:$0xff]
    %v4422 = vld [vmem:[%s4386 + $0x118] sm:$0xff]
    %v4423 = vld [vmem:[%s4386 + $0x120] sm:$0xff]
    %v4424 = vld [vmem:[%s4386 + $0x128] sm:$0xff]
    %v4425 = vld [vmem:[%s4386 + $0x130] sm:$0xff]
    %v4426 = vld [vmem:[%s4386 + $0x138] sm:$0xff]
    %v4427 = vld [vmem:[%s4386 + $0x140] sm:$0xff]
    %v4428 = vld [vmem:[%s4386 + $0x148] sm:$0xff]
    %v4429 = vld [vmem:[%s4386 + $0x150] sm:$0xff]
    %v4430 = vld [vmem:[%s4386 + $0x158] sm:$0xff]
    %v4431 = vld [vmem:[%s4386 + $0x160] sm:$0xff]
    %v4432 = vld [vmem:[%s4386 + $0x168] sm:$0xff]
    %v4433 = vld [vmem:[%s4386 + $0x170] sm:$0xff]
    %v4434 = vld [vmem:[%s4386 + $0x178] sm:$0xff]
    %v4435 = vld [vmem:[%s4386 + $0x180] sm:$0xff]
    %v4436 = vld [vmem:[%s4386 + $0x188] sm:$0xff]
    %v4437 = vld [vmem:[%s4386 + $0x190] sm:$0xff]
    %v4438 = vld [vmem:[%s4386 + $0x198] sm:$0xff]
    %v4439 = vld [vmem:[%s4386 + $0x1a0] sm:$0xff]
    %v4440 = vld [vmem:[%s4386 + $0x1a8] sm:$0xff]
    %v4441 = vld [vmem:[%s4386 + $0x1b0] sm:$0xff]
    %v4442 = vld [vmem:[%s4386 + $0x1b8] sm:$0xff]
    %v4443 = vld [vmem:[%s4386 + $0x1c0] sm:$0xff]
    %v4444 = vld [vmem:[%s4386 + $0x1c8] sm:$0xff]
    %v4445 = vld [vmem:[%s4386 + $0x1d0] sm:$0xff]
    %v4446 = vld [vmem:[%s4386 + $0x1d8] sm:$0xff]
    %v4447 = vld [vmem:[%s4386 + $0x1e0] sm:$0xff]
    %v4448 = vld [vmem:[%s4386 + $0x1e8] sm:$0xff]
    %v4449 = vld [vmem:[%s4386 + $0x1f0] sm:$0xff]
    %v4450 = vld [vmem:[%s4386 + $0x1f8] sm:$0xff]
    %v4451 = vld [vmem:[%s4386 + $0x200] sm:$0xff]
    %v4452 = vld [vmem:[%s4386 + $0x208] sm:$0xff]
    %v4453 = vld [vmem:[%s4386 + $0x210] sm:$0xff]
    %v4454 = vld [vmem:[%s4386 + $0x218] sm:$0xff]
    %v4455 = vld [vmem:[%s4386 + $0x220] sm:$0xff]
    %v4456 = vld [vmem:[%s4386 + $0x228] sm:$0xff]
    %v4457 = vld [vmem:[%s4386 + $0x230] sm:$0xff]
    %v4458 = vld [vmem:[%s4386 + $0x238] sm:$0xff]
    %v4459 = vld [vmem:[%s4386 + $0x240] sm:$0xff]
    %v4460 = vld [vmem:[%s4386 + $0x248] sm:$0xff]
    %v4461 = vld [vmem:[%s4386 + $0x250] sm:$0xff]
    %v4462 = vld [vmem:[%s4386 + $0x258] sm:$0xff]
    %v4463 = vld [vmem:[%s4386 + $0x260] sm:$0xff]
    %v4464 = vld [vmem:[%s4386 + $0x268] sm:$0xff]
    %v4465 = vld [vmem:[%s4386 + $0x270] sm:$0xff]
    %v4466 = vld [vmem:[%s4386 + $0x278] sm:$0xff]
    %v4467 = vld [vmem:[%s4386 + $0x280] sm:$0xff]
    %v4468 = vld [vmem:[%s4386 + $0x288] sm:$0xff]
    %v4469 = vld [vmem:[%s4386 + $0x290] sm:$0xff]
    %v4470 = vld [vmem:[%s4386 + $0x298] sm:$0xff]
    %v4471 = vld [vmem:[%s4386 + $0x2a0] sm:$0xff]
    %v4472 = vld [vmem:[%s4386 + $0x2a8] sm:$0xff]
    %v4473 = vld [vmem:[%s4386 + $0x2b0] sm:$0xff]
    %v4474 = vld [vmem:[%s4386 + $0x2b8] sm:$0xff]
    %v4475 = vld [vmem:[%s4386 + $0x2c0] sm:$0xff]
    %v4476 = vld [vmem:[%s4386 + $0x2c8] sm:$0xff]
    %v4477 = vld [vmem:[%s4386 + $0x2d0] sm:$0xff]
    %v4478 = vld [vmem:[%s4386 + $0x2d8] sm:$0xff]
    %v4479 = vld [vmem:[%s4386 + $0x2e0] sm:$0xff]
    %v4480 = vld [vmem:[%s4386 + $0x2e8] sm:$0xff]
    %v4481 = vld [vmem:[%s4386 + $0x2f0] sm:$0xff]
    %v4482 = vld [vmem:[%s4386 + $0x2f8] sm:$0xff]
    %v4483 = vld [vmem:[%s4386 + $0x300] sm:$0xff]
    %v4484 = vld [vmem:[%s4386 + $0x308] sm:$0xff]
    %v4485 = vld [vmem:[%s4386 + $0x310] sm:$0xff]
    %v4486 = vld [vmem:[%s4386 + $0x318] sm:$0xff]
    %v4487 = vld [vmem:[%s4386 + $0x320] sm:$0xff]
    %v4488 = vld [vmem:[%s4386 + $0x328] sm:$0xff]
    %v4489 = vld [vmem:[%s4386 + $0x330] sm:$0xff]
    %v4490 = vld [vmem:[%s4386 + $0x338] sm:$0xff]
    %v4491 = vld [vmem:[%s4386 + $0x340] sm:$0xff]
    %v4492 = vld [vmem:[%s4386 + $0x348] sm:$0xff]
    %v4493 = vld [vmem:[%s4386 + $0x350] sm:$0xff]
    %v4494 = vld [vmem:[%s4386 + $0x358] sm:$0xff]
    %v4495 = vld [vmem:[%s4386 + $0x360] sm:$0xff]
    %v4496 = vld [vmem:[%s4386 + $0x368] sm:$0xff]
    %v4497 = vld [vmem:[%s4386 + $0x370] sm:$0xff]
    %v4498 = vld [vmem:[%s4386 + $0x378] sm:$0xff]
    %v4499 = vld [vmem:[%s4386 + $0x380] sm:$0xff]
    %v4500 = vld [vmem:[%s4386 + $0x388] sm:$0xff]
    %v4501 = vld [vmem:[%s4386 + $0x390] sm:$0xff]
    %v4502 = vld [vmem:[%s4386 + $0x398] sm:$0xff]
    %v4503 = vld [vmem:[%s4386 + $0x3a0] sm:$0xff]
    %v4504 = vld [vmem:[%s4386 + $0x3a8] sm:$0xff]
    %v4505 = vld [vmem:[%s4386 + $0x3b0] sm:$0xff]
    %v4506 = vld [vmem:[%s4386 + $0x3b8] sm:$0xff]
    %v4507 = vld [vmem:[%s4386 + $0x3c0] sm:$0xff]
    %v4508 = vld [vmem:[%s4386 + $0x3c8] sm:$0xff]
    %v4509 = vld [vmem:[%s4386 + $0x3d0] sm:$0xff]
    %v4510 = vld [vmem:[%s4386 + $0x3d8] sm:$0xff]
    %v4511 = vld [vmem:[%s4386 + $0x3e0] sm:$0xff]
    %v4512 = vld [vmem:[%s4386 + $0x3e8] sm:$0xff]
    %v4513 = vld [vmem:[%s4386 + $0x3f0] sm:$0xff]
    %v4514 = vld [vmem:[%s4386 + $0x3f8] sm:$0xff]
    %s4515 = scalar_lea.vmem [#allocation15], 8
    %v4516 = vld [vmem:[%s4515] sm:$0xf]
    %v4518 = vlaneseq
    %v4519 = vshrl.u32 %v4518, 7
    %v4520 = vsub.s32 0, %v4519
    %v4521 = vrot.slane %v4516, %v4520
    %v4522 = vlaneseq
    %v4523 = vshrl.u32 %v4522, 7
    %v4524 = vsub.s32 1, %v4523
    %v4525 = vrot.slane %v4516, %v4524
    %v4526 = vlaneseq
    %v4527 = vshrl.u32 %v4526, 7
    %v4528 = vsub.s32 2, %v4527
    %v4529 = vrot.slane %v4516, %v4528
    %v4530 = vlaneseq
    %v4531 = vshrl.u32 %v4530, 7
    %v4532 = vsub.s32 3, %v4531
    %v4533 = vrot.slane %v4516, %v4532
    %v4666 = vunpack.c.l.b16 %v4387
    %v4667 = vunpack.c.h.b16 %v4387
    %v4668 = vunpack.c.l.b16 %v4388
    %v4669 = vunpack.c.h.b16 %v4388
    %v4670 = vunpack.c.l.b16 %v4389
    %v4671 = vunpack.c.h.b16 %v4389
    %v4672 = vunpack.c.l.b16 %v4390
    %v4673 = vunpack.c.h.b16 %v4390
    %v4674 = vunpack.c.l.b16 %v4391
    %v4675 = vunpack.c.h.b16 %v4391
    %v4676 = vunpack.c.l.b16 %v4392
    %v4677 = vunpack.c.h.b16 %v4392
    %v4678 = vunpack.c.l.b16 %v4393
    %v4679 = vunpack.c.h.b16 %v4393
    %v4680 = vunpack.c.l.b16 %v4394
    %v4681 = vunpack.c.h.b16 %v4394
    %v4682 = vunpack.c.l.b16 %v4395
    %v4683 = vunpack.c.h.b16 %v4395
    %v4684 = vunpack.c.l.b16 %v4396
    %v4685 = vunpack.c.h.b16 %v4396
    %v4686 = vunpack.c.l.b16 %v4397
    %v4687 = vunpack.c.h.b16 %v4397
    %v4688 = vunpack.c.l.b16 %v4398
    %v4689 = vunpack.c.h.b16 %v4398
    %v4690 = vunpack.c.l.b16 %v4399
    %v4691 = vunpack.c.h.b16 %v4399
    %v4692 = vunpack.c.l.b16 %v4400
    %v4693 = vunpack.c.h.b16 %v4400
    %v4694 = vunpack.c.l.b16 %v4401
    %v4695 = vunpack.c.h.b16 %v4401
    %v4696 = vunpack.c.l.b16 %v4402
    %v4697 = vunpack.c.h.b16 %v4402
    %v4698 = vunpack.c.l.b16 %v4403
    %v4699 = vunpack.c.h.b16 %v4403
    %v4700 = vunpack.c.l.b16 %v4404
    %v4701 = vunpack.c.h.b16 %v4404
    %v4702 = vunpack.c.l.b16 %v4405
    %v4703 = vunpack.c.h.b16 %v4405
    %v4704 = vunpack.c.l.b16 %v4406
    %v4705 = vunpack.c.h.b16 %v4406
    %v4706 = vunpack.c.l.b16 %v4407
    %v4707 = vunpack.c.h.b16 %v4407
    %v4708 = vunpack.c.l.b16 %v4408
    %v4709 = vunpack.c.h.b16 %v4408
    %v4710 = vunpack.c.l.b16 %v4409
    %v4711 = vunpack.c.h.b16 %v4409
    %v4712 = vunpack.c.l.b16 %v4410
    %v4713 = vunpack.c.h.b16 %v4410
    %v4714 = vunpack.c.l.b16 %v4411
    %v4715 = vunpack.c.h.b16 %v4411
    %v4716 = vunpack.c.l.b16 %v4412
    %v4717 = vunpack.c.h.b16 %v4412
    %v4718 = vunpack.c.l.b16 %v4413
    %v4719 = vunpack.c.h.b16 %v4413
    %v4720 = vunpack.c.l.b16 %v4414
    %v4721 = vunpack.c.h.b16 %v4414
    %v4722 = vunpack.c.l.b16 %v4415
    %v4723 = vunpack.c.h.b16 %v4415
    %v4724 = vunpack.c.l.b16 %v4416
    %v4725 = vunpack.c.h.b16 %v4416
    %v4726 = vunpack.c.l.b16 %v4417
    %v4727 = vunpack.c.h.b16 %v4417
    %v4728 = vunpack.c.l.b16 %v4418
    %v4729 = vunpack.c.h.b16 %v4418
    %v4730 = vunpack.c.l.b16 %v4419
    %v4731 = vunpack.c.h.b16 %v4419
    %v4732 = vunpack.c.l.b16 %v4420
    %v4733 = vunpack.c.h.b16 %v4420
    %v4734 = vunpack.c.l.b16 %v4421
    %v4735 = vunpack.c.h.b16 %v4421
    %v4736 = vunpack.c.l.b16 %v4422
    %v4737 = vunpack.c.h.b16 %v4422
    %v4738 = vunpack.c.l.b16 %v4423
    %v4739 = vunpack.c.h.b16 %v4423
    %v4740 = vunpack.c.l.b16 %v4424
    %v4741 = vunpack.c.h.b16 %v4424
    %v4742 = vunpack.c.l.b16 %v4425
    %v4743 = vunpack.c.h.b16 %v4425
    %v4744 = vunpack.c.l.b16 %v4426
    %v4745 = vunpack.c.h.b16 %v4426
    %v4746 = vunpack.c.l.b16 %v4427
    %v4747 = vunpack.c.h.b16 %v4427
    %v4748 = vunpack.c.l.b16 %v4428
    %v4749 = vunpack.c.h.b16 %v4428
    %v4750 = vunpack.c.l.b16 %v4429
    %v4751 = vunpack.c.h.b16 %v4429
    %v4752 = vunpack.c.l.b16 %v4430
    %v4753 = vunpack.c.h.b16 %v4430
    %v4754 = vunpack.c.l.b16 %v4431
    %v4755 = vunpack.c.h.b16 %v4431
    %v4756 = vunpack.c.l.b16 %v4432
    %v4757 = vunpack.c.h.b16 %v4432
    %v4758 = vunpack.c.l.b16 %v4433
    %v4759 = vunpack.c.h.b16 %v4433
    %v4760 = vunpack.c.l.b16 %v4434
    %v4761 = vunpack.c.h.b16 %v4434
    %v4762 = vunpack.c.l.b16 %v4435
    %v4763 = vunpack.c.h.b16 %v4435
    %v4764 = vunpack.c.l.b16 %v4436
    %v4765 = vunpack.c.h.b16 %v4436
    %v4766 = vunpack.c.l.b16 %v4437
    %v4767 = vunpack.c.h.b16 %v4437
    %v4768 = vunpack.c.l.b16 %v4438
    %v4769 = vunpack.c.h.b16 %v4438
    %v4770 = vunpack.c.l.b16 %v4439
    %v4771 = vunpack.c.h.b16 %v4439
    %v4772 = vunpack.c.l.b16 %v4440
    %v4773 = vunpack.c.h.b16 %v4440
    %v4774 = vunpack.c.l.b16 %v4441
    %v4775 = vunpack.c.h.b16 %v4441
    %v4776 = vunpack.c.l.b16 %v4442
    %v4777 = vunpack.c.h.b16 %v4442
    %v4778 = vunpack.c.l.b16 %v4443
    %v4779 = vunpack.c.h.b16 %v4443
    %v4780 = vunpack.c.l.b16 %v4444
    %v4781 = vunpack.c.h.b16 %v4444
    %v4782 = vunpack.c.l.b16 %v4445
    %v4783 = vunpack.c.h.b16 %v4445
    %v4784 = vunpack.c.l.b16 %v4446
    %v4785 = vunpack.c.h.b16 %v4446
    %v4786 = vunpack.c.l.b16 %v4447
    %v4787 = vunpack.c.h.b16 %v4447
    %v4788 = vunpack.c.l.b16 %v4448
    %v4789 = vunpack.c.h.b16 %v4448
    %v4790 = vunpack.c.l.b16 %v4449
    %v4791 = vunpack.c.h.b16 %v4449
    %v4792 = vunpack.c.l.b16 %v4450
    %v4793 = vunpack.c.h.b16 %v4450
    %v4794 = vunpack.c.l.b16 %v4451
    %v4795 = vunpack.c.h.b16 %v4451
    %v4796 = vunpack.c.l.b16 %v4452
    %v4797 = vunpack.c.h.b16 %v4452
    %v4798 = vunpack.c.l.b16 %v4453
    %v4799 = vunpack.c.h.b16 %v4453
    %v4800 = vunpack.c.l.b16 %v4454
    %v4801 = vunpack.c.h.b16 %v4454
    %v4802 = vunpack.c.l.b16 %v4455
    %v4803 = vunpack.c.h.b16 %v4455
    %v4804 = vunpack.c.l.b16 %v4456
    %v4805 = vunpack.c.h.b16 %v4456
    %v4806 = vunpack.c.l.b16 %v4457
    %v4807 = vunpack.c.h.b16 %v4457
    %v4808 = vunpack.c.l.b16 %v4458
    %v4809 = vunpack.c.h.b16 %v4458
    %v4810 = vunpack.c.l.b16 %v4459
    %v4811 = vunpack.c.h.b16 %v4459
    %v4812 = vunpack.c.l.b16 %v4460
    %v4813 = vunpack.c.h.b16 %v4460
    %v4814 = vunpack.c.l.b16 %v4461
    %v4815 = vunpack.c.h.b16 %v4461
    %v4816 = vunpack.c.l.b16 %v4462
    %v4817 = vunpack.c.h.b16 %v4462
    %v4818 = vunpack.c.l.b16 %v4463
    %v4819 = vunpack.c.h.b16 %v4463
    %v4820 = vunpack.c.l.b16 %v4464
    %v4821 = vunpack.c.h.b16 %v4464
    %v4822 = vunpack.c.l.b16 %v4465
    %v4823 = vunpack.c.h.b16 %v4465
    %v4824 = vunpack.c.l.b16 %v4466
    %v4825 = vunpack.c.h.b16 %v4466
    %v4826 = vunpack.c.l.b16 %v4467
    %v4827 = vunpack.c.h.b16 %v4467
    %v4828 = vunpack.c.l.b16 %v4468
    %v4829 = vunpack.c.h.b16 %v4468
    %v4830 = vunpack.c.l.b16 %v4469
    %v4831 = vunpack.c.h.b16 %v4469
    %v4832 = vunpack.c.l.b16 %v4470
    %v4833 = vunpack.c.h.b16 %v4470
    %v4834 = vunpack.c.l.b16 %v4471
    %v4835 = vunpack.c.h.b16 %v4471
    %v4836 = vunpack.c.l.b16 %v4472
    %v4837 = vunpack.c.h.b16 %v4472
    %v4838 = vunpack.c.l.b16 %v4473
    %v4839 = vunpack.c.h.b16 %v4473
    %v4840 = vunpack.c.l.b16 %v4474
    %v4841 = vunpack.c.h.b16 %v4474
    %v4842 = vunpack.c.l.b16 %v4475
    %v4843 = vunpack.c.h.b16 %v4475
    %v4844 = vunpack.c.l.b16 %v4476
    %v4845 = vunpack.c.h.b16 %v4476
    %v4846 = vunpack.c.l.b16 %v4477
    %v4847 = vunpack.c.h.b16 %v4477
    %v4848 = vunpack.c.l.b16 %v4478
    %v4849 = vunpack.c.h.b16 %v4478
    %v4850 = vunpack.c.l.b16 %v4479
    %v4851 = vunpack.c.h.b16 %v4479
    %v4852 = vunpack.c.l.b16 %v4480
    %v4853 = vunpack.c.h.b16 %v4480
    %v4854 = vunpack.c.l.b16 %v4481
    %v4855 = vunpack.c.h.b16 %v4481
    %v4856 = vunpack.c.l.b16 %v4482
    %v4857 = vunpack.c.h.b16 %v4482
    %v4858 = vunpack.c.l.b16 %v4483
    %v4859 = vunpack.c.h.b16 %v4483
    %v4860 = vunpack.c.l.b16 %v4484
    %v4861 = vunpack.c.h.b16 %v4484
    %v4862 = vunpack.c.l.b16 %v4485
    %v4863 = vunpack.c.h.b16 %v4485
    %v4864 = vunpack.c.l.b16 %v4486
    %v4865 = vunpack.c.h.b16 %v4486
    %v4866 = vunpack.c.l.b16 %v4487
    %v4867 = vunpack.c.h.b16 %v4487
    %v4868 = vunpack.c.l.b16 %v4488
    %v4869 = vunpack.c.h.b16 %v4488
    %v4870 = vunpack.c.l.b16 %v4489
    %v4871 = vunpack.c.h.b16 %v4489
    %v4872 = vunpack.c.l.b16 %v4490
    %v4873 = vunpack.c.h.b16 %v4490
    %v4874 = vunpack.c.l.b16 %v4491
    %v4875 = vunpack.c.h.b16 %v4491
    %v4876 = vunpack.c.l.b16 %v4492
    %v4877 = vunpack.c.h.b16 %v4492
    %v4878 = vunpack.c.l.b16 %v4493
    %v4879 = vunpack.c.h.b16 %v4493
    %v4880 = vunpack.c.l.b16 %v4494
    %v4881 = vunpack.c.h.b16 %v4494
    %v4882 = vunpack.c.l.b16 %v4495
    %v4883 = vunpack.c.h.b16 %v4495
    %v4884 = vunpack.c.l.b16 %v4496
    %v4885 = vunpack.c.h.b16 %v4496
    %v4886 = vunpack.c.l.b16 %v4497
    %v4887 = vunpack.c.h.b16 %v4497
    %v4888 = vunpack.c.l.b16 %v4498
    %v4889 = vunpack.c.h.b16 %v4498
    %v4890 = vunpack.c.l.b16 %v4499
    %v4891 = vunpack.c.h.b16 %v4499
    %v4892 = vunpack.c.l.b16 %v4500
    %v4893 = vunpack.c.h.b16 %v4500
    %v4894 = vunpack.c.l.b16 %v4501
    %v4895 = vunpack.c.h.b16 %v4501
    %v4896 = vunpack.c.l.b16 %v4502
    %v4897 = vunpack.c.h.b16 %v4502
    %v4898 = vunpack.c.l.b16 %v4503
    %v4899 = vunpack.c.h.b16 %v4503
    %v4900 = vunpack.c.l.b16 %v4504
    %v4901 = vunpack.c.h.b16 %v4504
    %v4902 = vunpack.c.l.b16 %v4505
    %v4903 = vunpack.c.h.b16 %v4505
    %v4904 = vunpack.c.l.b16 %v4506
    %v4905 = vunpack.c.h.b16 %v4506
    %v4906 = vunpack.c.l.b16 %v4507
    %v4907 = vunpack.c.h.b16 %v4507
    %v4908 = vunpack.c.l.b16 %v4508
    %v4909 = vunpack.c.h.b16 %v4508
    %v4910 = vunpack.c.l.b16 %v4509
    %v4911 = vunpack.c.h.b16 %v4509
    %v4912 = vunpack.c.l.b16 %v4510
    %v4913 = vunpack.c.h.b16 %v4510
    %v4914 = vunpack.c.l.b16 %v4511
    %v4915 = vunpack.c.h.b16 %v4511
    %v4916 = vunpack.c.l.b16 %v4512
    %v4917 = vunpack.c.h.b16 %v4512
    %v4918 = vunpack.c.l.b16 %v4513
    %v4919 = vunpack.c.h.b16 %v4513
    %v4920 = vunpack.c.l.b16 %v4514
    %v4921 = vunpack.c.h.b16 %v4514
    %v4922 = vpack.c.b16 %v4670, %v4666
    %v4923 = vpack.c.b16 %v4671, %v4667
    %v4924 = vpack.c.b16 %v4672, %v4668
    %v4925 = vpack.c.b16 %v4673, %v4669
    %v4926 = vpack.c.b16 %v4678, %v4674
    %v4927 = vpack.c.b16 %v4679, %v4675
    %v4928 = vpack.c.b16 %v4680, %v4676
    %v4929 = vpack.c.b16 %v4681, %v4677
    %v4930 = vpack.c.b16 %v4686, %v4682
    %v4931 = vpack.c.b16 %v4687, %v4683
    %v4932 = vpack.c.b16 %v4688, %v4684
    %v4933 = vpack.c.b16 %v4689, %v4685
    %v4934 = vpack.c.b16 %v4694, %v4690
    %v4935 = vpack.c.b16 %v4695, %v4691
    %v4936 = vpack.c.b16 %v4696, %v4692
    %v4937 = vpack.c.b16 %v4697, %v4693
    %v4938 = vpack.c.b16 %v4702, %v4698
    %v4939 = vpack.c.b16 %v4703, %v4699
    %v4940 = vpack.c.b16 %v4704, %v4700
    %v4941 = vpack.c.b16 %v4705, %v4701
    %v4942 = vpack.c.b16 %v4710, %v4706
    %v4943 = vpack.c.b16 %v4711, %v4707
    %v4944 = vpack.c.b16 %v4712, %v4708
    %v4945 = vpack.c.b16 %v4713, %v4709
    %v4946 = vpack.c.b16 %v4718, %v4714
    %v4947 = vpack.c.b16 %v4719, %v4715
    %v4948 = vpack.c.b16 %v4720, %v4716
    %v4949 = vpack.c.b16 %v4721, %v4717
    %v4950 = vpack.c.b16 %v4726, %v4722
    %v4951 = vpack.c.b16 %v4727, %v4723
    %v4952 = vpack.c.b16 %v4728, %v4724
    %v4953 = vpack.c.b16 %v4729, %v4725
    %v4954 = vpack.c.b16 %v4734, %v4730
    %v4955 = vpack.c.b16 %v4735, %v4731
    %v4956 = vpack.c.b16 %v4736, %v4732
    %v4957 = vpack.c.b16 %v4737, %v4733
    %v4958 = vpack.c.b16 %v4742, %v4738
    %v4959 = vpack.c.b16 %v4743, %v4739
    %v4960 = vpack.c.b16 %v4744, %v4740
    %v4961 = vpack.c.b16 %v4745, %v4741
    %v4962 = vpack.c.b16 %v4750, %v4746
    %v4963 = vpack.c.b16 %v4751, %v4747
    %v4964 = vpack.c.b16 %v4752, %v4748
    %v4965 = vpack.c.b16 %v4753, %v4749
    %v4966 = vpack.c.b16 %v4758, %v4754
    %v4967 = vpack.c.b16 %v4759, %v4755
    %v4968 = vpack.c.b16 %v4760, %v4756
    %v4969 = vpack.c.b16 %v4761, %v4757
    %v4970 = vpack.c.b16 %v4766, %v4762
    %v4971 = vpack.c.b16 %v4767, %v4763
    %v4972 = vpack.c.b16 %v4768, %v4764
    %v4973 = vpack.c.b16 %v4769, %v4765
    %v4974 = vpack.c.b16 %v4774, %v4770
    %v4975 = vpack.c.b16 %v4775, %v4771
    %v4976 = vpack.c.b16 %v4776, %v4772
    %v4977 = vpack.c.b16 %v4777, %v4773
    %v4978 = vpack.c.b16 %v4782, %v4778
    %v4979 = vpack.c.b16 %v4783, %v4779
    %v4980 = vpack.c.b16 %v4784, %v4780
    %v4981 = vpack.c.b16 %v4785, %v4781
    %v4982 = vpack.c.b16 %v4790, %v4786
    %v4983 = vpack.c.b16 %v4791, %v4787
    %v4984 = vpack.c.b16 %v4792, %v4788
    %v4985 = vpack.c.b16 %v4793, %v4789
    %v4986 = vpack.c.b16 %v4798, %v4794
    %v4987 = vpack.c.b16 %v4799, %v4795
    %v4988 = vpack.c.b16 %v4800, %v4796
    %v4989 = vpack.c.b16 %v4801, %v4797
    %v4990 = vpack.c.b16 %v4806, %v4802
    %v4991 = vpack.c.b16 %v4807, %v4803
    %v4992 = vpack.c.b16 %v4808, %v4804
    %v4993 = vpack.c.b16 %v4809, %v4805
    %v4994 = vpack.c.b16 %v4814, %v4810
    %v4995 = vpack.c.b16 %v4815, %v4811
    %v4996 = vpack.c.b16 %v4816, %v4812
    %v4997 = vpack.c.b16 %v4817, %v4813
    %v4998 = vpack.c.b16 %v4822, %v4818
    %v4999 = vpack.c.b16 %v4823, %v4819
    %v5000 = vpack.c.b16 %v4824, %v4820
    %v5001 = vpack.c.b16 %v4825, %v4821
    %v5002 = vpack.c.b16 %v4830, %v4826
    %v5003 = vpack.c.b16 %v4831, %v4827
    %v5004 = vpack.c.b16 %v4832, %v4828
    %v5005 = vpack.c.b16 %v4833, %v4829
    %v5006 = vpack.c.b16 %v4838, %v4834
    %v5007 = vpack.c.b16 %v4839, %v4835
    %v5008 = vpack.c.b16 %v4840, %v4836
    %v5009 = vpack.c.b16 %v4841, %v4837
    %v5010 = vpack.c.b16 %v4846, %v4842
    %v5011 = vpack.c.b16 %v4847, %v4843
    %v5012 = vpack.c.b16 %v4848, %v4844
    %v5013 = vpack.c.b16 %v4849, %v4845
    %v5014 = vpack.c.b16 %v4854, %v4850
    %v5015 = vpack.c.b16 %v4855, %v4851
    %v5016 = vpack.c.b16 %v4856, %v4852
    %v5017 = vpack.c.b16 %v4857, %v4853
    %v5018 = vpack.c.b16 %v4862, %v4858
    %v5019 = vpack.c.b16 %v4863, %v4859
    %v5020 = vpack.c.b16 %v4864, %v4860
    %v5021 = vpack.c.b16 %v4865, %v4861
    %v5022 = vpack.c.b16 %v4870, %v4866
    %v5023 = vpack.c.b16 %v4871, %v4867
    %v5024 = vpack.c.b16 %v4872, %v4868
    %v5025 = vpack.c.b16 %v4873, %v4869
    %v5026 = vpack.c.b16 %v4878, %v4874
    %v5027 = vpack.c.b16 %v4879, %v4875
    %v5028 = vpack.c.b16 %v4880, %v4876
    %v5029 = vpack.c.b16 %v4881, %v4877
    %v5030 = vpack.c.b16 %v4886, %v4882
    %v5031 = vpack.c.b16 %v4887, %v4883
    %v5032 = vpack.c.b16 %v4888, %v4884
    %v5033 = vpack.c.b16 %v4889, %v4885
    %v5034 = vpack.c.b16 %v4894, %v4890
    %v5035 = vpack.c.b16 %v4895, %v4891
    %v5036 = vpack.c.b16 %v4896, %v4892
    %v5037 = vpack.c.b16 %v4897, %v4893
    %v5038 = vpack.c.b16 %v4902, %v4898
    %v5039 = vpack.c.b16 %v4903, %v4899
    %v5040 = vpack.c.b16 %v4904, %v4900
    %v5041 = vpack.c.b16 %v4905, %v4901
    %v5042 = vpack.c.b16 %v4910, %v4906
    %v5043 = vpack.c.b16 %v4911, %v4907
    %v5044 = vpack.c.b16 %v4912, %v4908
    %v5045 = vpack.c.b16 %v4913, %v4909
    %v5046 = vpack.c.b16 %v4918, %v4914
    %v5047 = vpack.c.b16 %v4919, %v4915
    %v5048 = vpack.c.b16 %v4920, %v4916
    %v5049 = vpack.c.b16 %v4921, %v4917
    %5178 = vmatprep.subr.bf16.mxu0 %v4951
    %5179 = vmatpush1.bf16.msra.mxu0 %v4950
    %5180 = vmatprep.subr.bf16.mxu0 %v4947
    %5181 = vmatpush1.bf16.msra.mxu0 %v4946
    %5182 = vmatprep.subr.bf16.mxu0 %v4943
    %5183 = vmatpush1.bf16.msra.mxu0 %v4942
    %5184 = vmatprep.subr.bf16.mxu0 %v4939
    %5185 = vmatpush1.bf16.msra.mxu0 %v4938
    %5186 = vmatprep.subr.bf16.mxu0 %v4935
    %5187 = vmatpush1.bf16.msra.mxu0 %v4934
    %5188 = vmatprep.subr.bf16.mxu0 %v4931
    %5189 = vmatpush1.bf16.msra.mxu0 %v4930
    %5190 = vmatprep.subr.bf16.mxu0 %v4927
    %5191 = vmatpush1.bf16.msra.mxu0 %v4926
    %5192 = vmatprep.subr.bf16.mxu0 %v4923
    %5193 = vmatpush1.bf16.msra.mxu0 %v4922
    %5194 = vmatprep.subr.bf16.mxu0 %v4983
    %5195 = vmatpush2.bf16.msra.mxu0 %v4982
    %5196 = vmatprep.subr.bf16.mxu0 %v4979
    %5197 = vmatpush2.bf16.msra.mxu0 %v4978
    %5198 = vmatprep.subr.bf16.mxu0 %v4975
    %5199 = vmatpush2.bf16.msra.mxu0 %v4974
    %5200 = vmatprep.subr.bf16.mxu0 %v4971
    %5201 = vmatpush2.bf16.msra.mxu0 %v4970
    %5202 = vmatprep.subr.bf16.mxu0 %v4967
    %5203 = vmatpush2.bf16.msra.mxu0 %v4966
    %5204 = vmatprep.subr.bf16.mxu0 %v4963
    %5205 = vmatpush2.bf16.msra.mxu0 %v4962
    %5206 = vmatprep.subr.bf16.mxu0 %v4959
    %5207 = vmatpush2.bf16.msra.mxu0 %v4958
    %5208 = vmatprep.subr.bf16.mxu0 %v4955
    %5209 = vmatpush2.bf16.msra.mxu0 %v4954
    %5210 = vmatprep.mubr.bf16.mxu0 %v4383
    %5211 = vmatmul.mubr.bf16.gmra.mxu0 %v4382
    %v5212 = vpop.f32.mrf.mxu0
    %v5213 = vadd.f32 %v4521, %v5212
    %v5214 = vpop.f32.mrf.mxu0
    %v5215 = vadd.f32 %v4525, %v5214
    %v5216 = vpop.f32.mrf.mxu0
    %v5217 = vpop.f32.mrf.mxu0
    %5218 = vdwg.mxu0
    %5219 = vmatprep.subr.bf16.mxu0 %v5015
    %5220 = vmatpush1.bf16.msra.mxu0 %v5014
    %5221 = vmatprep.subr.bf16.mxu0 %v5011
    %5222 = vmatpush1.bf16.msra.mxu0 %v5010
    %5223 = vmatprep.subr.bf16.mxu0 %v5007
    %5224 = vmatpush1.bf16.msra.mxu0 %v5006
    %5225 = vmatprep.subr.bf16.mxu0 %v5003
    %5226 = vmatpush1.bf16.msra.mxu0 %v5002
    %5227 = vmatprep.subr.bf16.mxu0 %v4999
    %5228 = vmatpush1.bf16.msra.mxu0 %v4998
    %5229 = vmatprep.subr.bf16.mxu0 %v4995
    %5230 = vmatpush1.bf16.msra.mxu0 %v4994
    %5231 = vmatprep.subr.bf16.mxu0 %v4991
    %5232 = vmatpush1.bf16.msra.mxu0 %v4990
    %5233 = vmatprep.subr.bf16.mxu0 %v4987
    %5234 = vmatpush1.bf16.msra.mxu0 %v4986
    %5235 = vmatprep.subr.bf16.mxu0 %v5047
    %5236 = vmatpush2.bf16.msra.mxu0 %v5046
    %5237 = vmatprep.subr.bf16.mxu0 %v5043
    %5238 = vmatpush2.bf16.msra.mxu0 %v5042
    %5239 = vmatprep.subr.bf16.mxu0 %v5039
    %5240 = vmatpush2.bf16.msra.mxu0 %v5038
    %5241 = vmatprep.subr.bf16.mxu0 %v5035
    %5242 = vmatpush2.bf16.msra.mxu0 %v5034
    %5243 = vmatprep.subr.bf16.mxu0 %v5031
    %5244 = vmatpush2.bf16.msra.mxu0 %v5030
    %5245 = vmatprep.subr.bf16.mxu0 %v5027
    %5246 = vmatpush2.bf16.msra.mxu0 %v5026
    %5247 = vmatprep.subr.bf16.mxu0 %v5023
    %5248 = vmatpush2.bf16.msra.mxu0 %v5022
    %5249 = vmatprep.subr.bf16.mxu0 %v5019
    %5250 = vmatpush2.bf16.msra.mxu0 %v5018
    %5251 = vmatprep.mubr.bf16.mxu0 %v4385
    %5252 = vmatmul.mubr.bf16.gmra.mxu0 %v4384
    %v5253 = vpop.f32.mrf.mxu0
    %v5254 = vadd.f32 %v5213, %v5253
    %v5255 = vpop.f32.mrf.mxu0
    %v5256 = vadd.f32 %v5215, %v5255
    %v5257 = vpop.f32.mrf.mxu0
    %v5258 = vpop.f32.mrf.mxu0
    %5259 = vdwg.mxu0
    %5260 = vmatprep.subr.bf16.mxu0 %v4953
    %5261 = vmatpush1.bf16.msra.mxu0 %v4952
    %5262 = vmatprep.subr.bf16.mxu0 %v4949
    %5263 = vmatpush1.bf16.msra.mxu0 %v4948
    %5264 = vmatprep.subr.bf16.mxu0 %v4945
    %5265 = vmatpush1.bf16.msra.mxu0 %v4944
    %5266 = vmatprep.subr.bf16.mxu0 %v4941
    %5267 = vmatpush1.bf16.msra.mxu0 %v4940
    %5268 = vmatprep.subr.bf16.mxu0 %v4937
    %5269 = vmatpush1.bf16.msra.mxu0 %v4936
    %5270 = vmatprep.subr.bf16.mxu0 %v4933
    %5271 = vmatpush1.bf16.msra.mxu0 %v4932
    %5272 = vmatprep.subr.bf16.mxu0 %v4929
    %5273 = vmatpush1.bf16.msra.mxu0 %v4928
    %5274 = vmatprep.subr.bf16.mxu0 %v4925
    %5275 = vmatpush1.bf16.msra.mxu0 %v4924
    %5276 = vmatprep.subr.bf16.mxu0 %v4985
    %5277 = vmatpush2.bf16.msra.mxu0 %v4984
    %5278 = vmatprep.subr.bf16.mxu0 %v4981
    %5279 = vmatpush2.bf16.msra.mxu0 %v4980
    %5280 = vmatprep.subr.bf16.mxu0 %v4977
    %5281 = vmatpush2.bf16.msra.mxu0 %v4976
    %5282 = vmatprep.subr.bf16.mxu0 %v4973
    %5283 = vmatpush2.bf16.msra.mxu0 %v4972
    %5284 = vmatprep.subr.bf16.mxu0 %v4969
    %5285 = vmatpush2.bf16.msra.mxu0 %v4968
    %5286 = vmatprep.subr.bf16.mxu0 %v4965
    %5287 = vmatpush2.bf16.msra.mxu0 %v4964
    %5288 = vmatprep.subr.bf16.mxu0 %v4961
    %5289 = vmatpush2.bf16.msra.mxu0 %v4960
    %5290 = vmatprep.subr.bf16.mxu0 %v4957
    %5291 = vmatpush2.bf16.msra.mxu0 %v4956
    %5292 = vmatprep.mubr.bf16.mxu0 %v4383
    %5293 = vmatmul.mubr.bf16.gmra.mxu0 %v4382
    %v5294 = vpop.f32.mrf.mxu0
    %v5295 = vadd.f32 %v4529, %v5294
    %v5296 = vpop.f32.mrf.mxu0
    %v5297 = vadd.f32 %v4533, %v5296
    %v5298 = vpop.f32.mrf.mxu0
    %v5299 = vpop.f32.mrf.mxu0
    %5300 = vdwg.mxu0
    %5301 = vmatprep.subr.bf16.mxu0 %v5017
    %5302 = vmatpush1.bf16.msra.mxu0 %v5016
    %5303 = vmatprep.subr.bf16.mxu0 %v5013
    %5304 = vmatpush1.bf16.msra.mxu0 %v5012
    %5305 = vmatprep.subr.bf16.mxu0 %v5009
    %5306 = vmatpush1.bf16.msra.mxu0 %v5008
    %5307 = vmatprep.subr.bf16.mxu0 %v5005
    %5308 = vmatpush1.bf16.msra.mxu0 %v5004
    %5309 = vmatprep.subr.bf16.mxu0 %v5001
    %5310 = vmatpush1.bf16.msra.mxu0 %v5000
    %5311 = vmatprep.subr.bf16.mxu0 %v4997
    %5312 = vmatpush1.bf16.msra.mxu0 %v4996
    %5313 = vmatprep.subr.bf16.mxu0 %v4993
    %5314 = vmatpush1.bf16.msra.mxu0 %v4992
    %5315 = vmatprep.subr.bf16.mxu0 %v4989
    %5316 = vmatpush1.bf16.msra.mxu0 %v4988
    %5317 = vmatprep.subr.bf16.mxu0 %v5049
    %5318 = vmatpush2.bf16.msra.mxu0 %v5048
    %5319 = vmatprep.subr.bf16.mxu0 %v5045
    %5320 = vmatpush2.bf16.msra.mxu0 %v5044
    %5321 = vmatprep.subr.bf16.mxu0 %v5041
    %5322 = vmatpush2.bf16.msra.mxu0 %v5040
    %5323 = vmatprep.subr.bf16.mxu0 %v5037
    %5324 = vmatpush2.bf16.msra.mxu0 %v5036
    %5325 = vmatprep.subr.bf16.mxu0 %v5033
    %5326 = vmatpush2.bf16.msra.mxu0 %v5032
    %5327 = vmatprep.subr.bf16.mxu0 %v5029
    %5328 = vmatpush2.bf16.msra.mxu0 %v5028
    %5329 = vmatprep.subr.bf16.mxu0 %v5025
    %5330 = vmatpush2.bf16.msra.mxu0 %v5024
    %5331 = vmatprep.subr.bf16.mxu0 %v5021
    %5332 = vmatpush2.bf16.msra.mxu0 %v5020
    %5333 = vmatprep.mubr.bf16.mxu0 %v4385
    %5334 = vmatmul.mubr.bf16.gmra.mxu0 %v4384
    %v5335 = vpop.f32.mrf.mxu0
    %v5336 = vadd.f32 %v5295, %v5335
    %v5337 = vpop.f32.mrf.mxu0
    %v5338 = vadd.f32 %v5297, %v5337
    %v5339 = vpop.f32.mrf.mxu0
    %v5340 = vpop.f32.mrf.mxu0
    %5341 = vdwg.mxu0
    %v5342 = vmax.f32 %v5254, 0.0
    %v5343 = vmax.f32 %v5256, 0.0
    %v5344 = vmax.f32 %v5336, 0.0
    %v5345 = vmax.f32 %v5338, 0.0
    %v5346 = vpack.c.bf16 %v5342, %v5342
    %v5347 = vpack.c.bf16 %v5343, %v5343
    %v5348 = vpack.c.bf16 %v5344, %v5344
    %v5349 = vpack.c.bf16 %v5345, %v5345
    %s5350 = scalar_lea.vmem [#allocation5], 3072
    %v5351 = vld [vmem:[%s5350] sm:$0xff]
    %v5352 = vld [vmem:[%s5350 + $0x8] sm:$0xff]
    %v5353 = vld [vmem:[%s5350 + $0x10] sm:$0xff]
    %v5354 = vld [vmem:[%s5350 + $0x18] sm:$0xff]
    %v5355 = vld [vmem:[%s5350 + $0x20] sm:$0xff]
    %v5356 = vld [vmem:[%s5350 + $0x28] sm:$0xff]
    %v5357 = vld [vmem:[%s5350 + $0x30] sm:$0xff]
    %v5358 = vld [vmem:[%s5350 + $0x38] sm:$0xff]
    %v5359 = vld [vmem:[%s5350 + $0x40] sm:$0xff]
    %v5360 = vld [vmem:[%s5350 + $0x48] sm:$0xff]
    %v5361 = vld [vmem:[%s5350 + $0x50] sm:$0xff]
    %v5362 = vld [vmem:[%s5350 + $0x58] sm:$0xff]
    %v5363 = vld [vmem:[%s5350 + $0x60] sm:$0xff]
    %v5364 = vld [vmem:[%s5350 + $0x68] sm:$0xff]
    %v5365 = vld [vmem:[%s5350 + $0x70] sm:$0xff]
    %v5366 = vld [vmem:[%s5350 + $0x78] sm:$0xff]
    %v5367 = vld [vmem:[%s5350 + $0x80] sm:$0xff]
    %v5368 = vld [vmem:[%s5350 + $0x88] sm:$0xff]
    %v5369 = vld [vmem:[%s5350 + $0x90] sm:$0xff]
    %v5370 = vld [vmem:[%s5350 + $0x98] sm:$0xff]
    %v5371 = vld [vmem:[%s5350 + $0xa0] sm:$0xff]
    %v5372 = vld [vmem:[%s5350 + $0xa8] sm:$0xff]
    %v5373 = vld [vmem:[%s5350 + $0xb0] sm:$0xff]
    %v5374 = vld [vmem:[%s5350 + $0xb8] sm:$0xff]
    %v5375 = vld [vmem:[%s5350 + $0xc0] sm:$0xff]
    %v5376 = vld [vmem:[%s5350 + $0xc8] sm:$0xff]
    %v5377 = vld [vmem:[%s5350 + $0xd0] sm:$0xff]
    %v5378 = vld [vmem:[%s5350 + $0xd8] sm:$0xff]
    %v5379 = vld [vmem:[%s5350 + $0xe0] sm:$0xff]
    %v5380 = vld [vmem:[%s5350 + $0xe8] sm:$0xff]
    %v5381 = vld [vmem:[%s5350 + $0xf0] sm:$0xff]
    %v5382 = vld [vmem:[%s5350 + $0xf8] sm:$0xff]
    %v5383 = vld [vmem:[%s5350 + $0x100] sm:$0xff]
    %v5384 = vld [vmem:[%s5350 + $0x108] sm:$0xff]
    %v5385 = vld [vmem:[%s5350 + $0x110] sm:$0xff]
    %v5386 = vld [vmem:[%s5350 + $0x118] sm:$0xff]
    %v5387 = vld [vmem:[%s5350 + $0x120] sm:$0xff]
    %v5388 = vld [vmem:[%s5350 + $0x128] sm:$0xff]
    %v5389 = vld [vmem:[%s5350 + $0x130] sm:$0xff]
    %v5390 = vld [vmem:[%s5350 + $0x138] sm:$0xff]
    %v5391 = vld [vmem:[%s5350 + $0x140] sm:$0xff]
    %v5392 = vld [vmem:[%s5350 + $0x148] sm:$0xff]
    %v5393 = vld [vmem:[%s5350 + $0x150] sm:$0xff]
    %v5394 = vld [vmem:[%s5350 + $0x158] sm:$0xff]
    %v5395 = vld [vmem:[%s5350 + $0x160] sm:$0xff]
    %v5396 = vld [vmem:[%s5350 + $0x168] sm:$0xff]
    %v5397 = vld [vmem:[%s5350 + $0x170] sm:$0xff]
    %v5398 = vld [vmem:[%s5350 + $0x178] sm:$0xff]
    %v5399 = vld [vmem:[%s5350 + $0x180] sm:$0xff]
    %v5400 = vld [vmem:[%s5350 + $0x188] sm:$0xff]
    %v5401 = vld [vmem:[%s5350 + $0x190] sm:$0xff]
    %v5402 = vld [vmem:[%s5350 + $0x198] sm:$0xff]
    %v5403 = vld [vmem:[%s5350 + $0x1a0] sm:$0xff]
    %v5404 = vld [vmem:[%s5350 + $0x1a8] sm:$0xff]
    %v5405 = vld [vmem:[%s5350 + $0x1b0] sm:$0xff]
    %v5406 = vld [vmem:[%s5350 + $0x1b8] sm:$0xff]
    %v5407 = vld [vmem:[%s5350 + $0x1c0] sm:$0xff]
    %v5408 = vld [vmem:[%s5350 + $0x1c8] sm:$0xff]
    %v5409 = vld [vmem:[%s5350 + $0x1d0] sm:$0xff]
    %v5410 = vld [vmem:[%s5350 + $0x1d8] sm:$0xff]
    %v5411 = vld [vmem:[%s5350 + $0x1e0] sm:$0xff]
    %v5412 = vld [vmem:[%s5350 + $0x1e8] sm:$0xff]
    %v5413 = vld [vmem:[%s5350 + $0x1f0] sm:$0xff]
    %v5414 = vld [vmem:[%s5350 + $0x1f8] sm:$0xff]
    %v5415 = vld [vmem:[%s5350 + $0x200] sm:$0xff]
    %v5416 = vld [vmem:[%s5350 + $0x208] sm:$0xff]
    %v5417 = vld [vmem:[%s5350 + $0x210] sm:$0xff]
    %v5418 = vld [vmem:[%s5350 + $0x218] sm:$0xff]
    %v5419 = vld [vmem:[%s5350 + $0x220] sm:$0xff]
    %v5420 = vld [vmem:[%s5350 + $0x228] sm:$0xff]
    %v5421 = vld [vmem:[%s5350 + $0x230] sm:$0xff]
    %v5422 = vld [vmem:[%s5350 + $0x238] sm:$0xff]
    %v5423 = vld [vmem:[%s5350 + $0x240] sm:$0xff]
    %v5424 = vld [vmem:[%s5350 + $0x248] sm:$0xff]
    %v5425 = vld [vmem:[%s5350 + $0x250] sm:$0xff]
    %v5426 = vld [vmem:[%s5350 + $0x258] sm:$0xff]
    %v5427 = vld [vmem:[%s5350 + $0x260] sm:$0xff]
    %v5428 = vld [vmem:[%s5350 + $0x268] sm:$0xff]
    %v5429 = vld [vmem:[%s5350 + $0x270] sm:$0xff]
    %v5430 = vld [vmem:[%s5350 + $0x278] sm:$0xff]
    %v5431 = vld [vmem:[%s5350 + $0x280] sm:$0xff]
    %v5432 = vld [vmem:[%s5350 + $0x288] sm:$0xff]
    %v5433 = vld [vmem:[%s5350 + $0x290] sm:$0xff]
    %v5434 = vld [vmem:[%s5350 + $0x298] sm:$0xff]
    %v5435 = vld [vmem:[%s5350 + $0x2a0] sm:$0xff]
    %v5436 = vld [vmem:[%s5350 + $0x2a8] sm:$0xff]
    %v5437 = vld [vmem:[%s5350 + $0x2b0] sm:$0xff]
    %v5438 = vld [vmem:[%s5350 + $0x2b8] sm:$0xff]
    %v5439 = vld [vmem:[%s5350 + $0x2c0] sm:$0xff]
    %v5440 = vld [vmem:[%s5350 + $0x2c8] sm:$0xff]
    %v5441 = vld [vmem:[%s5350 + $0x2d0] sm:$0xff]
    %v5442 = vld [vmem:[%s5350 + $0x2d8] sm:$0xff]
    %v5443 = vld [vmem:[%s5350 + $0x2e0] sm:$0xff]
    %v5444 = vld [vmem:[%s5350 + $0x2e8] sm:$0xff]
    %v5445 = vld [vmem:[%s5350 + $0x2f0] sm:$0xff]
    %v5446 = vld [vmem:[%s5350 + $0x2f8] sm:$0xff]
    %v5447 = vld [vmem:[%s5350 + $0x300] sm:$0xff]
    %v5448 = vld [vmem:[%s5350 + $0x308] sm:$0xff]
    %v5449 = vld [vmem:[%s5350 + $0x310] sm:$0xff]
    %v5450 = vld [vmem:[%s5350 + $0x318] sm:$0xff]
    %v5451 = vld [vmem:[%s5350 + $0x320] sm:$0xff]
    %v5452 = vld [vmem:[%s5350 + $0x328] sm:$0xff]
    %v5453 = vld [vmem:[%s5350 + $0x330] sm:$0xff]
    %v5454 = vld [vmem:[%s5350 + $0x338] sm:$0xff]
    %v5455 = vld [vmem:[%s5350 + $0x340] sm:$0xff]
    %v5456 = vld [vmem:[%s5350 + $0x348] sm:$0xff]
    %v5457 = vld [vmem:[%s5350 + $0x350] sm:$0xff]
    %v5458 = vld [vmem:[%s5350 + $0x358] sm:$0xff]
    %v5459 = vld [vmem:[%s5350 + $0x360] sm:$0xff]
    %v5460 = vld [vmem:[%s5350 + $0x368] sm:$0xff]
    %v5461 = vld [vmem:[%s5350 + $0x370] sm:$0xff]
    %v5462 = vld [vmem:[%s5350 + $0x378] sm:$0xff]
    %v5463 = vld [vmem:[%s5350 + $0x380] sm:$0xff]
    %v5464 = vld [vmem:[%s5350 + $0x388] sm:$0xff]
    %v5465 = vld [vmem:[%s5350 + $0x390] sm:$0xff]
    %v5466 = vld [vmem:[%s5350 + $0x398] sm:$0xff]
    %v5467 = vld [vmem:[%s5350 + $0x3a0] sm:$0xff]
    %v5468 = vld [vmem:[%s5350 + $0x3a8] sm:$0xff]
    %v5469 = vld [vmem:[%s5350 + $0x3b0] sm:$0xff]
    %v5470 = vld [vmem:[%s5350 + $0x3b8] sm:$0xff]
    %v5471 = vld [vmem:[%s5350 + $0x3c0] sm:$0xff]
    %v5472 = vld [vmem:[%s5350 + $0x3c8] sm:$0xff]
    %v5473 = vld [vmem:[%s5350 + $0x3d0] sm:$0xff]
    %v5474 = vld [vmem:[%s5350 + $0x3d8] sm:$0xff]
    %v5475 = vld [vmem:[%s5350 + $0x3e0] sm:$0xff]
    %v5476 = vld [vmem:[%s5350 + $0x3e8] sm:$0xff]
    %v5477 = vld [vmem:[%s5350 + $0x3f0] sm:$0xff]
    %v5478 = vld [vmem:[%s5350 + $0x3f8] sm:$0xff]
    %s5479 = scalar_lea.vmem [#allocation15], 12
    %v5480 = vld [vmem:[%s5479] sm:$0xf]
    %v5482 = vlaneseq
    %v5483 = vshrl.u32 %v5482, 7
    %v5484 = vsub.s32 0, %v5483
    %v5485 = vrot.slane %v5480, %v5484
    %v5486 = vlaneseq
    %v5487 = vshrl.u32 %v5486, 7
    %v5488 = vsub.s32 1, %v5487
    %v5489 = vrot.slane %v5480, %v5488
    %v5490 = vlaneseq
    %v5491 = vshrl.u32 %v5490, 7
    %v5492 = vsub.s32 2, %v5491
    %v5493 = vrot.slane %v5480, %v5492
    %v5494 = vlaneseq
    %v5495 = vshrl.u32 %v5494, 7
    %v5496 = vsub.s32 3, %v5495
    %v5497 = vrot.slane %v5480, %v5496
    %v5630 = vunpack.c.l.b16 %v5351
    %v5631 = vunpack.c.h.b16 %v5351
    %v5632 = vunpack.c.l.b16 %v5352
    %v5633 = vunpack.c.h.b16 %v5352
    %v5634 = vunpack.c.l.b16 %v5353
    %v5635 = vunpack.c.h.b16 %v5353
    %v5636 = vunpack.c.l.b16 %v5354
    %v5637 = vunpack.c.h.b16 %v5354
    %v5638 = vunpack.c.l.b16 %v5355
    %v5639 = vunpack.c.h.b16 %v5355
    %v5640 = vunpack.c.l.b16 %v5356
    %v5641 = vunpack.c.h.b16 %v5356
    %v5642 = vunpack.c.l.b16 %v5357
    %v5643 = vunpack.c.h.b16 %v5357
    %v5644 = vunpack.c.l.b16 %v5358
    %v5645 = vunpack.c.h.b16 %v5358
    %v5646 = vunpack.c.l.b16 %v5359
    %v5647 = vunpack.c.h.b16 %v5359
    %v5648 = vunpack.c.l.b16 %v5360
    %v5649 = vunpack.c.h.b16 %v5360
    %v5650 = vunpack.c.l.b16 %v5361
    %v5651 = vunpack.c.h.b16 %v5361
    %v5652 = vunpack.c.l.b16 %v5362
    %v5653 = vunpack.c.h.b16 %v5362
    %v5654 = vunpack.c.l.b16 %v5363
    %v5655 = vunpack.c.h.b16 %v5363
    %v5656 = vunpack.c.l.b16 %v5364
    %v5657 = vunpack.c.h.b16 %v5364
    %v5658 = vunpack.c.l.b16 %v5365
    %v5659 = vunpack.c.h.b16 %v5365
    %v5660 = vunpack.c.l.b16 %v5366
    %v5661 = vunpack.c.h.b16 %v5366
    %v5662 = vunpack.c.l.b16 %v5367
    %v5663 = vunpack.c.h.b16 %v5367
    %v5664 = vunpack.c.l.b16 %v5368
    %v5665 = vunpack.c.h.b16 %v5368
    %v5666 = vunpack.c.l.b16 %v5369
    %v5667 = vunpack.c.h.b16 %v5369
    %v5668 = vunpack.c.l.b16 %v5370
    %v5669 = vunpack.c.h.b16 %v5370
    %v5670 = vunpack.c.l.b16 %v5371
    %v5671 = vunpack.c.h.b16 %v5371
    %v5672 = vunpack.c.l.b16 %v5372
    %v5673 = vunpack.c.h.b16 %v5372
    %v5674 = vunpack.c.l.b16 %v5373
    %v5675 = vunpack.c.h.b16 %v5373
    %v5676 = vunpack.c.l.b16 %v5374
    %v5677 = vunpack.c.h.b16 %v5374
    %v5678 = vunpack.c.l.b16 %v5375
    %v5679 = vunpack.c.h.b16 %v5375
    %v5680 = vunpack.c.l.b16 %v5376
    %v5681 = vunpack.c.h.b16 %v5376
    %v5682 = vunpack.c.l.b16 %v5377
    %v5683 = vunpack.c.h.b16 %v5377
    %v5684 = vunpack.c.l.b16 %v5378
    %v5685 = vunpack.c.h.b16 %v5378
    %v5686 = vunpack.c.l.b16 %v5379
    %v5687 = vunpack.c.h.b16 %v5379
    %v5688 = vunpack.c.l.b16 %v5380
    %v5689 = vunpack.c.h.b16 %v5380
    %v5690 = vunpack.c.l.b16 %v5381
    %v5691 = vunpack.c.h.b16 %v5381
    %v5692 = vunpack.c.l.b16 %v5382
    %v5693 = vunpack.c.h.b16 %v5382
    %v5694 = vunpack.c.l.b16 %v5383
    %v5695 = vunpack.c.h.b16 %v5383
    %v5696 = vunpack.c.l.b16 %v5384
    %v5697 = vunpack.c.h.b16 %v5384
    %v5698 = vunpack.c.l.b16 %v5385
    %v5699 = vunpack.c.h.b16 %v5385
    %v5700 = vunpack.c.l.b16 %v5386
    %v5701 = vunpack.c.h.b16 %v5386
    %v5702 = vunpack.c.l.b16 %v5387
    %v5703 = vunpack.c.h.b16 %v5387
    %v5704 = vunpack.c.l.b16 %v5388
    %v5705 = vunpack.c.h.b16 %v5388
    %v5706 = vunpack.c.l.b16 %v5389
    %v5707 = vunpack.c.h.b16 %v5389
    %v5708 = vunpack.c.l.b16 %v5390
    %v5709 = vunpack.c.h.b16 %v5390
    %v5710 = vunpack.c.l.b16 %v5391
    %v5711 = vunpack.c.h.b16 %v5391
    %v5712 = vunpack.c.l.b16 %v5392
    %v5713 = vunpack.c.h.b16 %v5392
    %v5714 = vunpack.c.l.b16 %v5393
    %v5715 = vunpack.c.h.b16 %v5393
    %v5716 = vunpack.c.l.b16 %v5394
    %v5717 = vunpack.c.h.b16 %v5394
    %v5718 = vunpack.c.l.b16 %v5395
    %v5719 = vunpack.c.h.b16 %v5395
    %v5720 = vunpack.c.l.b16 %v5396
    %v5721 = vunpack.c.h.b16 %v5396
    %v5722 = vunpack.c.l.b16 %v5397
    %v5723 = vunpack.c.h.b16 %v5397
    %v5724 = vunpack.c.l.b16 %v5398
    %v5725 = vunpack.c.h.b16 %v5398
    %v5726 = vunpack.c.l.b16 %v5399
    %v5727 = vunpack.c.h.b16 %v5399
    %v5728 = vunpack.c.l.b16 %v5400
    %v5729 = vunpack.c.h.b16 %v5400
    %v5730 = vunpack.c.l.b16 %v5401
    %v5731 = vunpack.c.h.b16 %v5401
    %v5732 = vunpack.c.l.b16 %v5402
    %v5733 = vunpack.c.h.b16 %v5402
    %v5734 = vunpack.c.l.b16 %v5403
    %v5735 = vunpack.c.h.b16 %v5403
    %v5736 = vunpack.c.l.b16 %v5404
    %v5737 = vunpack.c.h.b16 %v5404
    %v5738 = vunpack.c.l.b16 %v5405
    %v5739 = vunpack.c.h.b16 %v5405
    %v5740 = vunpack.c.l.b16 %v5406
    %v5741 = vunpack.c.h.b16 %v5406
    %v5742 = vunpack.c.l.b16 %v5407
    %v5743 = vunpack.c.h.b16 %v5407
    %v5744 = vunpack.c.l.b16 %v5408
    %v5745 = vunpack.c.h.b16 %v5408
    %v5746 = vunpack.c.l.b16 %v5409
    %v5747 = vunpack.c.h.b16 %v5409
    %v5748 = vunpack.c.l.b16 %v5410
    %v5749 = vunpack.c.h.b16 %v5410
    %v5750 = vunpack.c.l.b16 %v5411
    %v5751 = vunpack.c.h.b16 %v5411
    %v5752 = vunpack.c.l.b16 %v5412
    %v5753 = vunpack.c.h.b16 %v5412
    %v5754 = vunpack.c.l.b16 %v5413
    %v5755 = vunpack.c.h.b16 %v5413
    %v5756 = vunpack.c.l.b16 %v5414
    %v5757 = vunpack.c.h.b16 %v5414
    %v5758 = vunpack.c.l.b16 %v5415
    %v5759 = vunpack.c.h.b16 %v5415
    %v5760 = vunpack.c.l.b16 %v5416
    %v5761 = vunpack.c.h.b16 %v5416
    %v5762 = vunpack.c.l.b16 %v5417
    %v5763 = vunpack.c.h.b16 %v5417
    %v5764 = vunpack.c.l.b16 %v5418
    %v5765 = vunpack.c.h.b16 %v5418
    %v5766 = vunpack.c.l.b16 %v5419
    %v5767 = vunpack.c.h.b16 %v5419
    %v5768 = vunpack.c.l.b16 %v5420
    %v5769 = vunpack.c.h.b16 %v5420
    %v5770 = vunpack.c.l.b16 %v5421
    %v5771 = vunpack.c.h.b16 %v5421
    %v5772 = vunpack.c.l.b16 %v5422
    %v5773 = vunpack.c.h.b16 %v5422
    %v5774 = vunpack.c.l.b16 %v5423
    %v5775 = vunpack.c.h.b16 %v5423
    %v5776 = vunpack.c.l.b16 %v5424
    %v5777 = vunpack.c.h.b16 %v5424
    %v5778 = vunpack.c.l.b16 %v5425
    %v5779 = vunpack.c.h.b16 %v5425
    %v5780 = vunpack.c.l.b16 %v5426
    %v5781 = vunpack.c.h.b16 %v5426
    %v5782 = vunpack.c.l.b16 %v5427
    %v5783 = vunpack.c.h.b16 %v5427
    %v5784 = vunpack.c.l.b16 %v5428
    %v5785 = vunpack.c.h.b16 %v5428
    %v5786 = vunpack.c.l.b16 %v5429
    %v5787 = vunpack.c.h.b16 %v5429
    %v5788 = vunpack.c.l.b16 %v5430
    %v5789 = vunpack.c.h.b16 %v5430
    %v5790 = vunpack.c.l.b16 %v5431
    %v5791 = vunpack.c.h.b16 %v5431
    %v5792 = vunpack.c.l.b16 %v5432
    %v5793 = vunpack.c.h.b16 %v5432
    %v5794 = vunpack.c.l.b16 %v5433
    %v5795 = vunpack.c.h.b16 %v5433
    %v5796 = vunpack.c.l.b16 %v5434
    %v5797 = vunpack.c.h.b16 %v5434
    %v5798 = vunpack.c.l.b16 %v5435
    %v5799 = vunpack.c.h.b16 %v5435
    %v5800 = vunpack.c.l.b16 %v5436
    %v5801 = vunpack.c.h.b16 %v5436
    %v5802 = vunpack.c.l.b16 %v5437
    %v5803 = vunpack.c.h.b16 %v5437
    %v5804 = vunpack.c.l.b16 %v5438
    %v5805 = vunpack.c.h.b16 %v5438
    %v5806 = vunpack.c.l.b16 %v5439
    %v5807 = vunpack.c.h.b16 %v5439
    %v5808 = vunpack.c.l.b16 %v5440
    %v5809 = vunpack.c.h.b16 %v5440
    %v5810 = vunpack.c.l.b16 %v5441
    %v5811 = vunpack.c.h.b16 %v5441
    %v5812 = vunpack.c.l.b16 %v5442
    %v5813 = vunpack.c.h.b16 %v5442
    %v5814 = vunpack.c.l.b16 %v5443
    %v5815 = vunpack.c.h.b16 %v5443
    %v5816 = vunpack.c.l.b16 %v5444
    %v5817 = vunpack.c.h.b16 %v5444
    %v5818 = vunpack.c.l.b16 %v5445
    %v5819 = vunpack.c.h.b16 %v5445
    %v5820 = vunpack.c.l.b16 %v5446
    %v5821 = vunpack.c.h.b16 %v5446
    %v5822 = vunpack.c.l.b16 %v5447
    %v5823 = vunpack.c.h.b16 %v5447
    %v5824 = vunpack.c.l.b16 %v5448
    %v5825 = vunpack.c.h.b16 %v5448
    %v5826 = vunpack.c.l.b16 %v5449
    %v5827 = vunpack.c.h.b16 %v5449
    %v5828 = vunpack.c.l.b16 %v5450
    %v5829 = vunpack.c.h.b16 %v5450
    %v5830 = vunpack.c.l.b16 %v5451
    %v5831 = vunpack.c.h.b16 %v5451
    %v5832 = vunpack.c.l.b16 %v5452
    %v5833 = vunpack.c.h.b16 %v5452
    %v5834 = vunpack.c.l.b16 %v5453
    %v5835 = vunpack.c.h.b16 %v5453
    %v5836 = vunpack.c.l.b16 %v5454
    %v5837 = vunpack.c.h.b16 %v5454
    %v5838 = vunpack.c.l.b16 %v5455
    %v5839 = vunpack.c.h.b16 %v5455
    %v5840 = vunpack.c.l.b16 %v5456
    %v5841 = vunpack.c.h.b16 %v5456
    %v5842 = vunpack.c.l.b16 %v5457
    %v5843 = vunpack.c.h.b16 %v5457
    %v5844 = vunpack.c.l.b16 %v5458
    %v5845 = vunpack.c.h.b16 %v5458
    %v5846 = vunpack.c.l.b16 %v5459
    %v5847 = vunpack.c.h.b16 %v5459
    %v5848 = vunpack.c.l.b16 %v5460
    %v5849 = vunpack.c.h.b16 %v5460
    %v5850 = vunpack.c.l.b16 %v5461
    %v5851 = vunpack.c.h.b16 %v5461
    %v5852 = vunpack.c.l.b16 %v5462
    %v5853 = vunpack.c.h.b16 %v5462
    %v5854 = vunpack.c.l.b16 %v5463
    %v5855 = vunpack.c.h.b16 %v5463
    %v5856 = vunpack.c.l.b16 %v5464
    %v5857 = vunpack.c.h.b16 %v5464
    %v5858 = vunpack.c.l.b16 %v5465
    %v5859 = vunpack.c.h.b16 %v5465
    %v5860 = vunpack.c.l.b16 %v5466
    %v5861 = vunpack.c.h.b16 %v5466
    %v5862 = vunpack.c.l.b16 %v5467
    %v5863 = vunpack.c.h.b16 %v5467
    %v5864 = vunpack.c.l.b16 %v5468
    %v5865 = vunpack.c.h.b16 %v5468
    %v5866 = vunpack.c.l.b16 %v5469
    %v5867 = vunpack.c.h.b16 %v5469
    %v5868 = vunpack.c.l.b16 %v5470
    %v5869 = vunpack.c.h.b16 %v5470
    %v5870 = vunpack.c.l.b16 %v5471
    %v5871 = vunpack.c.h.b16 %v5471
    %v5872 = vunpack.c.l.b16 %v5472
    %v5873 = vunpack.c.h.b16 %v5472
    %v5874 = vunpack.c.l.b16 %v5473
    %v5875 = vunpack.c.h.b16 %v5473
    %v5876 = vunpack.c.l.b16 %v5474
    %v5877 = vunpack.c.h.b16 %v5474
    %v5878 = vunpack.c.l.b16 %v5475
    %v5879 = vunpack.c.h.b16 %v5475
    %v5880 = vunpack.c.l.b16 %v5476
    %v5881 = vunpack.c.h.b16 %v5476
    %v5882 = vunpack.c.l.b16 %v5477
    %v5883 = vunpack.c.h.b16 %v5477
    %v5884 = vunpack.c.l.b16 %v5478
    %v5885 = vunpack.c.h.b16 %v5478
    %v5886 = vpack.c.b16 %v5634, %v5630
    %v5887 = vpack.c.b16 %v5635, %v5631
    %v5888 = vpack.c.b16 %v5636, %v5632
    %v5889 = vpack.c.b16 %v5637, %v5633
    %v5890 = vpack.c.b16 %v5642, %v5638
    %v5891 = vpack.c.b16 %v5643, %v5639
    %v5892 = vpack.c.b16 %v5644, %v5640
    %v5893 = vpack.c.b16 %v5645, %v5641
    %v5894 = vpack.c.b16 %v5650, %v5646
    %v5895 = vpack.c.b16 %v5651, %v5647
    %v5896 = vpack.c.b16 %v5652, %v5648
    %v5897 = vpack.c.b16 %v5653, %v5649
    %v5898 = vpack.c.b16 %v5658, %v5654
    %v5899 = vpack.c.b16 %v5659, %v5655
    %v5900 = vpack.c.b16 %v5660, %v5656
    %v5901 = vpack.c.b16 %v5661, %v5657
    %v5902 = vpack.c.b16 %v5666, %v5662
    %v5903 = vpack.c.b16 %v5667, %v5663
    %v5904 = vpack.c.b16 %v5668, %v5664
    %v5905 = vpack.c.b16 %v5669, %v5665
    %v5906 = vpack.c.b16 %v5674, %v5670
    %v5907 = vpack.c.b16 %v5675, %v5671
    %v5908 = vpack.c.b16 %v5676, %v5672
    %v5909 = vpack.c.b16 %v5677, %v5673
    %v5910 = vpack.c.b16 %v5682, %v5678
    %v5911 = vpack.c.b16 %v5683, %v5679
    %v5912 = vpack.c.b16 %v5684, %v5680
    %v5913 = vpack.c.b16 %v5685, %v5681
    %v5914 = vpack.c.b16 %v5690, %v5686
    %v5915 = vpack.c.b16 %v5691, %v5687
    %v5916 = vpack.c.b16 %v5692, %v5688
    %v5917 = vpack.c.b16 %v5693, %v5689
    %v5918 = vpack.c.b16 %v5698, %v5694
    %v5919 = vpack.c.b16 %v5699, %v5695
    %v5920 = vpack.c.b16 %v5700, %v5696
    %v5921 = vpack.c.b16 %v5701, %v5697
    %v5922 = vpack.c.b16 %v5706, %v5702
    %v5923 = vpack.c.b16 %v5707, %v5703
    %v5924 = vpack.c.b16 %v5708, %v5704
    %v5925 = vpack.c.b16 %v5709, %v5705
    %v5926 = vpack.c.b16 %v5714, %v5710
    %v5927 = vpack.c.b16 %v5715, %v5711
    %v5928 = vpack.c.b16 %v5716, %v5712
    %v5929 = vpack.c.b16 %v5717, %v5713
    %v5930 = vpack.c.b16 %v5722, %v5718
    %v5931 = vpack.c.b16 %v5723, %v5719
    %v5932 = vpack.c.b16 %v5724, %v5720
    %v5933 = vpack.c.b16 %v5725, %v5721
    %v5934 = vpack.c.b16 %v5730, %v5726
    %v5935 = vpack.c.b16 %v5731, %v5727
    %v5936 = vpack.c.b16 %v5732, %v5728
    %v5937 = vpack.c.b16 %v5733, %v5729
    %v5938 = vpack.c.b16 %v5738, %v5734
    %v5939 = vpack.c.b16 %v5739, %v5735
    %v5940 = vpack.c.b16 %v5740, %v5736
    %v5941 = vpack.c.b16 %v5741, %v5737
    %v5942 = vpack.c.b16 %v5746, %v5742
    %v5943 = vpack.c.b16 %v5747, %v5743
    %v5944 = vpack.c.b16 %v5748, %v5744
    %v5945 = vpack.c.b16 %v5749, %v5745
    %v5946 = vpack.c.b16 %v5754, %v5750
    %v5947 = vpack.c.b16 %v5755, %v5751
    %v5948 = vpack.c.b16 %v5756, %v5752
    %v5949 = vpack.c.b16 %v5757, %v5753
    %v5950 = vpack.c.b16 %v5762, %v5758
    %v5951 = vpack.c.b16 %v5763, %v5759
    %v5952 = vpack.c.b16 %v5764, %v5760
    %v5953 = vpack.c.b16 %v5765, %v5761
    %v5954 = vpack.c.b16 %v5770, %v5766
    %v5955 = vpack.c.b16 %v5771, %v5767
    %v5956 = vpack.c.b16 %v5772, %v5768
    %v5957 = vpack.c.b16 %v5773, %v5769
    %v5958 = vpack.c.b16 %v5778, %v5774
    %v5959 = vpack.c.b16 %v5779, %v5775
    %v5960 = vpack.c.b16 %v5780, %v5776
    %v5961 = vpack.c.b16 %v5781, %v5777
    %v5962 = vpack.c.b16 %v5786, %v5782
    %v5963 = vpack.c.b16 %v5787, %v5783
    %v5964 = vpack.c.b16 %v5788, %v5784
    %v5965 = vpack.c.b16 %v5789, %v5785
    %v5966 = vpack.c.b16 %v5794, %v5790
    %v5967 = vpack.c.b16 %v5795, %v5791
    %v5968 = vpack.c.b16 %v5796, %v5792
    %v5969 = vpack.c.b16 %v5797, %v5793
    %v5970 = vpack.c.b16 %v5802, %v5798
    %v5971 = vpack.c.b16 %v5803, %v5799
    %v5972 = vpack.c.b16 %v5804, %v5800
    %v5973 = vpack.c.b16 %v5805, %v5801
    %v5974 = vpack.c.b16 %v5810, %v5806
    %v5975 = vpack.c.b16 %v5811, %v5807
    %v5976 = vpack.c.b16 %v5812, %v5808
    %v5977 = vpack.c.b16 %v5813, %v5809
    %v5978 = vpack.c.b16 %v5818, %v5814
    %v5979 = vpack.c.b16 %v5819, %v5815
    %v5980 = vpack.c.b16 %v5820, %v5816
    %v5981 = vpack.c.b16 %v5821, %v5817
    %v5982 = vpack.c.b16 %v5826, %v5822
    %v5983 = vpack.c.b16 %v5827, %v5823
    %v5984 = vpack.c.b16 %v5828, %v5824
    %v5985 = vpack.c.b16 %v5829, %v5825
    %v5986 = vpack.c.b16 %v5834, %v5830
    %v5987 = vpack.c.b16 %v5835, %v5831
    %v5988 = vpack.c.b16 %v5836, %v5832
    %v5989 = vpack.c.b16 %v5837, %v5833
    %v5990 = vpack.c.b16 %v5842, %v5838
    %v5991 = vpack.c.b16 %v5843, %v5839
    %v5992 = vpack.c.b16 %v5844, %v5840
    %v5993 = vpack.c.b16 %v5845, %v5841
    %v5994 = vpack.c.b16 %v5850, %v5846
    %v5995 = vpack.c.b16 %v5851, %v5847
    %v5996 = vpack.c.b16 %v5852, %v5848
    %v5997 = vpack.c.b16 %v5853, %v5849
    %v5998 = vpack.c.b16 %v5858, %v5854
    %v5999 = vpack.c.b16 %v5859, %v5855
    %v6000 = vpack.c.b16 %v5860, %v5856
    %v6001 = vpack.c.b16 %v5861, %v5857
    %v6002 = vpack.c.b16 %v5866, %v5862
    %v6003 = vpack.c.b16 %v5867, %v5863
    %v6004 = vpack.c.b16 %v5868, %v5864
    %v6005 = vpack.c.b16 %v5869, %v5865
    %v6006 = vpack.c.b16 %v5874, %v5870
    %v6007 = vpack.c.b16 %v5875, %v5871
    %v6008 = vpack.c.b16 %v5876, %v5872
    %v6009 = vpack.c.b16 %v5877, %v5873
    %v6010 = vpack.c.b16 %v5882, %v5878
    %v6011 = vpack.c.b16 %v5883, %v5879
    %v6012 = vpack.c.b16 %v5884, %v5880
    %v6013 = vpack.c.b16 %v5885, %v5881
    %6142 = vmatprep.subr.bf16.mxu0 %v5915
    %6143 = vmatpush1.bf16.msra.mxu0 %v5914
    %6144 = vmatprep.subr.bf16.mxu0 %v5911
    %6145 = vmatpush1.bf16.msra.mxu0 %v5910
    %6146 = vmatprep.subr.bf16.mxu0 %v5907
    %6147 = vmatpush1.bf16.msra.mxu0 %v5906
    %6148 = vmatprep.subr.bf16.mxu0 %v5903
    %6149 = vmatpush1.bf16.msra.mxu0 %v5902
    %6150 = vmatprep.subr.bf16.mxu0 %v5899
    %6151 = vmatpush1.bf16.msra.mxu0 %v5898
    %6152 = vmatprep.subr.bf16.mxu0 %v5895
    %6153 = vmatpush1.bf16.msra.mxu0 %v5894
    %6154 = vmatprep.subr.bf16.mxu0 %v5891
    %6155 = vmatpush1.bf16.msra.mxu0 %v5890
    %6156 = vmatprep.subr.bf16.mxu0 %v5887
    %6157 = vmatpush1.bf16.msra.mxu0 %v5886
    %6158 = vmatprep.subr.bf16.mxu0 %v5947
    %6159 = vmatpush2.bf16.msra.mxu0 %v5946
    %6160 = vmatprep.subr.bf16.mxu0 %v5943
    %6161 = vmatpush2.bf16.msra.mxu0 %v5942
    %6162 = vmatprep.subr.bf16.mxu0 %v5939
    %6163 = vmatpush2.bf16.msra.mxu0 %v5938
    %6164 = vmatprep.subr.bf16.mxu0 %v5935
    %6165 = vmatpush2.bf16.msra.mxu0 %v5934
    %6166 = vmatprep.subr.bf16.mxu0 %v5931
    %6167 = vmatpush2.bf16.msra.mxu0 %v5930
    %6168 = vmatprep.subr.bf16.mxu0 %v5927
    %6169 = vmatpush2.bf16.msra.mxu0 %v5926
    %6170 = vmatprep.subr.bf16.mxu0 %v5923
    %6171 = vmatpush2.bf16.msra.mxu0 %v5922
    %6172 = vmatprep.subr.bf16.mxu0 %v5919
    %6173 = vmatpush2.bf16.msra.mxu0 %v5918
    %6174 = vmatprep.mubr.bf16.mxu0 %v5347
    %6175 = vmatmul.mubr.bf16.gmra.mxu0 %v5346
    %v6176 = vpop.f32.mrf.mxu0
    %v6177 = vadd.f32 %v5485, %v6176
    %v6178 = vpop.f32.mrf.mxu0
    %v6179 = vadd.f32 %v5489, %v6178
    %v6180 = vpop.f32.mrf.mxu0
    %v6181 = vpop.f32.mrf.mxu0
    %6182 = vdwg.mxu0
    %6183 = vmatprep.subr.bf16.mxu0 %v5979
    %6184 = vmatpush1.bf16.msra.mxu0 %v5978
    %6185 = vmatprep.subr.bf16.mxu0 %v5975
    %6186 = vmatpush1.bf16.msra.mxu0 %v5974
    %6187 = vmatprep.subr.bf16.mxu0 %v5971
    %6188 = vmatpush1.bf16.msra.mxu0 %v5970
    %6189 = vmatprep.subr.bf16.mxu0 %v5967
    %6190 = vmatpush1.bf16.msra.mxu0 %v5966
    %6191 = vmatprep.subr.bf16.mxu0 %v5963
    %6192 = vmatpush1.bf16.msra.mxu0 %v5962
    %6193 = vmatprep.subr.bf16.mxu0 %v5959
    %6194 = vmatpush1.bf16.msra.mxu0 %v5958
    %6195 = vmatprep.subr.bf16.mxu0 %v5955
    %6196 = vmatpush1.bf16.msra.mxu0 %v5954
    %6197 = vmatprep.subr.bf16.mxu0 %v5951
    %6198 = vmatpush1.bf16.msra.mxu0 %v5950
    %6199 = vmatprep.subr.bf16.mxu0 %v6011
    %6200 = vmatpush2.bf16.msra.mxu0 %v6010
    %6201 = vmatprep.subr.bf16.mxu0 %v6007
    %6202 = vmatpush2.bf16.msra.mxu0 %v6006
    %6203 = vmatprep.subr.bf16.mxu0 %v6003
    %6204 = vmatpush2.bf16.msra.mxu0 %v6002
    %6205 = vmatprep.subr.bf16.mxu0 %v5999
    %6206 = vmatpush2.bf16.msra.mxu0 %v5998
    %6207 = vmatprep.subr.bf16.mxu0 %v5995
    %6208 = vmatpush2.bf16.msra.mxu0 %v5994
    %6209 = vmatprep.subr.bf16.mxu0 %v5991
    %6210 = vmatpush2.bf16.msra.mxu0 %v5990
    %6211 = vmatprep.subr.bf16.mxu0 %v5987
    %6212 = vmatpush2.bf16.msra.mxu0 %v5986
    %6213 = vmatprep.subr.bf16.mxu0 %v5983
    %6214 = vmatpush2.bf16.msra.mxu0 %v5982
    %6215 = vmatprep.mubr.bf16.mxu0 %v5349
    %6216 = vmatmul.mubr.bf16.gmra.mxu0 %v5348
    %v6217 = vpop.f32.mrf.mxu0
    %v6218 = vadd.f32 %v6177, %v6217
    %v6219 = vpop.f32.mrf.mxu0
    %v6220 = vadd.f32 %v6179, %v6219
    %v6221 = vpop.f32.mrf.mxu0
    %v6222 = vpop.f32.mrf.mxu0
    %6223 = vdwg.mxu0
    %6224 = vmatprep.subr.bf16.mxu0 %v5917
    %6225 = vmatpush1.bf16.msra.mxu0 %v5916
    %6226 = vmatprep.subr.bf16.mxu0 %v5913
    %6227 = vmatpush1.bf16.msra.mxu0 %v5912
    %6228 = vmatprep.subr.bf16.mxu0 %v5909
    %6229 = vmatpush1.bf16.msra.mxu0 %v5908
    %6230 = vmatprep.subr.bf16.mxu0 %v5905
    %6231 = vmatpush1.bf16.msra.mxu0 %v5904
    %6232 = vmatprep.subr.bf16.mxu0 %v5901
    %6233 = vmatpush1.bf16.msra.mxu0 %v5900
    %6234 = vmatprep.subr.bf16.mxu0 %v5897
    %6235 = vmatpush1.bf16.msra.mxu0 %v5896
    %6236 = vmatprep.subr.bf16.mxu0 %v5893
    %6237 = vmatpush1.bf16.msra.mxu0 %v5892
    %6238 = vmatprep.subr.bf16.mxu0 %v5889
    %6239 = vmatpush1.bf16.msra.mxu0 %v5888
    %6240 = vmatprep.subr.bf16.mxu0 %v5949
    %6241 = vmatpush2.bf16.msra.mxu0 %v5948
    %6242 = vmatprep.subr.bf16.mxu0 %v5945
    %6243 = vmatpush2.bf16.msra.mxu0 %v5944
    %6244 = vmatprep.subr.bf16.mxu0 %v5941
    %6245 = vmatpush2.bf16.msra.mxu0 %v5940
    %6246 = vmatprep.subr.bf16.mxu0 %v5937
    %6247 = vmatpush2.bf16.msra.mxu0 %v5936
    %6248 = vmatprep.subr.bf16.mxu0 %v5933
    %6249 = vmatpush2.bf16.msra.mxu0 %v5932
    %6250 = vmatprep.subr.bf16.mxu0 %v5929
    %6251 = vmatpush2.bf16.msra.mxu0 %v5928
    %6252 = vmatprep.subr.bf16.mxu0 %v5925
    %6253 = vmatpush2.bf16.msra.mxu0 %v5924
    %6254 = vmatprep.subr.bf16.mxu0 %v5921
    %6255 = vmatpush2.bf16.msra.mxu0 %v5920
    %6256 = vmatprep.mubr.bf16.mxu0 %v5347
    %6257 = vmatmul.mubr.bf16.gmra.mxu0 %v5346
    %v6258 = vpop.f32.mrf.mxu0
    %v6259 = vadd.f32 %v5493, %v6258
    %v6260 = vpop.f32.mrf.mxu0
    %v6261 = vadd.f32 %v5497, %v6260
    %v6262 = vpop.f32.mrf.mxu0
    %v6263 = vpop.f32.mrf.mxu0
    %6264 = vdwg.mxu0
    %6265 = vmatprep.subr.bf16.mxu0 %v5981
    %6266 = vmatpush1.bf16.msra.mxu0 %v5980
    %6267 = vmatprep.subr.bf16.mxu0 %v5977
    %6268 = vmatpush1.bf16.msra.mxu0 %v5976
    %6269 = vmatprep.subr.bf16.mxu0 %v5973
    %6270 = vmatpush1.bf16.msra.mxu0 %v5972
    %6271 = vmatprep.subr.bf16.mxu0 %v5969
    %6272 = vmatpush1.bf16.msra.mxu0 %v5968
    %6273 = vmatprep.subr.bf16.mxu0 %v5965
    %6274 = vmatpush1.bf16.msra.mxu0 %v5964
    %6275 = vmatprep.subr.bf16.mxu0 %v5961
    %6276 = vmatpush1.bf16.msra.mxu0 %v5960
    %6277 = vmatprep.subr.bf16.mxu0 %v5957
    %6278 = vmatpush1.bf16.msra.mxu0 %v5956
    %6279 = vmatprep.subr.bf16.mxu0 %v5953
    %6280 = vmatpush1.bf16.msra.mxu0 %v5952
    %6281 = vmatprep.subr.bf16.mxu0 %v6013
    %6282 = vmatpush2.bf16.msra.mxu0 %v6012
    %6283 = vmatprep.subr.bf16.mxu0 %v6009
    %6284 = vmatpush2.bf16.msra.mxu0 %v6008
    %6285 = vmatprep.subr.bf16.mxu0 %v6005
    %6286 = vmatpush2.bf16.msra.mxu0 %v6004
    %6287 = vmatprep.subr.bf16.mxu0 %v6001
    %6288 = vmatpush2.bf16.msra.mxu0 %v6000
    %6289 = vmatprep.subr.bf16.mxu0 %v5997
    %6290 = vmatpush2.bf16.msra.mxu0 %v5996
    %6291 = vmatprep.subr.bf16.mxu0 %v5993
    %6292 = vmatpush2.bf16.msra.mxu0 %v5992
    %6293 = vmatprep.subr.bf16.mxu0 %v5989
    %6294 = vmatpush2.bf16.msra.mxu0 %v5988
    %6295 = vmatprep.subr.bf16.mxu0 %v5985
    %6296 = vmatpush2.bf16.msra.mxu0 %v5984
    %6297 = vmatprep.mubr.bf16.mxu0 %v5349
    %6298 = vmatmul.mubr.bf16.gmra.mxu0 %v5348
    %v6299 = vpop.f32.mrf.mxu0
    %v6300 = vadd.f32 %v6259, %v6299
    %v6301 = vpop.f32.mrf.mxu0
    %v6302 = vadd.f32 %v6261, %v6301
    %v6303 = vpop.f32.mrf.mxu0
    %v6304 = vpop.f32.mrf.mxu0
    %6305 = vdwg.mxu0
    %v6306 = vmax.f32 %v6218, 0.0
    %v6307 = vmax.f32 %v6220, 0.0
    %v6308 = vmax.f32 %v6300, 0.0
    %v6309 = vmax.f32 %v6302, 0.0
    %v6310 = vld [vmem:[#allocation16] sm:$0xf]
    %v6312 = vlaneseq
    %v6313 = vshrl.u32 %v6312, 7
    %v6314 = vsub.s32 0, %v6313
    %v6315 = vrot.slane %v6310, %v6314
    %v6316 = vlaneseq
    %v6317 = vshrl.u32 %v6316, 7
    %v6318 = vsub.s32 1, %v6317
    %v6319 = vrot.slane %v6310, %v6318
    %v6320 = vlaneseq
    %v6321 = vshrl.u32 %v6320, 7
    %v6322 = vsub.s32 2, %v6321
    %v6323 = vrot.slane %v6310, %v6322
    %v6324 = vlaneseq
    %v6325 = vshrl.u32 %v6324, 7
    %v6326 = vsub.s32 3, %v6325
    %v6327 = vrot.slane %v6310, %v6326
    %v6332 = vmul.f32 %v6306, %v6315
    %v6333 = vmul.f32 %v6307, %v6319
    %v6334 = vmul.f32 %v6308, %v6323
    %v6335 = vmul.f32 %v6309, %v6327
    %v6336 = vadd.f32 %v6332, %v6333
    %v6337 = vadd.f32 %v6336, %v6334
    %v6338 = vadd.f32 %v6337, %v6335
    %6339 = vadd.xlane.f32.xlu0 %v6338
    %v6340 = vpop.xlane.xlu0 %6339
    %v6341 = vld [vmem:[#allocation7] sm:$0x1]
    %v6343 = vlaneseq
    %v6344 = vshrl.u32 %v6343, 7
    %v6345 = vsub.s32 0, %v6344
    %v6346 = vrot.slane %v6341, %v6345
    %v6348 = vadd.f32 %v6340, %v6346
    %vm6349 = vcmask 7168
    %6350 = vst.msk [vmem:[%s12] sm:$0xff] %vm6349, %v6348
    // Predicated region
    $region74: #{lstm_model_forward.1} parent=1 // pred_check
      _
    $region75: #{lstm_model_forward.1} parent=1 // pred_check_branch
      %6352 = sbr.rel (0) target = $region77
    $region76: #{lstm_model_forward.1} parent=1 // pred_region
      _
    $region77: #{lstm_model_forward.1} parent=1 // pred_fallthru
      _
    // Predicated region
    $region78: #{lstm_model_forward.1} parent=1 // pred_check
      _
    $region79: #{lstm_model_forward.1} parent=1 // pred_check_branch
      %6354 = sbr.rel (0) target = $region81
    $region80: #{lstm_model_forward.1} parent=1 // pred_region
      _
    $region81: #{lstm_model_forward.1} parent=1 // pred_fallthru
      _
    %6355 = vsyncpa [#allocation9], 1
    %6356 = vsyncpa [#allocation11], 1
    %6357 = vsyncpa [#allocation14], 1
    %6358 = vsyncpa [#allocation17], 1
  %6359 = vsyncmov [#allocation6]
  %s6360 = vpop.sfrf %6359
  %p6361 = scmp.eq.s32.totalorder %s6360, 0
  %p6362 = pneg %p6361
  %6364 = shalt.err (%p6362)
  %s6365 = scalar_lea.sflag [#allocation6], 1
  %6366 = vsyncmov %s6365
  %s6367 = vpop.sfrf %6366
  %p6368 = scmp.eq.s32.totalorder %s6367, 0
  %p6369 = pneg %p6368
  %6371 = shalt.err (%p6369)
  %s6372 = scalar_lea.sflag [#allocation6], 2
  %6373 = vsyncmov %s6372
  %s6374 = vpop.sfrf %6373
  %p6375 = scmp.eq.s32.totalorder %s6374, 0
  %p6376 = pneg %p6375
  %6378 = shalt.err (%p6376)

</llo_original>
